<compile_context>
chip_gen: v7x
topology: tpu7x:2x2x1
jax: 0.10.0
libtpu: 0.0.40
codegen_flags: <defaults>
</compile_context>

<pallas_src>
import jax
import jax.numpy as jnp
from jax.experimental import pallas as pl
from jax.experimental.pallas import tpu as pltpu

LEAKY_SLOPE = 0.01  # PyTorch nn.LeakyReLU default


def _leaky_relu(v):
    return jnp.where(v >= 0, v, LEAKY_SLOPE * v)


# -----------------------------------------------------------------------------
# Kernel 1: batched per-frame conv(3x3, SAME) as ONE large-M im2col matmul
#           + bias + ReLU + per-frame global average pool.
#   p_ref: (ROWS, K) bf16, frame-major im2col rows (ROWS = frames_in_block * H*W)
#   w_ref: (K, F)   bf16 conv weight ;  b_ref: (1, F) f32 bias
#   o_ref: (frames_in_block, F) f32 pooled features (single lane-dense slab)
# -----------------------------------------------------------------------------
def conv_pool_kernel(p_ref, w_ref, b_ref, o_ref):
    frames = o_ref.shape[0]
    pix = p_ref.shape[0] // frames
    acc = jnp.dot(p_ref[...], w_ref[...], preferred_element_type=jnp.float32)  # (ROWS, F)
    acc = jnp.maximum(acc + b_ref[...], 0.0)                                    # f32 bias+ReLU
    # global average pool: sum over pixels then multiply by hoisted 1/P constant
    pooled = jnp.sum(acc.reshape(frames, pix, acc.shape[-1]), axis=1) * (1.0 / pix)
    o_ref[...] = pooled


# -----------------------------------------------------------------------------
# Kernel 2: tanh RNN over time (whole loop in one kernel) fused with the projector.
#   All input-to-hidden matmuls are hoisted into one batched matmul before the
#   loop; the unrolled fori_loop only does h @ W_hh per step.  Only the final
#   projector output (B, 1) is emitted.
# -----------------------------------------------------------------------------
def rnn_proj_kernel(feat_ref, wih_ref, whh_ref, b_ref,
                    w1_ref, w2_ref, w3_ref, b3_ref, y_ref, pre_scr):
    T, B, F = feat_ref.shape
    Hid = whh_ref.shape[1]

    # (T*B, F) @ (F, Hid) + b  — one MXU op, off the sequential critical path.
    pre = jnp.dot(feat_ref[...].reshape(T * B, F), wih_ref[...],
                  preferred_element_type=jnp.float32) + b_ref[...]
    pre_scr[...] = pre.reshape(T, B, Hid)

    def step(t, h):
        return jnp.tanh(pre_scr[t]
                        + jnp.dot(h, whh_ref[...], preferred_element_type=jnp.float32))

    h = jax.lax.fori_loop(0, T, step, jnp.zeros((B, Hid), jnp.float32), unroll=True)

    # projector: Lin(no bias)->LReLU->Lin(no bias)->LReLU->Lin(+bias)->LReLU
    h = _leaky_relu(jnp.dot(h, w1_ref[...], preferred_element_type=jnp.float32))
    h = _leaky_relu(jnp.dot(h, w2_ref[...], preferred_element_type=jnp.float32))
    y_ref[...] = _leaky_relu(
        jnp.dot(h, w3_ref[...], preferred_element_type=jnp.float32) + b3_ref[...])


# -----------------------------------------------------------------------------
# Glue
# -----------------------------------------------------------------------------
def _im2col_3x3_same(frames):
    # frames: (N, C, H, W) -> (N, H*W, C*9); K order = c*9 + (dh*3 + dw)
    N, C, H, W = frames.shape
    xp = jnp.pad(frames, ((0, 0), (0, 0), (1, 1), (1, 1)))
    cols = []
    for dh in range(3):
        for dw in range(3):
            cols.append(xp[:, :, dh:dh + H, dw:dw + W])
    patches = jnp.stack(cols, axis=2)           # (N, C, 9, H, W)
    patches = patches.transpose(0, 3, 4, 1, 2)  # (N, H, W, C, 9)
    return patches.reshape(N, H * W, C * 9)


def _conv_grid(n_frames, pix):
    # Split frames across 2 TensorCores (v7x) when the blocks stay (8,128)-legal.
    if n_frames % 2 == 0 and (n_frames // 2) % 8 == 0 and ((n_frames // 2) * pix) % 16 == 0:
        return 2
    return 1


_VMEM = pl.BlockSpec(memory_space=pltpu.MemorySpace.VMEM)


@jax.jit
def conv_rnn_forward(x, params):
    conv_w, conv_b, wih, whh, brnn, w1, w2, w3, b3 = params
    B, T, C, H, W = x.shape
    F = conv_w.shape[0]
    Hid = whh.shape[0]
    P = H * W
    K = C * 9
    N = T * B

    # x.transpose(0, 1): batch-first -> time-first
    xt = jnp.transpose(x, (1, 0, 2, 3, 4)).reshape(N, C, H, W)

    # ---- encoder stage 1: conv features for ALL frames in one big matmul ----
    # bf16 MXU inputs (halves patch/weight HBM bytes); accumulate/elementwise in f32.
    patches = _im2col_3x3_same(xt.astype(jnp.bfloat16)).reshape(N * P, K)
    w_mat = conv_w.reshape(F, K).T.astype(jnp.bfloat16)            # (K, F)

    G = _conv_grid(N, P)
    rows_pb = (N * P) // G
    frames_pb = N // G

    feat2d = pl.pallas_call(
        conv_pool_kernel,
        out_shape=jax.ShapeDtypeStruct((N, F), jnp.float32),
        grid=(G,),
        in_specs=[
            pl.BlockSpec((rows_pb, K), lambda i: (i, 0)),
            pl.BlockSpec((K, F), lambda i: (0, 0)),
            pl.BlockSpec((1, F), lambda i: (0, 0)),
        ],
        out_specs=pl.BlockSpec((frames_pb, F), lambda i: (i, 0)),
        compiler_params=pltpu.CompilerParams(dimension_semantics=("parallel",)),
    )(patches, w_mat, conv_b.reshape(1, F))

    feat = feat2d.reshape(T, B, F)   # frame index = t*B + b -> time-first features

    # ---- encoder stage 2 + projector: single kernel, emits only final (B, 1) ----
    y = pl.pallas_call(
        rnn_proj_kernel,
        out_shape=jax.ShapeDtypeStruct((B, 1), jnp.float32),
        in_specs=[_VMEM] * 8,
        out_specs=_VMEM,
        scratch_shapes=[pltpu.VMEM((T, B, Hid), jnp.float32)],
    )(feat, wih, whh, brnn.reshape(1, Hid), w1, w2, w3, b3.reshape(1, 1))
    return y


# -----------------------------------------------------------------------------
# Pure-JAX f32 reference (for correctness sanity check)
# -----------------------------------------------------------------------------
def reference_forward(x, params):
    conv_w, conv_b, wih, whh, brnn, w1, w2, w3, b3 = params
    B, T, C, H, W = x.shape
    F = conv_w.shape[0]
    Hid = whh.shape[0]
    hp = jax.lax.Precision.HIGHEST
    xt = jnp.transpose(x, (1, 0, 2, 3, 4)).reshape(T * B, C, H, W)
    conv = jax.lax.conv_general_dilated(
        xt, conv_w, (1, 1), "SAME",
        dimension_numbers=("NCHW", "OIHW", "NCHW"), precision=hp)
    conv = jnp.maximum(conv + conv_b[None, :, None, None], 0.0)
    feat = conv.mean(axis=(2, 3)).reshape(T, B, F)
    h = jnp.zeros((B, Hid), jnp.float32)
    for t in range(T):
        h = jnp.tanh(jnp.dot(feat[t], wih, precision=hp)
                     + jnp.dot(h, whh, precision=hp) + brnn)
    out = h
    h1 = _leaky_relu(jnp.dot(out, w1, precision=hp))
    h2 = _leaky_relu(jnp.dot(h1, w2, precision=hp))
    y = _leaky_relu(jnp.dot(h2, w3, precision=hp) + b3)
    return y


if __name__ == "__main__":
    B, T, C, H, W = 2, 8, 4, 16, 16
    FEAT = 32  # n_features == args.hidden_dim

    key = jax.random.PRNGKey(0)
    ks = jax.random.split(key, 10)
    x = jax.random.normal(ks[0], (B, T, C, H, W), jnp.float32)

    params = (
        0.1 * jax.random.normal(ks[1], (FEAT, C, 3, 3), jnp.float32),  # conv weight (OIHW)
        0.1 * jax.random.normal(ks[2], (FEAT,), jnp.float32),          # conv bias
        0.3 * jax.random.normal(ks[3], (FEAT, FEAT), jnp.float32),     # RNN W_ih (in, out)
        0.3 * jax.random.normal(ks[4], (FEAT, FEAT), jnp.float32),     # RNN W_hh
        0.1 * jax.random.normal(ks[5], (FEAT,), jnp.float32),          # RNN bias
        0.3 * jax.random.normal(ks[6], (FEAT, FEAT), jnp.float32),     # projector Linear 1 (no bias)
        0.3 * jax.random.normal(ks[7], (FEAT, FEAT), jnp.float32),     # projector Linear 2 (no bias)
        0.3 * jax.random.normal(ks[8], (FEAT, 1), jnp.float32),        # projector Linear 3 weight
        0.1 * jax.random.normal(ks[9], (1,), jnp.float32),             # projector Linear 3 bias
    )

    y = jax.block_until_ready(conv_rnn_forward(x, params))
    y_ref = reference_forward(x, params)

    assert y.shape == (B, 1), y.shape
    # Tolerance loosened vs the original f32 version because the conv-stage MXU
    # inputs are bf16 (f32 accumulation); expected deviation is ~1e-3.
    assert jnp.allclose(y, y_ref, atol=5e-2, rtol=5e-2), (y, y_ref)
    print("KERNEL_OK")
</pallas_src>

<mosaic_0001>
module attributes {stable_mosaic.version = 11 : i64} {
  func.func @conv_pool_kernel(%arg0: i32, %arg1: memref<2048x36xbf16, #tpu.memory_space<vmem>>, %arg2: memref<36x32xbf16, #tpu.memory_space<vmem>>, %arg3: memref<1x32xf32, #tpu.memory_space<vmem>>, %arg4: memref<8x32xf32, #tpu.memory_space<vmem>>) attributes {dimension_semantics = [#tpu.dimension_semantics<parallel>], iteration_bounds = array<i64: 2>, scalar_prefetch = 0 : i64, scratch_operands = 0 : i64, tpu.core_type = #tpu.core_type<tc>, window_params = [{transform_indices = @transform_0, window_bounds = array<i64: 2048, 36>}, {pipeline_mode = #tpu.pipeline_mode<synchronous>, transform_indices = @transform_1, window_bounds = array<i64: 36, 32>}, {pipeline_mode = #tpu.pipeline_mode<synchronous>, transform_indices = @transform_2, window_bounds = array<i64: 1, 32>}, {transform_indices = @transform_3, window_bounds = array<i64: 8, 32>}]} {
    %c0 = arith.constant 0 : index
    %c0_0 = arith.constant 0 : index
    %0 = vector.load %arg1[%c0, %c0_0] : memref<2048x36xbf16, #tpu.memory_space<vmem>>, vector<2048x36xbf16>
    %c0_1 = arith.constant 0 : index
    %c0_2 = arith.constant 0 : index
    %1 = vector.load %arg2[%c0_1, %c0_2] : memref<36x32xbf16, #tpu.memory_space<vmem>>, vector<36x32xbf16>
    %cst = arith.constant dense<0.000000e+00> : vector<2048x32xf32>
    %2 = tpu.matmul %0, %1, %cst {dimension_numbers = #tpu.dot_dimension_numbers<[1], [0], [0], [1], [0, 0, 1, 1], [], []>} : vector<2048x36xbf16>, vector<36x32xbf16>, vector<2048x32xf32> -> vector<2048x32xf32>
    %c0_3 = arith.constant 0 : index
    %c0_4 = arith.constant 0 : index
    %3 = vector.load %arg3[%c0_3, %c0_4] : memref<1x32xf32, #tpu.memory_space<vmem>>, vector<1x32xf32>
    %4 = vector.broadcast %3 : vector<1x32xf32> to vector<2048x32xf32>
    %5 = arith.addf %2, %4 : vector<2048x32xf32>
    %cst_5 = arith.constant 0.000000e+00 : f32
    %6 = vector.broadcast %cst_5 : f32 to vector<2048x32xf32>
    %7 = arith.maximumf %5, %6 : vector<2048x32xf32>
    %8 = vector.shape_cast %7 : vector<2048x32xf32> to vector<8x256x32xf32>
    %cst_6 = arith.constant dense<0.000000e+00> : vector<8x32xf32>
    %9 = vector.multi_reduction <add>, %8, %cst_6 [1] : vector<8x256x32xf32> to vector<8x32xf32>
    %cst_7 = arith.constant 3.906250e-03 : f32
    %10 = vector.broadcast %cst_7 : f32 to vector<8x32xf32>
    %11 = arith.mulf %9, %10 : vector<8x32xf32>
    %c0_8 = arith.constant 0 : index
    %c0_9 = arith.constant 0 : index
    %12 = vector.load %arg4[%c0_8, %c0_9] : memref<8x32xf32, #tpu.memory_space<vmem>>, vector<8x32xf32>
    tpu.vector_store %arg4[%c0_8, %c0_9], %11 {strides = array<i32>} : memref<8x32xf32, #tpu.memory_space<vmem>>, vector<8x32xf32>,
    return
  }
  func.func @transform_0(%arg0: i32) -> (i32, i32) {
    %c0_i32 = arith.constant 0 : i32
    %c0_i32_0 = arith.constant 0 : i32
    return %arg0, %c0_i32 : i32, i32
  }
  func.func @transform_1(%arg0: i32) -> (i32, i32) {
    %c0_i32 = arith.constant 0 : i32
    %c0_i32_0 = arith.constant 0 : i32
    %c0_i32_1 = arith.constant 0 : i32
    return %c0_i32, %c0_i32_0 : i32, i32
  }
  func.func @transform_2(%arg0: i32) -> (i32, i32) {
    %c0_i32 = arith.constant 0 : i32
    %c0_i32_0 = arith.constant 0 : i32
    %c0_i32_1 = arith.constant 0 : i32
    return %c0_i32, %c0_i32_0 : i32, i32
  }
  func.func @transform_3(%arg0: i32) -> (i32, i32) {
    %c0_i32 = arith.constant 0 : i32
    %c0_i32_0 = arith.constant 0 : i32
    return %arg0, %c0_i32 : i32, i32
  }
}

module attributes {stable_mosaic.version = 11 : i64} {
  func.func @rnn_proj_kernel(%arg0: memref<8x2x32xf32, #tpu.memory_space<vmem>>, %arg1: memref<32x32xf32, #tpu.memory_space<vmem>>, %arg2: memref<32x32xf32, #tpu.memory_space<vmem>>, %arg3: memref<1x32xf32, #tpu.memory_space<vmem>>, %arg4: memref<32x32xf32, #tpu.memory_space<vmem>>, %arg5: memref<32x32xf32, #tpu.memory_space<vmem>>, %arg6: memref<32x1xf32, #tpu.memory_space<vmem>>, %arg7: memref<1x1xf32, #tpu.memory_space<vmem>>, %arg8: memref<2x1xf32, #tpu.memory_space<vmem>>, %arg9: memref<8x2x32xf32, #tpu.memory_space<vmem>>) attributes {dimension_semantics = [], scalar_prefetch = 0 : i64, scratch_operands = 1 : i64, tpu.core_type = #tpu.core_type<tc>} {
    %c0 = arith.constant 0 : index
    %c0_0 = arith.constant 0 : index
    %c0_1 = arith.constant 0 : index
    %0 = vector.load %arg0[%c0, %c0_0, %c0_1] : memref<8x2x32xf32, #tpu.memory_space<vmem>>, vector<8x2x32xf32>
    %1 = vector.shape_cast %0 : vector<8x2x32xf32> to vector<16x32xf32>
    %c0_2 = arith.constant 0 : index
    %c0_3 = arith.constant 0 : index
    %2 = vector.load %arg1[%c0_2, %c0_3] : memref<32x32xf32, #tpu.memory_space<vmem>>, vector<32x32xf32>
    %cst = arith.constant dense<0.000000e+00> : vector<16x32xf32>
    %3 = tpu.matmul %1, %2, %cst {dimension_numbers = #tpu.dot_dimension_numbers<[1], [0], [0], [1], [0, 0, 1, 1], [], []>} : vector<16x32xf32>, vector<32x32xf32>, vector<16x32xf32> -> vector<16x32xf32>
    %c0_4 = arith.constant 0 : index
    %c0_5 = arith.constant 0 : index
    %4 = vector.load %arg3[%c0_4, %c0_5] : memref<1x32xf32, #tpu.memory_space<vmem>>, vector<1x32xf32>
    %5 = vector.broadcast %4 : vector<1x32xf32> to vector<16x32xf32>
    %6 = arith.addf %3, %5 : vector<16x32xf32>
    %7 = vector.shape_cast %6 : vector<16x32xf32> to vector<8x2x32xf32>
    %c0_6 = arith.constant 0 : index
    %c0_7 = arith.constant 0 : index
    %c0_8 = arith.constant 0 : index
    %8 = vector.load %arg9[%c0_6, %c0_7, %c0_8] : memref<8x2x32xf32, #tpu.memory_space<vmem>>, vector<8x2x32xf32>
    tpu.vector_store %arg9[%c0_6, %c0_7, %c0_8], %7 {strides = array<i32>} : memref<8x2x32xf32, #tpu.memory_space<vmem>>, vector<8x2x32xf32>,
    %cst_9 = arith.constant 0.000000e+00 : f32
    %9 = vector.broadcast %cst_9 : f32 to vector<2x32xf32>
    %c0_i32 = arith.constant 0 : i32
    %10 = arith.index_cast %c0_i32 : i32 to index
    %c0_10 = arith.constant 0 : index
    %c0_11 = arith.constant 0 : index
    %11 = vector.load %arg9[%10, %c0_10, %c0_11] : memref<8x2x32xf32, #tpu.memory_space<vmem>>, vector<1x2x32xf32>
    %12 = vector.shape_cast %11 : vector<1x2x32xf32> to vector<2x32xf32>
    %c0_12 = arith.constant 0 : index
    %c0_13 = arith.constant 0 : index
    %13 = vector.load %arg2[%c0_12, %c0_13] : memref<32x32xf32, #tpu.memory_space<vmem>>, vector<32x32xf32>
    %cst_14 = arith.constant dense<0.000000e+00> : vector<2x32xf32>
    %14 = tpu.matmul %9, %13, %cst_14 {dimension_numbers = #tpu.dot_dimension_numbers<[1], [0], [0], [1], [0, 0, 1, 1], [], []>} : vector<2x32xf32>, vector<32x32xf32>, vector<2x32xf32> -> vector<2x32xf32>
    %15 = arith.addf %12, %14 : vector<2x32xf32>
    %16 = math.tanh %15 : vector<2x32xf32>
    %c1_i32 = arith.constant 1 : i32
    %17 = arith.index_cast %c1_i32 : i32 to index
    %c0_15 = arith.constant 0 : index
    %c0_16 = arith.constant 0 : index
    %18 = vector.load %arg9[%17, %c0_15, %c0_16] : memref<8x2x32xf32, #tpu.memory_space<vmem>>, vector<1x2x32xf32>
    %19 = vector.shape_cast %18 : vector<1x2x32xf32> to vector<2x32xf32>
    %c0_17 = arith.constant 0 : index
    %c0_18 = arith.constant 0 : index
    %20 = vector.load %arg2[%c0_17, %c0_18] : memref<32x32xf32, #tpu.memory_space<vmem>>, vector<32x32xf32>
    %cst_19 = arith.constant dense<0.000000e+00> : vector<2x32xf32>
    %21 = tpu.matmul %16, %20, %cst_19 {dimension_numbers = #tpu.dot_dimension_numbers<[1], [0], [0], [1], [0, 0, 1, 1], [], []>} : vector<2x32xf32>, vector<32x32xf32>, vector<2x32xf32> -> vector<2x32xf32>
    %22 = arith.addf %19, %21 : vector<2x32xf32>
    %23 = math.tanh %22 : vector<2x32xf32>
    %c2_i32 = arith.constant 2 : i32
    %24 = arith.index_cast %c2_i32 : i32 to index
    %c0_20 = arith.constant 0 : index
    %c0_21 = arith.constant 0 : index
    %25 = vector.load %arg9[%24, %c0_20, %c0_21] : memref<8x2x32xf32, #tpu.memory_space<vmem>>, vector<1x2x32xf32>
    %26 = vector.shape_cast %25 : vector<1x2x32xf32> to vector<2x32xf32>
    %c0_22 = arith.constant 0 : index
    %c0_23 = arith.constant 0 : index
    %27 = vector.load %arg2[%c0_22, %c0_23] : memref<32x32xf32, #tpu.memory_space<vmem>>, vector<32x32xf32>
    %cst_24 = arith.constant dense<0.000000e+00> : vector<2x32xf32>
    %28 = tpu.matmul %23, %27, %cst_24 {dimension_numbers = #tpu.dot_dimension_numbers<[1], [0], [0], [1], [0, 0, 1, 1], [], []>} : vector<2x32xf32>, vector<32x32xf32>, vector<2x32xf32> -> vector<2x32xf32>
    %29 = arith.addf %26, %28 : vector<2x32xf32>
    %30 = math.tanh %29 : vector<2x32xf32>
    %c3_i32 = arith.constant 3 : i32
    %31 = arith.index_cast %c3_i32 : i32 to index
    %c0_25 = arith.constant 0 : index
    %c0_26 = arith.constant 0 : index
    %32 = vector.load %arg9[%31, %c0_25, %c0_26] : memref<8x2x32xf32, #tpu.memory_space<vmem>>, vector<1x2x32xf32>
    %33 = vector.shape_cast %32 : vector<1x2x32xf32> to vector<2x32xf32>
    %c0_27 = arith.constant 0 : index
    %c0_28 = arith.constant 0 : index
    %34 = vector.load %arg2[%c0_27, %c0_28] : memref<32x32xf32, #tpu.memory_space<vmem>>, vector<32x32xf32>
    %cst_29 = arith.constant dense<0.000000e+00> : vector<2x32xf32>
    %35 = tpu.matmul %30, %34, %cst_29 {dimension_numbers = #tpu.dot_dimension_numbers<[1], [0], [0], [1], [0, 0, 1, 1], [], []>} : vector<2x32xf32>, vector<32x32xf32>, vector<2x32xf32> -> vector<2x32xf32>
    %36 = arith.addf %33, %35 : vector<2x32xf32>
    %37 = math.tanh %36 : vector<2x32xf32>
    %c4_i32 = arith.constant 4 : i32
    %38 = arith.index_cast %c4_i32 : i32 to index
    %c0_30 = arith.constant 0 : index
    %c0_31 = arith.constant 0 : index
    %39 = vector.load %arg9[%38, %c0_30, %c0_31] : memref<8x2x32xf32, #tpu.memory_space<vmem>>, vector<1x2x32xf32>
    %40 = vector.shape_cast %39 : vector<1x2x32xf32> to vector<2x32xf32>
    %c0_32 = arith.constant 0 : index
    %c0_33 = arith.constant 0 : index
    %41 = vector.load %arg2[%c0_32, %c0_33] : memref<32x32xf32, #tpu.memory_space<vmem>>, vector<32x32xf32>
    %cst_34 = arith.constant dense<0.000000e+00> : vector<2x32xf32>
    %42 = tpu.matmul %37, %41, %cst_34 {dimension_numbers = #tpu.dot_dimension_numbers<[1], [0], [0], [1], [0, 0, 1, 1], [], []>} : vector<2x32xf32>, vector<32x32xf32>, vector<2x32xf32> -> vector<2x32xf32>
    %43 = arith.addf %40, %42 : vector<2x32xf32>
    %44 = math.tanh %43 : vector<2x32xf32>
    %c5_i32 = arith.constant 5 : i32
    %45 = arith.index_cast %c5_i32 : i32 to index
    %c0_35 = arith.constant 0 : index
    %c0_36 = arith.constant 0 : index
    %46 = vector.load %arg9[%45, %c0_35, %c0_36] : memref<8x2x32xf32, #tpu.memory_space<vmem>>, vector<1x2x32xf32>
    %47 = vector.shape_cast %46 : vector<1x2x32xf32> to vector<2x32xf32>
    %c0_37 = arith.constant 0 : index
    %c0_38 = arith.constant 0 : index
    %48 = vector.load %arg2[%c0_37, %c0_38] : memref<32x32xf32, #tpu.memory_space<vmem>>, vector<32x32xf32>
    %cst_39 = arith.constant dense<0.000000e+00> : vector<2x32xf32>
    %49 = tpu.matmul %44, %48, %cst_39 {dimension_numbers = #tpu.dot_dimension_numbers<[1], [0], [0], [1], [0, 0, 1, 1], [], []>} : vector<2x32xf32>, vector<32x32xf32>, vector<2x32xf32> -> vector<2x32xf32>
    %50 = arith.addf %47, %49 : vector<2x32xf32>
    %51 = math.tanh %50 : vector<2x32xf32>
    %c6_i32 = arith.constant 6 : i32
    %52 = arith.index_cast %c6_i32 : i32 to index
    %c0_40 = arith.constant 0 : index
    %c0_41 = arith.constant 0 : index
    %53 = vector.load %arg9[%52, %c0_40, %c0_41] : memref<8x2x32xf32, #tpu.memory_space<vmem>>, vector<1x2x32xf32>
    %54 = vector.shape_cast %53 : vector<1x2x32xf32> to vector<2x32xf32>
    %c0_42 = arith.constant 0 : index
    %c0_43 = arith.constant 0 : index
    %55 = vector.load %arg2[%c0_42, %c0_43] : memref<32x32xf32, #tpu.memory_space<vmem>>, vector<32x32xf32>
    %cst_44 = arith.constant dense<0.000000e+00> : vector<2x32xf32>
    %56 = tpu.matmul %51, %55, %cst_44 {dimension_numbers = #tpu.dot_dimension_numbers<[1], [0], [0], [1], [0, 0, 1, 1], [], []>} : vector<2x32xf32>, vector<32x32xf32>, vector<2x32xf32> -> vector<2x32xf32>
    %57 = arith.addf %54, %56 : vector<2x32xf32>
    %58 = math.tanh %57 : vector<2x32xf32>
    %c7_i32 = arith.constant 7 : i32
    %59 = arith.index_cast %c7_i32 : i32 to index
    %c0_45 = arith.constant 0 : index
    %c0_46 = arith.constant 0 : index
    %60 = vector.load %arg9[%59, %c0_45, %c0_46] : memref<8x2x32xf32, #tpu.memory_space<vmem>>, vector<1x2x32xf32>
    %61 = vector.shape_cast %60 : vector<1x2x32xf32> to vector<2x32xf32>
    %c0_47 = arith.constant 0 : index
    %c0_48 = arith.constant 0 : index
    %62 = vector.load %arg2[%c0_47, %c0_48] : memref<32x32xf32, #tpu.memory_space<vmem>>, vector<32x32xf32>
    %cst_49 = arith.constant dense<0.000000e+00> : vector<2x32xf32>
    %63 = tpu.matmul %58, %62, %cst_49 {dimension_numbers = #tpu.dot_dimension_numbers<[1], [0], [0], [1], [0, 0, 1, 1], [], []>} : vector<2x32xf32>, vector<32x32xf32>, vector<2x32xf32> -> vector<2x32xf32>
    %64 = arith.addf %61, %63 : vector<2x32xf32>
    %65 = math.tanh %64 : vector<2x32xf32>
    %c8_i32 = arith.constant 8 : i32
    %c0_50 = arith.constant 0 : index
    %c0_51 = arith.constant 0 : index
    %66 = vector.load %arg4[%c0_50, %c0_51] : memref<32x32xf32, #tpu.memory_space<vmem>>, vector<32x32xf32>
    %cst_52 = arith.constant dense<0.000000e+00> : vector<2x32xf32>
    %67 = tpu.matmul %65, %66, %cst_52 {dimension_numbers = #tpu.dot_dimension_numbers<[1], [0], [0], [1], [0, 0, 1, 1], [], []>} : vector<2x32xf32>, vector<32x32xf32>, vector<2x32xf32> -> vector<2x32xf32>
    %cst_53 = arith.constant 0.000000e+00 : f32
    %68 = vector.broadcast %cst_53 : f32 to vector<2x32xf32>
    %69 = arith.cmpf oge, %67, %68 : vector<2x32xf32>
    %cst_54 = arith.constant 0.00999999977 : f32
    %70 = vector.broadcast %cst_54 : f32 to vector<2x32xf32>
    %71 = arith.mulf %70, %67 : vector<2x32xf32>
    %72 = arith.select %69, %67, %71 : vector<2x32xi1>, vector<2x32xf32>
    %c0_55 = arith.constant 0 : index
    %c0_56 = arith.constant 0 : index
    %73 = vector.load %arg5[%c0_55, %c0_56] : memref<32x32xf32, #tpu.memory_space<vmem>>, vector<32x32xf32>
    %cst_57 = arith.constant dense<0.000000e+00> : vector<2x32xf32>
    %74 = tpu.matmul %72, %73, %cst_57 {dimension_numbers = #tpu.dot_dimension_numbers<[1], [0], [0], [1], [0, 0, 1, 1], [], []>} : vector<2x32xf32>, vector<32x32xf32>, vector<2x32xf32> -> vector<2x32xf32>
    %cst_58 = arith.constant 0.000000e+00 : f32
    %75 = vector.broadcast %cst_58 : f32 to vector<2x32xf32>
    %76 = arith.cmpf oge, %74, %75 : vector<2x32xf32>
    %cst_59 = arith.constant 0.00999999977 : f32
    %77 = vector.broadcast %cst_59 : f32 to vector<2x32xf32>
    %78 = arith.mulf %77, %74 : vector<2x32xf32>
    %79 = arith.select %76, %74, %78 : vector<2x32xi1>, vector<2x32xf32>
    %c0_60 = arith.constant 0 : index
    %c0_61 = arith.constant 0 : index
    %80 = vector.load %arg6[%c0_60, %c0_61] : memref<32x1xf32, #tpu.memory_space<vmem>>, vector<32x1xf32>
    %cst_62 = arith.constant dense<0.000000e+00> : vector<2x1xf32>
    %81 = tpu.matmul %79, %80, %cst_62 {dimension_numbers = #tpu.dot_dimension_numbers<[1], [0], [0], [1], [0, 0, 1, 1], [], []>} : vector<2x32xf32>, vector<32x1xf32>, vector<2x1xf32> -> vector<2x1xf32>
    %c0_63 = arith.constant 0 : index
    %c0_64 = arith.constant 0 : index
    %82 = vector.load %arg7[%c0_63, %c0_64] : memref<1x1xf32, #tpu.memory_space<vmem>>, vector<1x1xf32>
    %83 = vector.broadcast %82 : vector<1x1xf32> to vector<2x1xf32>
    %84 = arith.addf %81, %83 : vector<2x1xf32>
    %cst_65 = arith.constant 0.000000e+00 : f32
    %85 = vector.broadcast %cst_65 : f32 to vector<2x1xf32>
    %86 = arith.cmpf oge, %84, %85 : vector<2x1xf32>
    %cst_66 = arith.constant 0.00999999977 : f32
    %87 = vector.broadcast %cst_66 : f32 to vector<2x1xf32>
    %88 = arith.mulf %87, %84 : vector<2x1xf32>
    %89 = arith.select %86, %84, %88 : vector<2x1xi1>, vector<2x1xf32>
    %c0_67 = arith.constant 0 : index
    %c0_68 = arith.constant 0 : index
    %90 = vector.load %arg8[%c0_67, %c0_68] : memref<2x1xf32, #tpu.memory_space<vmem>>, vector<2x1xf32>
    tpu.vector_store %arg8[%c0_67, %c0_68], %89 {strides = array<i32>} : memref<2x1xf32, #tpu.memory_space<vmem>>, vector<2x1xf32>,
    return
  }
}

</mosaic_0001>

<llo_original>
// kernel: conv_rnn_forward.2
$region0: #{conv_rnn_forward.2}
  #allocation0 [shape = 'u32[]', space=smem, size = 0x4, offset = 0x4, fixed_abs, tag = 'smem constant byte address 0x4 - core index']
  #allocation1 [shape = 'u32[144,128]{1,0:T(1,128)}', space=vmem, size = 0x12000, scoped, tag = 'internal scratch']
  %s0 = inlined_call_operand.vmem [shape: bf16[4096,36], index: 0, kind: input, shape index: {}]
  %s1 = inlined_call_operand.vmem [shape: bf16[36,32], index: 1, kind: input, shape index: {}]
  %s2 = inlined_call_operand.vmem [shape: f32[1,32], index: 2, kind: input, shape index: {}]
  %s3 = inlined_call_operand.vmem [shape: f32[16,32], index: 3, kind: output, shape index: {}]
  %s4 = sld [smem:[#allocation0]]
  $region45: #{conv_rnn_forward.2} parent=0
    _
  %s6 = ssub.s32 1, %s4
  %s7 = scalar_select 0, %s6, %s4
  loop: start=0, step=1, limit=4
  $region2: #{conv_rnn_forward.2} parent=0 // loop_pre_header
    _
  $region3: #{conv_rnn_forward.2} parent=0 // loop_header
    %s9 = sphi 0, %s13
    %p10 = scmp.ge.s32.totalorder %s9, 4
    %s19 = sphi 0, %s21
    %s22 = sphi 0, %s19
    %s23 = sphi 0, %s22
    %s39 = sphi 0, %s23
    %s43 = sphi 0, %s43
    %s45 = sphi 0, %s43
    %s46 = sphi 0, %s45
    %s60 = sphi 0, %s46
    %s64 = sphi 0, %s64
    %s66 = sphi 0, %s64
    %s67 = sphi 0, %s66
    %s81 = sphi 0, %s67
    %s87 = sphi 0, %s89
    %s90 = sphi 0, %s87
    %s91 = sphi 0, %s90
    %s107 = sphi 0, %s91
  $region4: #{conv_rnn_forward.2} parent=0 // loop_header_branch
    %12 = sbr.rel (%p10) target = $region8
  $region5: #{conv_rnn_forward.2} parent=0 // loop_body
    %s14 = ssub.s32 %s9, 1
    %s15 = ssub.s32 %s9, 2
    %s16 = sadd.s32 %s9, 1
    %s17 = ssub.s32 %s9, %s16
    %p18 = scmp.eq.s32.totalorder %s17, 0
    %s20 = sadd.s32 %s19, 1
    %s21 = scalar_select %p18, %s19, %s20
    %p24 = pneg %p18
    %p25 = scmp.eq.s32.totalorder %s9, 1
    %p26 = por %p24, %p25
    %p27 = scmp.ne.s32.totalorder %s19, %s22
    %p28 = scmp.eq.s32.totalorder %s9, 0
    %p29 = por %p27, %p28
    %p30 = scmp.ne.s32.totalorder %s19, %s22
    %p31 = scmp.eq.s32.totalorder %s14, 1
    %p32 = por %p30, %p31
    %p33 = scmp.ne.s32.totalorder %s22, %s23
    %p34 = scmp.eq.s32.totalorder %s14, 0
    %p35 = por %p33, %p34
    %p36 = scmp.ne.s32.totalorder %s22, %s23
    %p37 = scmp.eq.s32.totalorder %s15, 1
    %p38 = por %p36, %p37
    %p40 = scmp.ne.s32.totalorder %s23, %s39
    %p41 = scmp.eq.s32.totalorder %s15, 0
    %p42 = por %p40, %p41
    %s44 = sadd.s32 %s43, 1
    %p47 = scmp.eq.s32.totalorder %s9, 1
    %p48 = scmp.ne.s32.totalorder %s43, %s45
    %p49 = scmp.eq.s32.totalorder %s9, 0
    %p50 = por %p48, %p49
    %p51 = scmp.ne.s32.totalorder %s43, %s45
    %p52 = scmp.eq.s32.totalorder %s14, 1
    %p53 = por %p51, %p52
    %p54 = scmp.ne.s32.totalorder %s45, %s46
    %p55 = scmp.eq.s32.totalorder %s14, 0
    %p56 = por %p54, %p55
    %p57 = scmp.ne.s32.totalorder %s45, %s46
    %p58 = scmp.eq.s32.totalorder %s15, 1
    %p59 = por %p57, %p58
    %p61 = scmp.ne.s32.totalorder %s46, %s60
    %p62 = scmp.eq.s32.totalorder %s15, 0
    %p63 = por %p61, %p62
    %s65 = sadd.s32 %s64, 1
    %p68 = scmp.eq.s32.totalorder %s9, 1
    %p69 = scmp.ne.s32.totalorder %s64, %s66
    %p70 = scmp.eq.s32.totalorder %s9, 0
    %p71 = por %p69, %p70
    %p72 = scmp.ne.s32.totalorder %s64, %s66
    %p73 = scmp.eq.s32.totalorder %s14, 1
    %p74 = por %p72, %p73
    %p75 = scmp.ne.s32.totalorder %s66, %s67
    %p76 = scmp.eq.s32.totalorder %s14, 0
    %p77 = por %p75, %p76
    %p78 = scmp.ne.s32.totalorder %s66, %s67
    %p79 = scmp.eq.s32.totalorder %s15, 1
    %p80 = por %p78, %p79
    %p82 = scmp.ne.s32.totalorder %s67, %s81
    %p83 = scmp.eq.s32.totalorder %s15, 0
    %p84 = por %p82, %p83
    %s85 = ssub.s32 %s9, %s16
    %p86 = scmp.eq.s32.totalorder %s85, 0
    %s88 = sadd.s32 %s87, 1
    %s89 = scalar_select %p86, %s87, %s88
    %p92 = pneg %p86
    %p93 = scmp.eq.s32.totalorder %s9, 1
    %p94 = por %p92, %p93
    %p95 = scmp.ne.s32.totalorder %s87, %s90
    %p96 = scmp.eq.s32.totalorder %s9, 0
    %p97 = por %p95, %p96
    %p98 = scmp.ne.s32.totalorder %s87, %s90
    %p99 = scmp.eq.s32.totalorder %s14, 1
    %p100 = por %p98, %p99
    %p101 = scmp.ne.s32.totalorder %s90, %s91
    %p102 = scmp.eq.s32.totalorder %s14, 0
    %p103 = por %p101, %p102
    %p104 = scmp.ne.s32.totalorder %s90, %s91
    %p105 = scmp.eq.s32.totalorder %s15, 1
    %p106 = por %p104, %p105
    %p108 = scmp.ne.s32.totalorder %s91, %s107
    %p109 = scmp.eq.s32.totalorder %s15, 0
    %p110 = por %p108, %p109
    %p111 = scmp.le.s32.totalorder 1, %s9
    %p112 = scmp.lt.s32.totalorder %s9, 3
    %p113 = pnand %p111, %p112
    %p114 = pneg %p113
    // Predicated region
    $region9: #{conv_rnn_forward.2} parent=5 // pred_check
      _
    $region10: #{conv_rnn_forward.2} parent=5 // pred_check_branch
      %116 = sbr.rel (%p113) target = $region12
    $region11: #{conv_rnn_forward.2} parent=5 // pred_region
      %s117 = ssub.s32 %s9, 1
      // Predicated region
      $region13: #{conv_rnn_forward.2} parent=11 // pred_check
        %p118 = pneg %p56
      $region14: #{conv_rnn_forward.2} parent=11 // pred_check_branch
        %120 = sbr.rel (%p118) target = $region16
      $region15: #{conv_rnn_forward.2} parent=11 // pred_region
        _
      $region16: #{conv_rnn_forward.2} parent=11 // pred_fallthru
        _
      // Predicated region
      $region17: #{conv_rnn_forward.2} parent=11 // pred_check
        %p121 = pneg %p77
      $region18: #{conv_rnn_forward.2} parent=11 // pred_check_branch
        %123 = sbr.rel (%p121) target = $region20
      $region19: #{conv_rnn_forward.2} parent=11 // pred_region
        _
      $region20: #{conv_rnn_forward.2} parent=11 // pred_fallthru
        _
    $region12: #{conv_rnn_forward.2} parent=5 // pred_fallthru
      _
    %p124 = scmp.lt.s32.totalorder %s9, 2
    // Predicated region
    $region21: #{conv_rnn_forward.2} parent=5 // pred_check
      %p125 = pneg %p124
    $region22: #{conv_rnn_forward.2} parent=5 // pred_check_branch
      %127 = sbr.rel (%p125) target = $region24
    $region23: #{conv_rnn_forward.2} parent=5 // pred_region
      // Predicated region
      $region25: #{conv_rnn_forward.2} parent=23 // pred_check
        %p128 = pneg %p29
      $region26: #{conv_rnn_forward.2} parent=23 // pred_check_branch
        %130 = sbr.rel (%p128) target = $region28
      $region27: #{conv_rnn_forward.2} parent=23 // pred_region
        %s131 = smul.u32 256, %s9
        %p132 = scmp.lt.s32.totalorder %s131, 511
        %s133 = scalar_select %p132, %s131, 511
        %s134 = smul.addr %s133, 4
        %s135 = scalar_lea.vmem %s0, %s134
        %s136 = smul.u32 256, %s9
      $region28: #{conv_rnn_forward.2} parent=23 // pred_fallthru
        _
    $region24: #{conv_rnn_forward.2} parent=5 // pred_fallthru
      _
    %p137 = scmp.le.s32.totalorder 1, %s9
    %p138 = scmp.lt.s32.totalorder %s9, 3
    %p139 = pnand %p137, %p138
    %p140 = pneg %p139
    // Predicated region
    $region29: #{conv_rnn_forward.2} parent=5 // pred_check
      _
    $region30: #{conv_rnn_forward.2} parent=5 // pred_check_branch
      %142 = sbr.rel (%p139) target = $region32
    $region31: #{conv_rnn_forward.2} parent=5 // pred_region
      %s143 = ssub.s32 %s9, 1
      %s144 = smul.u32 256, %s14
      %p145 = scmp.lt.s32.totalorder %s144, 511
      %s146 = scalar_select %p145, %s144, 511
      %s147 = smul.addr %s146, 4
      %s148 = scalar_lea.vmem %s0, %s147
      %p149 = pneg %p35
      %p150 = pneg %p32
      %p151 = pneg %p56
      %p152 = pneg %p53
      %p153 = pneg %p77
      %p154 = pneg %p74
      %p155 = pneg %p103
      %p156 = pneg %p100
      %p157 = scmp.lt.s32.totalorder %s14, 1
      %s158 = scalar_select %p157, %s14, 1
      %s159 = smul.addr %s158, 8
      %s160 = scalar_lea.vmem %s3, %s159
      %s161 = smul.u32 256, %s14
      %p162 = scmp.lt.s32.totalorder %s161, 511
      %s163 = scalar_select %p162, %s161, 511
      %s164 = smul.addr %s163, 4
      %s165 = scalar_lea.vmem %s0, %s164
      %s166 = smul.u32 256, %s14
      %p167 = scmp.lt.s32.totalorder %s14, 1
      %s168 = scalar_select %p167, %s14, 1
      %s169 = smul.addr %s168, 8
      %s170 = scalar_lea.vmem %s3, %s169
      %v172 = vld [vmem:[%s165] sm:$0xf]
      %v173 = vld [vmem:[%s165 + $0x4] sm:$0xf]
      %v174 = vld [vmem:[%s165 + $0x8] sm:$0xf]
      %v175 = vld [vmem:[%s165 + $0xc] sm:$0xf]
      %v176 = vld [vmem:[%s165 + $0x10] sm:$0xf]
      %v177 = vld [vmem:[%s165 + $0x14] sm:$0xf]
      %v178 = vld [vmem:[%s165 + $0x18] sm:$0xf]
      %v179 = vld [vmem:[%s165 + $0x1c] sm:$0xf]
      %v180 = vld [vmem:[%s165 + $0x20] sm:$0xf]
      %v181 = vld [vmem:[%s165 + $0x24] sm:$0xf]
      %v182 = vld [vmem:[%s165 + $0x28] sm:$0xf]
      %v183 = vld [vmem:[%s165 + $0x2c] sm:$0xf]
      %v184 = vld [vmem:[%s165 + $0x30] sm:$0xf]
      %v185 = vld [vmem:[%s165 + $0x34] sm:$0xf]
      %v186 = vld [vmem:[%s165 + $0x38] sm:$0xf]
      %v187 = vld [vmem:[%s165 + $0x3c] sm:$0xf]
      %v188 = vld [vmem:[%s165 + $0x40] sm:$0xf]
      %v189 = vld [vmem:[%s165 + $0x44] sm:$0xf]
      %v190 = vld [vmem:[%s165 + $0x48] sm:$0xf]
      %v191 = vld [vmem:[%s165 + $0x4c] sm:$0xf]
      %v192 = vld [vmem:[%s165 + $0x50] sm:$0xf]
      %v193 = vld [vmem:[%s165 + $0x54] sm:$0xf]
      %v194 = vld [vmem:[%s165 + $0x58] sm:$0xf]
      %v195 = vld [vmem:[%s165 + $0x5c] sm:$0xf]
      %v196 = vld [vmem:[%s165 + $0x60] sm:$0xf]
      %v197 = vld [vmem:[%s165 + $0x64] sm:$0xf]
      %v198 = vld [vmem:[%s165 + $0x68] sm:$0xf]
      %v199 = vld [vmem:[%s165 + $0x6c] sm:$0xf]
      %v200 = vld [vmem:[%s165 + $0x70] sm:$0xf]
      %v201 = vld [vmem:[%s165 + $0x74] sm:$0xf]
      %v202 = vld [vmem:[%s165 + $0x78] sm:$0xf]
      %v203 = vld [vmem:[%s165 + $0x7c] sm:$0xf]
      %v204 = vld [vmem:[%s165 + $0x80] sm:$0xf]
      %v205 = vld [vmem:[%s165 + $0x84] sm:$0xf]
      %v206 = vld [vmem:[%s165 + $0x88] sm:$0xf]
      %v207 = vld [vmem:[%s165 + $0x8c] sm:$0xf]
      %v208 = vld [vmem:[%s165 + $0x90] sm:$0xf]
      %v209 = vld [vmem:[%s165 + $0x94] sm:$0xf]
      %v210 = vld [vmem:[%s165 + $0x98] sm:$0xf]
      %v211 = vld [vmem:[%s165 + $0x9c] sm:$0xf]
      %v212 = vld [vmem:[%s165 + $0xa0] sm:$0xf]
      %v213 = vld [vmem:[%s165 + $0xa4] sm:$0xf]
      %v214 = vld [vmem:[%s165 + $0xa8] sm:$0xf]
      %v215 = vld [vmem:[%s165 + $0xac] sm:$0xf]
      %v216 = vld [vmem:[%s165 + $0xb0] sm:$0xf]
      %v217 = vld [vmem:[%s165 + $0xb4] sm:$0xf]
      %v218 = vld [vmem:[%s165 + $0xb8] sm:$0xf]
      %v219 = vld [vmem:[%s165 + $0xbc] sm:$0xf]
      %v220 = vld [vmem:[%s165 + $0xc0] sm:$0xf]
      %v221 = vld [vmem:[%s165 + $0xc4] sm:$0xf]
      %v222 = vld [vmem:[%s165 + $0xc8] sm:$0xf]
      %v223 = vld [vmem:[%s165 + $0xcc] sm:$0xf]
      %v224 = vld [vmem:[%s165 + $0xd0] sm:$0xf]
      %v225 = vld [vmem:[%s165 + $0xd4] sm:$0xf]
      %v226 = vld [vmem:[%s165 + $0xd8] sm:$0xf]
      %v227 = vld [vmem:[%s165 + $0xdc] sm:$0xf]
      %v228 = vld [vmem:[%s165 + $0xe0] sm:$0xf]
      %v229 = vld [vmem:[%s165 + $0xe4] sm:$0xf]
      %v230 = vld [vmem:[%s165 + $0xe8] sm:$0xf]
      %v231 = vld [vmem:[%s165 + $0xec] sm:$0xf]
      %v232 = vld [vmem:[%s165 + $0xf0] sm:$0xf]
      %v233 = vld [vmem:[%s165 + $0xf4] sm:$0xf]
      %v234 = vld [vmem:[%s165 + $0xf8] sm:$0xf]
      %v235 = vld [vmem:[%s165 + $0xfc] sm:$0xf]
      %v236 = vld [vmem:[%s165 + $0x100] sm:$0xf]
      %v237 = vld [vmem:[%s165 + $0x104] sm:$0xf]
      %v238 = vld [vmem:[%s165 + $0x108] sm:$0xf]
      %v239 = vld [vmem:[%s165 + $0x10c] sm:$0xf]
      %v240 = vld [vmem:[%s165 + $0x110] sm:$0xf]
      %v241 = vld [vmem:[%s165 + $0x114] sm:$0xf]
      %v242 = vld [vmem:[%s165 + $0x118] sm:$0xf]
      %v243 = vld [vmem:[%s165 + $0x11c] sm:$0xf]
      %v244 = vld [vmem:[%s165 + $0x120] sm:$0xf]
      %v245 = vld [vmem:[%s165 + $0x124] sm:$0xf]
      %v246 = vld [vmem:[%s165 + $0x128] sm:$0xf]
      %v247 = vld [vmem:[%s165 + $0x12c] sm:$0xf]
      %v248 = vld [vmem:[%s165 + $0x130] sm:$0xf]
      %v249 = vld [vmem:[%s165 + $0x134] sm:$0xf]
      %v250 = vld [vmem:[%s165 + $0x138] sm:$0xf]
      %v251 = vld [vmem:[%s165 + $0x13c] sm:$0xf]
      %v252 = vld [vmem:[%s165 + $0x140] sm:$0xf]
      %v253 = vld [vmem:[%s165 + $0x144] sm:$0xf]
      %v254 = vld [vmem:[%s165 + $0x148] sm:$0xf]
      %v255 = vld [vmem:[%s165 + $0x14c] sm:$0xf]
      %v256 = vld [vmem:[%s165 + $0x150] sm:$0xf]
      %v257 = vld [vmem:[%s165 + $0x154] sm:$0xf]
      %v258 = vld [vmem:[%s165 + $0x158] sm:$0xf]
      %v259 = vld [vmem:[%s165 + $0x15c] sm:$0xf]
      %v260 = vld [vmem:[%s165 + $0x160] sm:$0xf]
      %v261 = vld [vmem:[%s165 + $0x164] sm:$0xf]
      %v262 = vld [vmem:[%s165 + $0x168] sm:$0xf]
      %v263 = vld [vmem:[%s165 + $0x16c] sm:$0xf]
      %v264 = vld [vmem:[%s165 + $0x170] sm:$0xf]
      %v265 = vld [vmem:[%s165 + $0x174] sm:$0xf]
      %v266 = vld [vmem:[%s165 + $0x178] sm:$0xf]
      %v267 = vld [vmem:[%s165 + $0x17c] sm:$0xf]
      %v268 = vld [vmem:[%s165 + $0x180] sm:$0xf]
      %v269 = vld [vmem:[%s165 + $0x184] sm:$0xf]
      %v270 = vld [vmem:[%s165 + $0x188] sm:$0xf]
      %v271 = vld [vmem:[%s165 + $0x18c] sm:$0xf]
      %v272 = vld [vmem:[%s165 + $0x190] sm:$0xf]
      %v273 = vld [vmem:[%s165 + $0x194] sm:$0xf]
      %v274 = vld [vmem:[%s165 + $0x198] sm:$0xf]
      %v275 = vld [vmem:[%s165 + $0x19c] sm:$0xf]
      %v276 = vld [vmem:[%s165 + $0x1a0] sm:$0xf]
      %v277 = vld [vmem:[%s165 + $0x1a4] sm:$0xf]
      %v278 = vld [vmem:[%s165 + $0x1a8] sm:$0xf]
      %v279 = vld [vmem:[%s165 + $0x1ac] sm:$0xf]
      %v280 = vld [vmem:[%s165 + $0x1b0] sm:$0xf]
      %v281 = vld [vmem:[%s165 + $0x1b4] sm:$0xf]
      %v282 = vld [vmem:[%s165 + $0x1b8] sm:$0xf]
      %v283 = vld [vmem:[%s165 + $0x1bc] sm:$0xf]
      %v284 = vld [vmem:[%s165 + $0x1c0] sm:$0xf]
      %v285 = vld [vmem:[%s165 + $0x1c4] sm:$0xf]
      %v286 = vld [vmem:[%s165 + $0x1c8] sm:$0xf]
      %v287 = vld [vmem:[%s165 + $0x1cc] sm:$0xf]
      %v288 = vld [vmem:[%s165 + $0x1d0] sm:$0xf]
      %v289 = vld [vmem:[%s165 + $0x1d4] sm:$0xf]
      %v290 = vld [vmem:[%s165 + $0x1d8] sm:$0xf]
      %v291 = vld [vmem:[%s165 + $0x1dc] sm:$0xf]
      %v292 = vld [vmem:[%s165 + $0x1e0] sm:$0xf]
      %v293 = vld [vmem:[%s165 + $0x1e4] sm:$0xf]
      %v294 = vld [vmem:[%s165 + $0x1e8] sm:$0xf]
      %v295 = vld [vmem:[%s165 + $0x1ec] sm:$0xf]
      %v296 = vld [vmem:[%s165 + $0x1f0] sm:$0xf]
      %v297 = vld [vmem:[%s165 + $0x1f4] sm:$0xf]
      %v298 = vld [vmem:[%s165 + $0x1f8] sm:$0xf]
      %v299 = vld [vmem:[%s165 + $0x1fc] sm:$0xf]
      %v300 = vld [vmem:[%s165 + $0x200] sm:$0xf]
      %v301 = vld [vmem:[%s165 + $0x204] sm:$0xf]
      %v302 = vld [vmem:[%s165 + $0x208] sm:$0xf]
      %v303 = vld [vmem:[%s165 + $0x20c] sm:$0xf]
      %v304 = vld [vmem:[%s165 + $0x210] sm:$0xf]
      %v305 = vld [vmem:[%s165 + $0x214] sm:$0xf]
      %v306 = vld [vmem:[%s165 + $0x218] sm:$0xf]
      %v307 = vld [vmem:[%s165 + $0x21c] sm:$0xf]
      %v308 = vld [vmem:[%s165 + $0x220] sm:$0xf]
      %v309 = vld [vmem:[%s165 + $0x224] sm:$0xf]
      %v310 = vld [vmem:[%s165 + $0x228] sm:$0xf]
      %v311 = vld [vmem:[%s165 + $0x22c] sm:$0xf]
      %v312 = vld [vmem:[%s165 + $0x230] sm:$0xf]
      %v313 = vld [vmem:[%s165 + $0x234] sm:$0xf]
      %v314 = vld [vmem:[%s165 + $0x238] sm:$0xf]
      %v315 = vld [vmem:[%s165 + $0x23c] sm:$0xf]
      %v316 = vld [vmem:[%s165 + $0x240] sm:$0xf]
      %v317 = vld [vmem:[%s165 + $0x244] sm:$0xf]
      %v318 = vld [vmem:[%s165 + $0x248] sm:$0xf]
      %v319 = vld [vmem:[%s165 + $0x24c] sm:$0xf]
      %v320 = vld [vmem:[%s165 + $0x250] sm:$0xf]
      %v321 = vld [vmem:[%s165 + $0x254] sm:$0xf]
      %v322 = vld [vmem:[%s165 + $0x258] sm:$0xf]
      %v323 = vld [vmem:[%s165 + $0x25c] sm:$0xf]
      %v324 = vld [vmem:[%s165 + $0x260] sm:$0xf]
      %v325 = vld [vmem:[%s165 + $0x264] sm:$0xf]
      %v326 = vld [vmem:[%s165 + $0x268] sm:$0xf]
      %v327 = vld [vmem:[%s165 + $0x26c] sm:$0xf]
      %v328 = vld [vmem:[%s165 + $0x270] sm:$0xf]
      %v329 = vld [vmem:[%s165 + $0x274] sm:$0xf]
      %v330 = vld [vmem:[%s165 + $0x278] sm:$0xf]
      %v331 = vld [vmem:[%s165 + $0x27c] sm:$0xf]
      %v332 = vld [vmem:[%s165 + $0x280] sm:$0xf]
      %v333 = vld [vmem:[%s165 + $0x284] sm:$0xf]
      %v334 = vld [vmem:[%s165 + $0x288] sm:$0xf]
      %v335 = vld [vmem:[%s165 + $0x28c] sm:$0xf]
      %v336 = vld [vmem:[%s165 + $0x290] sm:$0xf]
      %v337 = vld [vmem:[%s165 + $0x294] sm:$0xf]
      %v338 = vld [vmem:[%s165 + $0x298] sm:$0xf]
      %v339 = vld [vmem:[%s165 + $0x29c] sm:$0xf]
      %v340 = vld [vmem:[%s165 + $0x2a0] sm:$0xf]
      %v341 = vld [vmem:[%s165 + $0x2a4] sm:$0xf]
      %v342 = vld [vmem:[%s165 + $0x2a8] sm:$0xf]
      %v343 = vld [vmem:[%s165 + $0x2ac] sm:$0xf]
      %v344 = vld [vmem:[%s165 + $0x2b0] sm:$0xf]
      %v345 = vld [vmem:[%s165 + $0x2b4] sm:$0xf]
      %v346 = vld [vmem:[%s165 + $0x2b8] sm:$0xf]
      %v347 = vld [vmem:[%s165 + $0x2bc] sm:$0xf]
      %v348 = vld [vmem:[%s165 + $0x2c0] sm:$0xf]
      %v349 = vld [vmem:[%s165 + $0x2c4] sm:$0xf]
      %v350 = vld [vmem:[%s165 + $0x2c8] sm:$0xf]
      %v351 = vld [vmem:[%s165 + $0x2cc] sm:$0xf]
      %v352 = vld [vmem:[%s165 + $0x2d0] sm:$0xf]
      %v353 = vld [vmem:[%s165 + $0x2d4] sm:$0xf]
      %v354 = vld [vmem:[%s165 + $0x2d8] sm:$0xf]
      %v355 = vld [vmem:[%s165 + $0x2dc] sm:$0xf]
      %v356 = vld [vmem:[%s165 + $0x2e0] sm:$0xf]
      %v357 = vld [vmem:[%s165 + $0x2e4] sm:$0xf]
      %v358 = vld [vmem:[%s165 + $0x2e8] sm:$0xf]
      %v359 = vld [vmem:[%s165 + $0x2ec] sm:$0xf]
      %v360 = vld [vmem:[%s165 + $0x2f0] sm:$0xf]
      %v361 = vld [vmem:[%s165 + $0x2f4] sm:$0xf]
      %v362 = vld [vmem:[%s165 + $0x2f8] sm:$0xf]
      %v363 = vld [vmem:[%s165 + $0x2fc] sm:$0xf]
      %v364 = vld [vmem:[%s165 + $0x300] sm:$0xf]
      %v365 = vld [vmem:[%s165 + $0x304] sm:$0xf]
      %v366 = vld [vmem:[%s165 + $0x308] sm:$0xf]
      %v367 = vld [vmem:[%s165 + $0x30c] sm:$0xf]
      %v368 = vld [vmem:[%s165 + $0x310] sm:$0xf]
      %v369 = vld [vmem:[%s165 + $0x314] sm:$0xf]
      %v370 = vld [vmem:[%s165 + $0x318] sm:$0xf]
      %v371 = vld [vmem:[%s165 + $0x31c] sm:$0xf]
      %v372 = vld [vmem:[%s165 + $0x320] sm:$0xf]
      %v373 = vld [vmem:[%s165 + $0x324] sm:$0xf]
      %v374 = vld [vmem:[%s165 + $0x328] sm:$0xf]
      %v375 = vld [vmem:[%s165 + $0x32c] sm:$0xf]
      %v376 = vld [vmem:[%s165 + $0x330] sm:$0xf]
      %v377 = vld [vmem:[%s165 + $0x334] sm:$0xf]
      %v378 = vld [vmem:[%s165 + $0x338] sm:$0xf]
      %v379 = vld [vmem:[%s165 + $0x33c] sm:$0xf]
      %v380 = vld [vmem:[%s165 + $0x340] sm:$0xf]
      %v381 = vld [vmem:[%s165 + $0x344] sm:$0xf]
      %v382 = vld [vmem:[%s165 + $0x348] sm:$0xf]
      %v383 = vld [vmem:[%s165 + $0x34c] sm:$0xf]
      %v384 = vld [vmem:[%s165 + $0x350] sm:$0xf]
      %v385 = vld [vmem:[%s165 + $0x354] sm:$0xf]
      %v386 = vld [vmem:[%s165 + $0x358] sm:$0xf]
      %v387 = vld [vmem:[%s165 + $0x35c] sm:$0xf]
      %v388 = vld [vmem:[%s165 + $0x360] sm:$0xf]
      %v389 = vld [vmem:[%s165 + $0x364] sm:$0xf]
      %v390 = vld [vmem:[%s165 + $0x368] sm:$0xf]
      %v391 = vld [vmem:[%s165 + $0x36c] sm:$0xf]
      %v392 = vld [vmem:[%s165 + $0x370] sm:$0xf]
      %v393 = vld [vmem:[%s165 + $0x374] sm:$0xf]
      %v394 = vld [vmem:[%s165 + $0x378] sm:$0xf]
      %v395 = vld [vmem:[%s165 + $0x37c] sm:$0xf]
      %v396 = vld [vmem:[%s165 + $0x380] sm:$0xf]
      %v397 = vld [vmem:[%s165 + $0x384] sm:$0xf]
      %v398 = vld [vmem:[%s165 + $0x388] sm:$0xf]
      %v399 = vld [vmem:[%s165 + $0x38c] sm:$0xf]
      %v400 = vld [vmem:[%s165 + $0x390] sm:$0xf]
      %v401 = vld [vmem:[%s165 + $0x394] sm:$0xf]
      %v402 = vld [vmem:[%s165 + $0x398] sm:$0xf]
      %v403 = vld [vmem:[%s165 + $0x39c] sm:$0xf]
      %v404 = vld [vmem:[%s165 + $0x3a0] sm:$0xf]
      %v405 = vld [vmem:[%s165 + $0x3a4] sm:$0xf]
      %v406 = vld [vmem:[%s165 + $0x3a8] sm:$0xf]
      %v407 = vld [vmem:[%s165 + $0x3ac] sm:$0xf]
      %v408 = vld [vmem:[%s165 + $0x3b0] sm:$0xf]
      %v409 = vld [vmem:[%s165 + $0x3b4] sm:$0xf]
      %v410 = vld [vmem:[%s165 + $0x3b8] sm:$0xf]
      %v411 = vld [vmem:[%s165 + $0x3bc] sm:$0xf]
      %v412 = vld [vmem:[%s165 + $0x3c0] sm:$0xf]
      %v413 = vld [vmem:[%s165 + $0x3c4] sm:$0xf]
      %v414 = vld [vmem:[%s165 + $0x3c8] sm:$0xf]
      %v415 = vld [vmem:[%s165 + $0x3cc] sm:$0xf]
      %v416 = vld [vmem:[%s165 + $0x3d0] sm:$0xf]
      %v417 = vld [vmem:[%s165 + $0x3d4] sm:$0xf]
      %v418 = vld [vmem:[%s165 + $0x3d8] sm:$0xf]
      %v419 = vld [vmem:[%s165 + $0x3dc] sm:$0xf]
      %v420 = vld [vmem:[%s165 + $0x3e0] sm:$0xf]
      %v421 = vld [vmem:[%s165 + $0x3e4] sm:$0xf]
      %v422 = vld [vmem:[%s165 + $0x3e8] sm:$0xf]
      %v423 = vld [vmem:[%s165 + $0x3ec] sm:$0xf]
      %v424 = vld [vmem:[%s165 + $0x3f0] sm:$0xf]
      %v425 = vld [vmem:[%s165 + $0x3f4] sm:$0xf]
      %v426 = vld [vmem:[%s165 + $0x3f8] sm:$0xf]
      %v427 = vld [vmem:[%s165 + $0x3fc] sm:$0xf]
      %v428 = vld [vmem:[%s1] sm:$0xf]
      %v429 = vld [vmem:[%s1 + $0x4] sm:$0xf]
      %v430 = vld [vmem:[%s1 + $0x8] sm:$0xf]
      %v431 = vld [vmem:[%s1 + $0xc] sm:$0xf]
      %v432 = vld [vmem:[%s1 + $0x10] sm:$0x3]
      %v433 = vld [vmem:[%s2] sm:$0x1]
      %v435 = vlaneseq
      %v436 = vshrl.u32 %v435, 7
      %v437 = vsub.s32 0, %v436
      %v438 = vrot.slane %v433, %v437
      %v696 = vunpack.c.l.b16 %v172
      %v697 = vunpack.c.l.b16 %v173
      %v698 = vunpack.c.l.b16 %v174
      %v699 = vunpack.c.l.b16 %v175
      %v700 = vunpack.c.l.b16 %v176
      %v701 = vunpack.c.l.b16 %v177
      %v702 = vunpack.c.l.b16 %v178
      %v703 = vunpack.c.l.b16 %v179
      %v704 = vunpack.c.l.b16 %v180
      %v705 = vunpack.c.l.b16 %v181
      %v706 = vunpack.c.l.b16 %v182
      %v707 = vunpack.c.l.b16 %v183
      %v708 = vunpack.c.l.b16 %v184
      %v709 = vunpack.c.l.b16 %v185
      %v710 = vunpack.c.l.b16 %v186
      %v711 = vunpack.c.l.b16 %v187
      %v712 = vunpack.c.l.b16 %v188
      %v713 = vunpack.c.l.b16 %v189
      %v714 = vunpack.c.l.b16 %v190
      %v715 = vunpack.c.l.b16 %v191
      %v716 = vunpack.c.l.b16 %v192
      %v717 = vunpack.c.l.b16 %v193
      %v718 = vunpack.c.l.b16 %v194
      %v719 = vunpack.c.l.b16 %v195
      %v720 = vunpack.c.l.b16 %v196
      %v721 = vunpack.c.l.b16 %v197
      %v722 = vunpack.c.l.b16 %v198
      %v723 = vunpack.c.l.b16 %v199
      %v724 = vunpack.c.l.b16 %v200
      %v725 = vunpack.c.l.b16 %v201
      %v726 = vunpack.c.l.b16 %v202
      %v727 = vunpack.c.l.b16 %v203
      %v728 = vunpack.c.l.b16 %v204
      %v729 = vunpack.c.l.b16 %v205
      %v730 = vunpack.c.l.b16 %v206
      %v731 = vunpack.c.l.b16 %v207
      %v732 = vunpack.c.l.b16 %v208
      %v733 = vunpack.c.l.b16 %v209
      %v734 = vunpack.c.l.b16 %v210
      %v735 = vunpack.c.l.b16 %v211
      %v736 = vunpack.c.l.b16 %v212
      %v737 = vunpack.c.l.b16 %v213
      %v738 = vunpack.c.l.b16 %v214
      %v739 = vunpack.c.l.b16 %v215
      %v740 = vunpack.c.l.b16 %v216
      %v741 = vunpack.c.l.b16 %v217
      %v742 = vunpack.c.l.b16 %v218
      %v743 = vunpack.c.l.b16 %v219
      %v744 = vunpack.c.l.b16 %v220
      %v745 = vunpack.c.l.b16 %v221
      %v746 = vunpack.c.l.b16 %v222
      %v747 = vunpack.c.l.b16 %v223
      %v748 = vunpack.c.l.b16 %v224
      %v749 = vunpack.c.l.b16 %v225
      %v750 = vunpack.c.l.b16 %v226
      %v751 = vunpack.c.l.b16 %v227
      %v752 = vunpack.c.l.b16 %v228
      %v753 = vunpack.c.l.b16 %v229
      %v754 = vunpack.c.l.b16 %v230
      %v755 = vunpack.c.l.b16 %v231
      %v756 = vunpack.c.l.b16 %v232
      %v757 = vunpack.c.l.b16 %v233
      %v758 = vunpack.c.l.b16 %v234
      %v759 = vunpack.c.l.b16 %v235
      %v760 = vunpack.c.l.b16 %v236
      %v761 = vunpack.c.l.b16 %v237
      %v762 = vunpack.c.l.b16 %v238
      %v763 = vunpack.c.l.b16 %v239
      %v764 = vunpack.c.l.b16 %v240
      %v765 = vunpack.c.l.b16 %v241
      %v766 = vunpack.c.l.b16 %v242
      %v767 = vunpack.c.l.b16 %v243
      %v768 = vunpack.c.l.b16 %v244
      %v769 = vunpack.c.l.b16 %v245
      %v770 = vunpack.c.l.b16 %v246
      %v771 = vunpack.c.l.b16 %v247
      %v772 = vunpack.c.l.b16 %v248
      %v773 = vunpack.c.l.b16 %v249
      %v774 = vunpack.c.l.b16 %v250
      %v775 = vunpack.c.l.b16 %v251
      %v776 = vunpack.c.l.b16 %v252
      %v777 = vunpack.c.l.b16 %v253
      %v778 = vunpack.c.l.b16 %v254
      %v779 = vunpack.c.l.b16 %v255
      %v780 = vunpack.c.l.b16 %v256
      %v781 = vunpack.c.l.b16 %v257
      %v782 = vunpack.c.l.b16 %v258
      %v783 = vunpack.c.l.b16 %v259
      %v784 = vunpack.c.l.b16 %v260
      %v785 = vunpack.c.l.b16 %v261
      %v786 = vunpack.c.l.b16 %v262
      %v787 = vunpack.c.l.b16 %v263
      %v788 = vunpack.c.l.b16 %v264
      %v789 = vunpack.c.l.b16 %v265
      %v790 = vunpack.c.l.b16 %v266
      %v791 = vunpack.c.l.b16 %v267
      %v792 = vunpack.c.l.b16 %v268
      %v793 = vunpack.c.l.b16 %v269
      %v794 = vunpack.c.l.b16 %v270
      %v795 = vunpack.c.l.b16 %v271
      %v796 = vunpack.c.l.b16 %v272
      %v797 = vunpack.c.l.b16 %v273
      %v798 = vunpack.c.l.b16 %v274
      %v799 = vunpack.c.l.b16 %v275
      %v800 = vunpack.c.l.b16 %v276
      %v801 = vunpack.c.l.b16 %v277
      %v802 = vunpack.c.l.b16 %v278
      %v803 = vunpack.c.l.b16 %v279
      %v804 = vunpack.c.l.b16 %v280
      %v805 = vunpack.c.l.b16 %v281
      %v806 = vunpack.c.l.b16 %v282
      %v807 = vunpack.c.l.b16 %v283
      %v808 = vunpack.c.l.b16 %v284
      %v809 = vunpack.c.l.b16 %v285
      %v810 = vunpack.c.l.b16 %v286
      %v811 = vunpack.c.l.b16 %v287
      %v812 = vunpack.c.l.b16 %v288
      %v813 = vunpack.c.l.b16 %v289
      %v814 = vunpack.c.l.b16 %v290
      %v815 = vunpack.c.l.b16 %v291
      %v816 = vunpack.c.l.b16 %v292
      %v817 = vunpack.c.l.b16 %v293
      %v818 = vunpack.c.l.b16 %v294
      %v819 = vunpack.c.l.b16 %v295
      %v820 = vunpack.c.l.b16 %v296
      %v821 = vunpack.c.l.b16 %v297
      %v822 = vunpack.c.l.b16 %v298
      %v823 = vunpack.c.l.b16 %v299
      %v824 = vunpack.c.l.b16 %v300
      %v825 = vunpack.c.l.b16 %v301
      %v826 = vunpack.c.l.b16 %v302
      %v827 = vunpack.c.l.b16 %v303
      %v828 = vunpack.c.l.b16 %v304
      %v829 = vunpack.c.l.b16 %v305
      %v830 = vunpack.c.l.b16 %v306
      %v831 = vunpack.c.l.b16 %v307
      %v832 = vunpack.c.l.b16 %v308
      %v833 = vunpack.c.l.b16 %v309
      %v834 = vunpack.c.l.b16 %v310
      %v835 = vunpack.c.l.b16 %v311
      %v836 = vunpack.c.l.b16 %v312
      %v837 = vunpack.c.l.b16 %v313
      %v838 = vunpack.c.l.b16 %v314
      %v839 = vunpack.c.l.b16 %v315
      %v840 = vunpack.c.l.b16 %v316
      %v841 = vunpack.c.l.b16 %v317
      %v842 = vunpack.c.l.b16 %v318
      %v843 = vunpack.c.l.b16 %v319
      %v844 = vunpack.c.l.b16 %v320
      %v845 = vunpack.c.l.b16 %v321
      %v846 = vunpack.c.l.b16 %v322
      %v847 = vunpack.c.l.b16 %v323
      %v848 = vunpack.c.l.b16 %v324
      %v849 = vunpack.c.l.b16 %v325
      %v850 = vunpack.c.l.b16 %v326
      %v851 = vunpack.c.l.b16 %v327
      %v852 = vunpack.c.l.b16 %v328
      %v853 = vunpack.c.l.b16 %v329
      %v854 = vunpack.c.l.b16 %v330
      %v855 = vunpack.c.l.b16 %v331
      %v856 = vunpack.c.l.b16 %v332
      %v857 = vunpack.c.l.b16 %v333
      %v858 = vunpack.c.l.b16 %v334
      %v859 = vunpack.c.l.b16 %v335
      %v860 = vunpack.c.l.b16 %v336
      %v861 = vunpack.c.l.b16 %v337
      %v862 = vunpack.c.l.b16 %v338
      %v863 = vunpack.c.l.b16 %v339
      %v864 = vunpack.c.l.b16 %v340
      %v865 = vunpack.c.l.b16 %v341
      %v866 = vunpack.c.l.b16 %v342
      %v867 = vunpack.c.l.b16 %v343
      %v868 = vunpack.c.l.b16 %v344
      %v869 = vunpack.c.l.b16 %v345
      %v870 = vunpack.c.l.b16 %v346
      %v871 = vunpack.c.l.b16 %v347
      %v872 = vunpack.c.l.b16 %v348
      %v873 = vunpack.c.l.b16 %v349
      %v874 = vunpack.c.l.b16 %v350
      %v875 = vunpack.c.l.b16 %v351
      %v876 = vunpack.c.l.b16 %v352
      %v877 = vunpack.c.l.b16 %v353
      %v878 = vunpack.c.l.b16 %v354
      %v879 = vunpack.c.l.b16 %v355
      %v880 = vunpack.c.l.b16 %v356
      %v881 = vunpack.c.l.b16 %v357
      %v882 = vunpack.c.l.b16 %v358
      %v883 = vunpack.c.l.b16 %v359
      %v884 = vunpack.c.l.b16 %v360
      %v885 = vunpack.c.l.b16 %v361
      %v886 = vunpack.c.l.b16 %v362
      %v887 = vunpack.c.l.b16 %v363
      %v888 = vunpack.c.l.b16 %v364
      %v889 = vunpack.c.l.b16 %v365
      %v890 = vunpack.c.l.b16 %v366
      %v891 = vunpack.c.l.b16 %v367
      %v892 = vunpack.c.l.b16 %v368
      %v893 = vunpack.c.l.b16 %v369
      %v894 = vunpack.c.l.b16 %v370
      %v895 = vunpack.c.l.b16 %v371
      %v896 = vunpack.c.l.b16 %v372
      %v897 = vunpack.c.l.b16 %v373
      %v898 = vunpack.c.l.b16 %v374
      %v899 = vunpack.c.l.b16 %v375
      %v900 = vunpack.c.l.b16 %v376
      %v901 = vunpack.c.l.b16 %v377
      %v902 = vunpack.c.l.b16 %v378
      %v903 = vunpack.c.l.b16 %v379
      %v904 = vunpack.c.l.b16 %v380
      %v905 = vunpack.c.l.b16 %v381
      %v906 = vunpack.c.l.b16 %v382
      %v907 = vunpack.c.l.b16 %v383
      %v908 = vunpack.c.l.b16 %v384
      %v909 = vunpack.c.l.b16 %v385
      %v910 = vunpack.c.l.b16 %v386
      %v911 = vunpack.c.l.b16 %v387
      %v912 = vunpack.c.l.b16 %v388
      %v913 = vunpack.c.l.b16 %v389
      %v914 = vunpack.c.l.b16 %v390
      %v915 = vunpack.c.l.b16 %v391
      %v916 = vunpack.c.l.b16 %v392
      %v917 = vunpack.c.l.b16 %v393
      %v918 = vunpack.c.l.b16 %v394
      %v919 = vunpack.c.l.b16 %v395
      %v920 = vunpack.c.l.b16 %v396
      %v921 = vunpack.c.l.b16 %v397
      %v922 = vunpack.c.l.b16 %v398
      %v923 = vunpack.c.l.b16 %v399
      %v924 = vunpack.c.l.b16 %v400
      %v925 = vunpack.c.l.b16 %v401
      %v926 = vunpack.c.l.b16 %v402
      %v927 = vunpack.c.l.b16 %v403
      %v928 = vunpack.c.l.b16 %v404
      %v929 = vunpack.c.l.b16 %v405
      %v930 = vunpack.c.l.b16 %v406
      %v931 = vunpack.c.l.b16 %v407
      %v932 = vunpack.c.l.b16 %v408
      %v933 = vunpack.c.l.b16 %v409
      %v934 = vunpack.c.l.b16 %v410
      %v935 = vunpack.c.l.b16 %v411
      %v936 = vunpack.c.l.b16 %v412
      %v937 = vunpack.c.l.b16 %v413
      %v938 = vunpack.c.l.b16 %v414
      %v939 = vunpack.c.l.b16 %v415
      %v940 = vunpack.c.l.b16 %v416
      %v941 = vunpack.c.l.b16 %v417
      %v942 = vunpack.c.l.b16 %v418
      %v943 = vunpack.c.l.b16 %v419
      %v944 = vunpack.c.l.b16 %v420
      %v945 = vunpack.c.l.b16 %v421
      %v946 = vunpack.c.l.b16 %v422
      %v947 = vunpack.c.l.b16 %v423
      %v948 = vunpack.c.l.b16 %v424
      %v949 = vunpack.c.l.b16 %v425
      %v950 = vunpack.c.l.b16 %v426
      %v951 = vunpack.c.l.b16 %v427
      %v952 = vpack.c.b16 %v697, %v696
      %v953 = vpack.c.b16 %v699, %v698
      %v954 = vpack.c.b16 %v701, %v700
      %v955 = vpack.c.b16 %v703, %v702
      %v956 = vpack.c.b16 %v705, %v704
      %v957 = vpack.c.b16 %v707, %v706
      %v958 = vpack.c.b16 %v709, %v708
      %v959 = vpack.c.b16 %v711, %v710
      %v960 = vpack.c.b16 %v713, %v712
      %v961 = vpack.c.b16 %v715, %v714
      %v962 = vpack.c.b16 %v717, %v716
      %v963 = vpack.c.b16 %v719, %v718
      %v964 = vpack.c.b16 %v721, %v720
      %v965 = vpack.c.b16 %v723, %v722
      %v966 = vpack.c.b16 %v725, %v724
      %v967 = vpack.c.b16 %v727, %v726
      %v968 = vpack.c.b16 %v729, %v728
      %v969 = vpack.c.b16 %v731, %v730
      %v970 = vpack.c.b16 %v733, %v732
      %v971 = vpack.c.b16 %v735, %v734
      %v972 = vpack.c.b16 %v737, %v736
      %v973 = vpack.c.b16 %v739, %v738
      %v974 = vpack.c.b16 %v741, %v740
      %v975 = vpack.c.b16 %v743, %v742
      %v976 = vpack.c.b16 %v745, %v744
      %v977 = vpack.c.b16 %v747, %v746
      %v978 = vpack.c.b16 %v749, %v748
      %v979 = vpack.c.b16 %v751, %v750
      %v980 = vpack.c.b16 %v753, %v752
      %v981 = vpack.c.b16 %v755, %v754
      %v982 = vpack.c.b16 %v757, %v756
      %v983 = vpack.c.b16 %v759, %v758
      %v984 = vpack.c.b16 %v761, %v760
      %v985 = vpack.c.b16 %v763, %v762
      %v986 = vpack.c.b16 %v765, %v764
      %v987 = vpack.c.b16 %v767, %v766
      %v988 = vpack.c.b16 %v769, %v768
      %v989 = vpack.c.b16 %v771, %v770
      %v990 = vpack.c.b16 %v773, %v772
      %v991 = vpack.c.b16 %v775, %v774
      %v992 = vpack.c.b16 %v777, %v776
      %v993 = vpack.c.b16 %v779, %v778
      %v994 = vpack.c.b16 %v781, %v780
      %v995 = vpack.c.b16 %v783, %v782
      %v996 = vpack.c.b16 %v785, %v784
      %v997 = vpack.c.b16 %v787, %v786
      %v998 = vpack.c.b16 %v789, %v788
      %v999 = vpack.c.b16 %v791, %v790
      %v1000 = vpack.c.b16 %v793, %v792
      %v1001 = vpack.c.b16 %v795, %v794
      %v1002 = vpack.c.b16 %v797, %v796
      %v1003 = vpack.c.b16 %v799, %v798
      %v1004 = vpack.c.b16 %v801, %v800
      %v1005 = vpack.c.b16 %v803, %v802
      %v1006 = vpack.c.b16 %v805, %v804
      %v1007 = vpack.c.b16 %v807, %v806
      %v1008 = vpack.c.b16 %v809, %v808
      %v1009 = vpack.c.b16 %v811, %v810
      %v1010 = vpack.c.b16 %v813, %v812
      %v1011 = vpack.c.b16 %v815, %v814
      %v1012 = vpack.c.b16 %v817, %v816
      %v1013 = vpack.c.b16 %v819, %v818
      %v1014 = vpack.c.b16 %v821, %v820
      %v1015 = vpack.c.b16 %v823, %v822
      %v1016 = vpack.c.b16 %v825, %v824
      %v1017 = vpack.c.b16 %v827, %v826
      %v1018 = vpack.c.b16 %v829, %v828
      %v1019 = vpack.c.b16 %v831, %v830
      %v1020 = vpack.c.b16 %v833, %v832
      %v1021 = vpack.c.b16 %v835, %v834
      %v1022 = vpack.c.b16 %v837, %v836
      %v1023 = vpack.c.b16 %v839, %v838
      %v1024 = vpack.c.b16 %v841, %v840
      %v1025 = vpack.c.b16 %v843, %v842
      %v1026 = vpack.c.b16 %v845, %v844
      %v1027 = vpack.c.b16 %v847, %v846
      %v1028 = vpack.c.b16 %v849, %v848
      %v1029 = vpack.c.b16 %v851, %v850
      %v1030 = vpack.c.b16 %v853, %v852
      %v1031 = vpack.c.b16 %v855, %v854
      %v1032 = vpack.c.b16 %v857, %v856
      %v1033 = vpack.c.b16 %v859, %v858
      %v1034 = vpack.c.b16 %v861, %v860
      %v1035 = vpack.c.b16 %v863, %v862
      %v1036 = vpack.c.b16 %v865, %v864
      %v1037 = vpack.c.b16 %v867, %v866
      %v1038 = vpack.c.b16 %v869, %v868
      %v1039 = vpack.c.b16 %v871, %v870
      %v1040 = vpack.c.b16 %v873, %v872
      %v1041 = vpack.c.b16 %v875, %v874
      %v1042 = vpack.c.b16 %v877, %v876
      %v1043 = vpack.c.b16 %v879, %v878
      %v1044 = vpack.c.b16 %v881, %v880
      %v1045 = vpack.c.b16 %v883, %v882
      %v1046 = vpack.c.b16 %v885, %v884
      %v1047 = vpack.c.b16 %v887, %v886
      %v1048 = vpack.c.b16 %v889, %v888
      %v1049 = vpack.c.b16 %v891, %v890
      %v1050 = vpack.c.b16 %v893, %v892
      %v1051 = vpack.c.b16 %v895, %v894
      %v1052 = vpack.c.b16 %v897, %v896
      %v1053 = vpack.c.b16 %v899, %v898
      %v1054 = vpack.c.b16 %v901, %v900
      %v1055 = vpack.c.b16 %v903, %v902
      %v1056 = vpack.c.b16 %v905, %v904
      %v1057 = vpack.c.b16 %v907, %v906
      %v1058 = vpack.c.b16 %v909, %v908
      %v1059 = vpack.c.b16 %v911, %v910
      %v1060 = vpack.c.b16 %v913, %v912
      %v1061 = vpack.c.b16 %v915, %v914
      %v1062 = vpack.c.b16 %v917, %v916
      %v1063 = vpack.c.b16 %v919, %v918
      %v1064 = vpack.c.b16 %v921, %v920
      %v1065 = vpack.c.b16 %v923, %v922
      %v1066 = vpack.c.b16 %v925, %v924
      %v1067 = vpack.c.b16 %v927, %v926
      %v1068 = vpack.c.b16 %v929, %v928
      %v1069 = vpack.c.b16 %v931, %v930
      %v1070 = vpack.c.b16 %v933, %v932
      %v1071 = vpack.c.b16 %v935, %v934
      %v1072 = vpack.c.b16 %v937, %v936
      %v1073 = vpack.c.b16 %v939, %v938
      %v1074 = vpack.c.b16 %v941, %v940
      %v1075 = vpack.c.b16 %v943, %v942
      %v1076 = vpack.c.b16 %v945, %v944
      %v1077 = vpack.c.b16 %v947, %v946
      %v1078 = vpack.c.b16 %v949, %v948
      %v1079 = vpack.c.b16 %v951, %v950
      %v1085 = vunpack.c.l.b16 %v428
      %v1086 = vunpack.c.l.b16 %v429
      %v1087 = vunpack.c.l.b16 %v430
      %v1088 = vunpack.c.l.b16 %v431
      %v1089 = vunpack.c.l.b16 %v432
      %v1090 = vpack.c.b16 %v1086, %v1085
      %v1091 = vpack.c.b16 %v1088, %v1087
      %v1092 = vpack.c.b16 %v1089, %v1089
      %vm1095 = vcmask 293888
      %v1097 = vsel %vm1095, %v952, 0
      %v1100 = vsel %vm1095, %v953, 0
      %v1103 = vsel %vm1095, %v954, 0
      %v1106 = vsel %vm1095, %v955, 0
      %v1109 = vsel %vm1095, %v956, 0
      %v1112 = vsel %vm1095, %v957, 0
      %v1115 = vsel %vm1095, %v958, 0
      %v1118 = vsel %vm1095, %v959, 0
      %v1121 = vsel %vm1095, %v960, 0
      %v1124 = vsel %vm1095, %v961, 0
      %v1127 = vsel %vm1095, %v962, 0
      %v1130 = vsel %vm1095, %v963, 0
      %v1133 = vsel %vm1095, %v964, 0
      %v1136 = vsel %vm1095, %v965, 0
      %v1139 = vsel %vm1095, %v966, 0
      %v1142 = vsel %vm1095, %v967, 0
      %v1145 = vsel %vm1095, %v968, 0
      %v1148 = vsel %vm1095, %v969, 0
      %v1151 = vsel %vm1095, %v970, 0
      %v1154 = vsel %vm1095, %v971, 0
      %v1157 = vsel %vm1095, %v972, 0
      %v1160 = vsel %vm1095, %v973, 0
      %v1163 = vsel %vm1095, %v974, 0
      %v1166 = vsel %vm1095, %v975, 0
      %v1169 = vsel %vm1095, %v976, 0
      %v1172 = vsel %vm1095, %v977, 0
      %v1175 = vsel %vm1095, %v978, 0
      %v1178 = vsel %vm1095, %v979, 0
      %v1181 = vsel %vm1095, %v980, 0
      %v1184 = vsel %vm1095, %v981, 0
      %v1187 = vsel %vm1095, %v982, 0
      %v1190 = vsel %vm1095, %v983, 0
      %v1193 = vsel %vm1095, %v984, 0
      %v1196 = vsel %vm1095, %v985, 0
      %v1199 = vsel %vm1095, %v986, 0
      %v1202 = vsel %vm1095, %v987, 0
      %v1205 = vsel %vm1095, %v988, 0
      %v1208 = vsel %vm1095, %v989, 0
      %v1211 = vsel %vm1095, %v990, 0
      %v1214 = vsel %vm1095, %v991, 0
      %v1217 = vsel %vm1095, %v992, 0
      %v1220 = vsel %vm1095, %v993, 0
      %v1223 = vsel %vm1095, %v994, 0
      %v1226 = vsel %vm1095, %v995, 0
      %v1229 = vsel %vm1095, %v996, 0
      %v1232 = vsel %vm1095, %v997, 0
      %v1235 = vsel %vm1095, %v998, 0
      %v1238 = vsel %vm1095, %v999, 0
      %v1241 = vsel %vm1095, %v1000, 0
      %v1244 = vsel %vm1095, %v1001, 0
      %v1247 = vsel %vm1095, %v1002, 0
      %v1250 = vsel %vm1095, %v1003, 0
      %v1253 = vsel %vm1095, %v1004, 0
      %v1256 = vsel %vm1095, %v1005, 0
      %v1259 = vsel %vm1095, %v1006, 0
      %v1262 = vsel %vm1095, %v1007, 0
      %v1265 = vsel %vm1095, %v1008, 0
      %v1268 = vsel %vm1095, %v1009, 0
      %v1271 = vsel %vm1095, %v1010, 0
      %v1274 = vsel %vm1095, %v1011, 0
      %v1277 = vsel %vm1095, %v1012, 0
      %v1280 = vsel %vm1095, %v1013, 0
      %v1283 = vsel %vm1095, %v1014, 0
      %v1286 = vsel %vm1095, %v1015, 0
      %v1289 = vsel %vm1095, %v1016, 0
      %v1292 = vsel %vm1095, %v1017, 0
      %v1295 = vsel %vm1095, %v1018, 0
      %v1298 = vsel %vm1095, %v1019, 0
      %v1301 = vsel %vm1095, %v1020, 0
      %v1304 = vsel %vm1095, %v1021, 0
      %v1307 = vsel %vm1095, %v1022, 0
      %v1310 = vsel %vm1095, %v1023, 0
      %v1313 = vsel %vm1095, %v1024, 0
      %v1316 = vsel %vm1095, %v1025, 0
      %v1319 = vsel %vm1095, %v1026, 0
      %v1322 = vsel %vm1095, %v1027, 0
      %v1325 = vsel %vm1095, %v1028, 0
      %v1328 = vsel %vm1095, %v1029, 0
      %v1331 = vsel %vm1095, %v1030, 0
      %v1334 = vsel %vm1095, %v1031, 0
      %v1337 = vsel %vm1095, %v1032, 0
      %v1340 = vsel %vm1095, %v1033, 0
      %v1343 = vsel %vm1095, %v1034, 0
      %v1346 = vsel %vm1095, %v1035, 0
      %v1349 = vsel %vm1095, %v1036, 0
      %v1352 = vsel %vm1095, %v1037, 0
      %v1355 = vsel %vm1095, %v1038, 0
      %v1358 = vsel %vm1095, %v1039, 0
      %v1361 = vsel %vm1095, %v1040, 0
      %v1364 = vsel %vm1095, %v1041, 0
      %v1367 = vsel %vm1095, %v1042, 0
      %v1370 = vsel %vm1095, %v1043, 0
      %v1373 = vsel %vm1095, %v1044, 0
      %v1376 = vsel %vm1095, %v1045, 0
      %v1379 = vsel %vm1095, %v1046, 0
      %v1382 = vsel %vm1095, %v1047, 0
      %v1385 = vsel %vm1095, %v1048, 0
      %v1388 = vsel %vm1095, %v1049, 0
      %v1391 = vsel %vm1095, %v1050, 0
      %v1394 = vsel %vm1095, %v1051, 0
      %v1397 = vsel %vm1095, %v1052, 0
      %v1400 = vsel %vm1095, %v1053, 0
      %v1403 = vsel %vm1095, %v1054, 0
      %v1406 = vsel %vm1095, %v1055, 0
      %v1409 = vsel %vm1095, %v1056, 0
      %v1412 = vsel %vm1095, %v1057, 0
      %v1415 = vsel %vm1095, %v1058, 0
      %v1418 = vsel %vm1095, %v1059, 0
      %v1421 = vsel %vm1095, %v1060, 0
      %v1424 = vsel %vm1095, %v1061, 0
      %v1427 = vsel %vm1095, %v1062, 0
      %v1430 = vsel %vm1095, %v1063, 0
      %v1433 = vsel %vm1095, %v1064, 0
      %v1436 = vsel %vm1095, %v1065, 0
      %v1439 = vsel %vm1095, %v1066, 0
      %v1442 = vsel %vm1095, %v1067, 0
      %v1445 = vsel %vm1095, %v1068, 0
      %v1448 = vsel %vm1095, %v1069, 0
      %v1451 = vsel %vm1095, %v1070, 0
      %v1454 = vsel %vm1095, %v1071, 0
      %v1457 = vsel %vm1095, %v1072, 0
      %v1460 = vsel %vm1095, %v1073, 0
      %v1463 = vsel %vm1095, %v1074, 0
      %v1466 = vsel %vm1095, %v1075, 0
      %v1469 = vsel %vm1095, %v1076, 0
      %v1472 = vsel %vm1095, %v1077, 0
      %v1475 = vsel %vm1095, %v1078, 0
      %v1478 = vsel %vm1095, %v1079, 0
      %vm1480 = vcmask 1041408
      %v1482 = vsel %vm1480, %v1092, 0
      %1484 = vmatprep.subr.bf16.mxu0 0
      %1485 = vmatpush1.bf16.msra.mxu0 %v1090
      %1486 = vmatprep.subr.bf16.mxu0 0
      %1487 = vmatpush1.bf16.msra.mxu0 %v1091
      %1488 = vmatprep.subr.bf16.mxu0 0
      %1489 = vmatpush1.bf16.msra.mxu0 %v1482
      %1490 = vmatprep.subr.bf16.mxu0 0
      %1491 = vmatpush1.bf16.msra.mxu0 0
      %1492 = vmatprep.subr.bf16.mxu0 0
      %1493 = vmatpush1.bf16.msra.mxu0 0
      %1494 = vmatprep.subr.bf16.mxu0 0
      %1495 = vmatpush1.bf16.msra.mxu0 0
      %1496 = vmatprep.subr.bf16.mxu0 0
      %1497 = vmatpush1.bf16.msra.mxu0 0
      %1498 = vmatprep.subr.bf16.mxu0 0
      %1499 = vmatpush1.bf16.msra.mxu0 0
      %1500 = vmatprep.subr.bf16.mxu0 0
      %1501 = vmatpush1.bf16.msra.mxu0 0
      %1502 = vmatprep.subr.bf16.mxu0 0
      %1503 = vmatpush1.bf16.msra.mxu0 0
      %1504 = vmatprep.subr.bf16.mxu0 0
      %1505 = vmatpush1.bf16.msra.mxu0 0
      %1506 = vmatprep.subr.bf16.mxu0 0
      %1507 = vmatpush1.bf16.msra.mxu0 0
      %1508 = vmatprep.subr.bf16.mxu0 0
      %1509 = vmatpush1.bf16.msra.mxu0 0
      %1510 = vmatprep.subr.bf16.mxu0 0
      %1511 = vmatpush1.bf16.msra.mxu0 0
      %1512 = vmatprep.subr.bf16.mxu0 0
      %1513 = vmatpush1.bf16.msra.mxu0 0
      %1514 = vmatprep.subr.bf16.mxu0 0
      %1515 = vmatpush1.bf16.msra.mxu0 0
      %1516 = vmatprep.mubr.bf16.mxu0 0
      %1517 = vmatmul.mubr.bf16.gmra.mrb[0].mxu0 %v1097
      %v1518 = vpop.f32.mrb[0].mxu0
      %v1519 = vadd.f32 %v438, %v1518
      %v1520 = vpop.f32.mrb[0].mxu0
      %v1521 = vpop.f32.mrb[0].mxu0
      %v1522 = vadd.f32 %v438, %v1521
      %v1523 = vpop.f32.mrb[0].mxu0
      %1524 = vmatprep.mubr.bf16.mxu0 0
      %1525 = vmatmul.mubr.bf16.gmra.mrb[0].mxu0 %v1100
      %v1526 = vpop.f32.mrb[0].mxu0
      %v1527 = vadd.f32 %v438, %v1526
      %v1528 = vpop.f32.mrb[0].mxu0
      %v1529 = vpop.f32.mrb[0].mxu0
      %v1530 = vadd.f32 %v438, %v1529
      %v1531 = vpop.f32.mrb[0].mxu0
      %1532 = vmatprep.mubr.bf16.mxu0 0
      %1533 = vmatmul.mubr.bf16.gmra.mrb[0].mxu0 %v1103
      %v1534 = vpop.f32.mrb[0].mxu0
      %v1535 = vadd.f32 %v438, %v1534
      %v1536 = vpop.f32.mrb[0].mxu0
      %v1537 = vpop.f32.mrb[0].mxu0
      %v1538 = vadd.f32 %v438, %v1537
      %v1539 = vpop.f32.mrb[0].mxu0
      %1540 = vmatprep.mubr.bf16.mxu0 0
      %1541 = vmatmul.mubr.bf16.gmra.mrb[0].mxu0 %v1106
      %v1542 = vpop.f32.mrb[0].mxu0
      %v1543 = vadd.f32 %v438, %v1542
      %v1544 = vpop.f32.mrb[0].mxu0
      %v1545 = vpop.f32.mrb[0].mxu0
      %v1546 = vadd.f32 %v438, %v1545
      %v1547 = vpop.f32.mrb[0].mxu0
      %1548 = vmatprep.mubr.bf16.mxu0 0
      %1549 = vmatmul.mubr.bf16.gmra.mrb[0].mxu0 %v1109
      %v1550 = vpop.f32.mrb[0].mxu0
      %v1551 = vadd.f32 %v438, %v1550
      %v1552 = vpop.f32.mrb[0].mxu0
      %v1553 = vpop.f32.mrb[0].mxu0
      %v1554 = vadd.f32 %v438, %v1553
      %v1555 = vpop.f32.mrb[0].mxu0
      %1556 = vmatprep.mubr.bf16.mxu0 0
      %1557 = vmatmul.mubr.bf16.gmra.mrb[0].mxu0 %v1112
      %v1558 = vpop.f32.mrb[0].mxu0
      %v1559 = vadd.f32 %v438, %v1558
      %v1560 = vpop.f32.mrb[0].mxu0
      %v1561 = vpop.f32.mrb[0].mxu0
      %v1562 = vadd.f32 %v438, %v1561
      %v1563 = vpop.f32.mrb[0].mxu0
      %1564 = vmatprep.mubr.bf16.mxu0 0
      %1565 = vmatmul.mubr.bf16.gmra.mrb[0].mxu0 %v1115
      %v1566 = vpop.f32.mrb[0].mxu0
      %v1567 = vadd.f32 %v438, %v1566
      %v1568 = vpop.f32.mrb[0].mxu0
      %v1569 = vpop.f32.mrb[0].mxu0
      %v1570 = vadd.f32 %v438, %v1569
      %v1571 = vpop.f32.mrb[0].mxu0
      %1572 = vmatprep.mubr.bf16.mxu0 0
      %1573 = vmatmul.mubr.bf16.gmra.mrb[0].mxu0 %v1118
      %v1574 = vpop.f32.mrb[0].mxu0
      %v1575 = vadd.f32 %v438, %v1574
      %v1576 = vpop.f32.mrb[0].mxu0
      %v1577 = vpop.f32.mrb[0].mxu0
      %v1578 = vadd.f32 %v438, %v1577
      %v1579 = vpop.f32.mrb[0].mxu0
      %1580 = vmatprep.mubr.bf16.mxu0 0
      %1581 = vmatmul.mubr.bf16.gmra.mrb[0].mxu0 %v1121
      %v1582 = vpop.f32.mrb[0].mxu0
      %v1583 = vadd.f32 %v438, %v1582
      %v1584 = vpop.f32.mrb[0].mxu0
      %v1585 = vpop.f32.mrb[0].mxu0
      %v1586 = vadd.f32 %v438, %v1585
      %v1587 = vpop.f32.mrb[0].mxu0
      %1588 = vmatprep.mubr.bf16.mxu0 0
      %1589 = vmatmul.mubr.bf16.gmra.mrb[0].mxu0 %v1124
      %v1590 = vpop.f32.mrb[0].mxu0
      %v1591 = vadd.f32 %v438, %v1590
      %v1592 = vpop.f32.mrb[0].mxu0
      %v1593 = vpop.f32.mrb[0].mxu0
      %v1594 = vadd.f32 %v438, %v1593
      %v1595 = vpop.f32.mrb[0].mxu0
      %1596 = vmatprep.mubr.bf16.mxu0 0
      %1597 = vmatmul.mubr.bf16.gmra.mrb[0].mxu0 %v1127
      %v1598 = vpop.f32.mrb[0].mxu0
      %v1599 = vadd.f32 %v438, %v1598
      %v1600 = vpop.f32.mrb[0].mxu0
      %v1601 = vpop.f32.mrb[0].mxu0
      %v1602 = vadd.f32 %v438, %v1601
      %v1603 = vpop.f32.mrb[0].mxu0
      %1604 = vmatprep.mubr.bf16.mxu0 0
      %1605 = vmatmul.mubr.bf16.gmra.mrb[0].mxu0 %v1130
      %v1606 = vpop.f32.mrb[0].mxu0
      %v1607 = vadd.f32 %v438, %v1606
      %v1608 = vpop.f32.mrb[0].mxu0
      %v1609 = vpop.f32.mrb[0].mxu0
      %v1610 = vadd.f32 %v438, %v1609
      %v1611 = vpop.f32.mrb[0].mxu0
      %1612 = vmatprep.mubr.bf16.mxu0 0
      %1613 = vmatmul.mubr.bf16.gmra.mrb[0].mxu0 %v1133
      %v1614 = vpop.f32.mrb[0].mxu0
      %v1615 = vadd.f32 %v438, %v1614
      %v1616 = vpop.f32.mrb[0].mxu0
      %v1617 = vpop.f32.mrb[0].mxu0
      %v1618 = vadd.f32 %v438, %v1617
      %v1619 = vpop.f32.mrb[0].mxu0
      %1620 = vmatprep.mubr.bf16.mxu0 0
      %1621 = vmatmul.mubr.bf16.gmra.mrb[0].mxu0 %v1136
      %v1622 = vpop.f32.mrb[0].mxu0
      %v1623 = vadd.f32 %v438, %v1622
      %v1624 = vpop.f32.mrb[0].mxu0
      %v1625 = vpop.f32.mrb[0].mxu0
      %v1626 = vadd.f32 %v438, %v1625
      %v1627 = vpop.f32.mrb[0].mxu0
      %1628 = vmatprep.mubr.bf16.mxu0 0
      %1629 = vmatmul.mubr.bf16.gmra.mrb[0].mxu0 %v1139
      %v1630 = vpop.f32.mrb[0].mxu0
      %v1631 = vadd.f32 %v438, %v1630
      %v1632 = vpop.f32.mrb[0].mxu0
      %v1633 = vpop.f32.mrb[0].mxu0
      %v1634 = vadd.f32 %v438, %v1633
      %v1635 = vpop.f32.mrb[0].mxu0
      %1636 = vmatprep.mubr.bf16.mxu0 0
      %1637 = vmatmul.mubr.bf16.gmra.mrb[0].mxu0 %v1142
      %v1638 = vpop.f32.mrb[0].mxu0
      %v1639 = vadd.f32 %v438, %v1638
      %v1640 = vpop.f32.mrb[0].mxu0
      %v1641 = vpop.f32.mrb[0].mxu0
      %v1642 = vadd.f32 %v438, %v1641
      %v1643 = vpop.f32.mrb[0].mxu0
      %1644 = vmatprep.mubr.bf16.mxu0 0
      %1645 = vmatmul.mubr.bf16.gmra.mrb[0].mxu0 %v1145
      %v1646 = vpop.f32.mrb[0].mxu0
      %v1647 = vadd.f32 %v438, %v1646
      %v1648 = vpop.f32.mrb[0].mxu0
      %v1649 = vpop.f32.mrb[0].mxu0
      %v1650 = vadd.f32 %v438, %v1649
      %v1651 = vpop.f32.mrb[0].mxu0
      %1652 = vmatprep.mubr.bf16.mxu0 0
      %1653 = vmatmul.mubr.bf16.gmra.mrb[0].mxu0 %v1148
      %v1654 = vpop.f32.mrb[0].mxu0
      %v1655 = vadd.f32 %v438, %v1654
      %v1656 = vpop.f32.mrb[0].mxu0
      %v1657 = vpop.f32.mrb[0].mxu0
      %v1658 = vadd.f32 %v438, %v1657
      %v1659 = vpop.f32.mrb[0].mxu0
      %1660 = vmatprep.mubr.bf16.mxu0 0
      %1661 = vmatmul.mubr.bf16.gmra.mrb[0].mxu0 %v1151
      %v1662 = vpop.f32.mrb[0].mxu0
      %v1663 = vadd.f32 %v438, %v1662
      %v1664 = vpop.f32.mrb[0].mxu0
      %v1665 = vpop.f32.mrb[0].mxu0
      %v1666 = vadd.f32 %v438, %v1665
      %v1667 = vpop.f32.mrb[0].mxu0
      %1668 = vmatprep.mubr.bf16.mxu0 0
      %1669 = vmatmul.mubr.bf16.gmra.mrb[0].mxu0 %v1154
      %v1670 = vpop.f32.mrb[0].mxu0
      %v1671 = vadd.f32 %v438, %v1670
      %v1672 = vpop.f32.mrb[0].mxu0
      %v1673 = vpop.f32.mrb[0].mxu0
      %v1674 = vadd.f32 %v438, %v1673
      %v1675 = vpop.f32.mrb[0].mxu0
      %1676 = vmatprep.mubr.bf16.mxu0 0
      %1677 = vmatmul.mubr.bf16.gmra.mrb[0].mxu0 %v1157
      %v1678 = vpop.f32.mrb[0].mxu0
      %v1679 = vadd.f32 %v438, %v1678
      %v1680 = vpop.f32.mrb[0].mxu0
      %v1681 = vpop.f32.mrb[0].mxu0
      %v1682 = vadd.f32 %v438, %v1681
      %v1683 = vpop.f32.mrb[0].mxu0
      %1684 = vmatprep.mubr.bf16.mxu0 0
      %1685 = vmatmul.mubr.bf16.gmra.mrb[0].mxu0 %v1160
      %v1686 = vpop.f32.mrb[0].mxu0
      %v1687 = vadd.f32 %v438, %v1686
      %v1688 = vpop.f32.mrb[0].mxu0
      %v1689 = vpop.f32.mrb[0].mxu0
      %v1690 = vadd.f32 %v438, %v1689
      %v1691 = vpop.f32.mrb[0].mxu0
      %1692 = vmatprep.mubr.bf16.mxu0 0
      %1693 = vmatmul.mubr.bf16.gmra.mrb[0].mxu0 %v1163
      %v1694 = vpop.f32.mrb[0].mxu0
      %v1695 = vadd.f32 %v438, %v1694
      %v1696 = vpop.f32.mrb[0].mxu0
      %v1697 = vpop.f32.mrb[0].mxu0
      %v1698 = vadd.f32 %v438, %v1697
      %v1699 = vpop.f32.mrb[0].mxu0
      %1700 = vmatprep.mubr.bf16.mxu0 0
      %1701 = vmatmul.mubr.bf16.gmra.mrb[0].mxu0 %v1166
      %v1702 = vpop.f32.mrb[0].mxu0
      %v1703 = vadd.f32 %v438, %v1702
      %v1704 = vpop.f32.mrb[0].mxu0
      %v1705 = vpop.f32.mrb[0].mxu0
      %v1706 = vadd.f32 %v438, %v1705
      %v1707 = vpop.f32.mrb[0].mxu0
      %1708 = vmatprep.mubr.bf16.mxu0 0
      %1709 = vmatmul.mubr.bf16.gmra.mrb[0].mxu0 %v1169
      %v1710 = vpop.f32.mrb[0].mxu0
      %v1711 = vadd.f32 %v438, %v1710
      %v1712 = vpop.f32.mrb[0].mxu0
      %v1713 = vpop.f32.mrb[0].mxu0
      %v1714 = vadd.f32 %v438, %v1713
      %v1715 = vpop.f32.mrb[0].mxu0
      %1716 = vmatprep.mubr.bf16.mxu0 0
      %1717 = vmatmul.mubr.bf16.gmra.mrb[0].mxu0 %v1172
      %v1718 = vpop.f32.mrb[0].mxu0
      %v1719 = vadd.f32 %v438, %v1718
      %v1720 = vpop.f32.mrb[0].mxu0
      %v1721 = vpop.f32.mrb[0].mxu0
      %v1722 = vadd.f32 %v438, %v1721
      %v1723 = vpop.f32.mrb[0].mxu0
      %1724 = vmatprep.mubr.bf16.mxu0 0
      %1725 = vmatmul.mubr.bf16.gmra.mrb[0].mxu0 %v1175
      %v1726 = vpop.f32.mrb[0].mxu0
      %v1727 = vadd.f32 %v438, %v1726
      %v1728 = vpop.f32.mrb[0].mxu0
      %v1729 = vpop.f32.mrb[0].mxu0
      %v1730 = vadd.f32 %v438, %v1729
      %v1731 = vpop.f32.mrb[0].mxu0
      %1732 = vmatprep.mubr.bf16.mxu0 0
      %1733 = vmatmul.mubr.bf16.gmra.mrb[0].mxu0 %v1178
      %v1734 = vpop.f32.mrb[0].mxu0
      %v1735 = vadd.f32 %v438, %v1734
      %v1736 = vpop.f32.mrb[0].mxu0
      %v1737 = vpop.f32.mrb[0].mxu0
      %v1738 = vadd.f32 %v438, %v1737
      %v1739 = vpop.f32.mrb[0].mxu0
      %1740 = vmatprep.mubr.bf16.mxu0 0
      %1741 = vmatmul.mubr.bf16.gmra.mrb[0].mxu0 %v1181
      %v1742 = vpop.f32.mrb[0].mxu0
      %v1743 = vadd.f32 %v438, %v1742
      %v1744 = vpop.f32.mrb[0].mxu0
      %v1745 = vpop.f32.mrb[0].mxu0
      %v1746 = vadd.f32 %v438, %v1745
      %v1747 = vpop.f32.mrb[0].mxu0
      %1748 = vmatprep.mubr.bf16.mxu0 0
      %1749 = vmatmul.mubr.bf16.gmra.mrb[0].mxu0 %v1184
      %v1750 = vpop.f32.mrb[0].mxu0
      %v1751 = vadd.f32 %v438, %v1750
      %v1752 = vpop.f32.mrb[0].mxu0
      %v1753 = vpop.f32.mrb[0].mxu0
      %v1754 = vadd.f32 %v438, %v1753
      %v1755 = vpop.f32.mrb[0].mxu0
      %1756 = vmatprep.mubr.bf16.mxu0 0
      %1757 = vmatmul.mubr.bf16.gmra.mrb[0].mxu0 %v1187
      %v1758 = vpop.f32.mrb[0].mxu0
      %v1759 = vadd.f32 %v438, %v1758
      %v1760 = vpop.f32.mrb[0].mxu0
      %v1761 = vpop.f32.mrb[0].mxu0
      %v1762 = vadd.f32 %v438, %v1761
      %v1763 = vpop.f32.mrb[0].mxu0
      %1764 = vmatprep.mubr.bf16.mxu0 0
      %1765 = vmatmul.mubr.bf16.gmra.mrb[0].mxu0 %v1190
      %v1766 = vpop.f32.mrb[0].mxu0
      %v1767 = vadd.f32 %v438, %v1766
      %v1768 = vpop.f32.mrb[0].mxu0
      %v1769 = vpop.f32.mrb[0].mxu0
      %v1770 = vadd.f32 %v438, %v1769
      %v1771 = vpop.f32.mrb[0].mxu0
      %1772 = vmatprep.mubr.bf16.mxu0 0
      %1773 = vmatmul.mubr.bf16.gmra.mrb[0].mxu0 %v1193
      %v1774 = vpop.f32.mrb[0].mxu0
      %v1775 = vadd.f32 %v438, %v1774
      %v1776 = vpop.f32.mrb[0].mxu0
      %v1777 = vpop.f32.mrb[0].mxu0
      %v1778 = vadd.f32 %v438, %v1777
      %v1779 = vpop.f32.mrb[0].mxu0
      %1780 = vmatprep.mubr.bf16.mxu0 0
      %1781 = vmatmul.mubr.bf16.gmra.mrb[0].mxu0 %v1196
      %v1782 = vpop.f32.mrb[0].mxu0
      %v1783 = vadd.f32 %v438, %v1782
      %v1784 = vpop.f32.mrb[0].mxu0
      %v1785 = vpop.f32.mrb[0].mxu0
      %v1786 = vadd.f32 %v438, %v1785
      %v1787 = vpop.f32.mrb[0].mxu0
      %1788 = vmatprep.mubr.bf16.mxu0 0
      %1789 = vmatmul.mubr.bf16.gmra.mrb[0].mxu0 %v1199
      %v1790 = vpop.f32.mrb[0].mxu0
      %v1791 = vadd.f32 %v438, %v1790
      %v1792 = vpop.f32.mrb[0].mxu0
      %v1793 = vpop.f32.mrb[0].mxu0
      %v1794 = vadd.f32 %v438, %v1793
      %v1795 = vpop.f32.mrb[0].mxu0
      %1796 = vmatprep.mubr.bf16.mxu0 0
      %1797 = vmatmul.mubr.bf16.gmra.mrb[0].mxu0 %v1202
      %v1798 = vpop.f32.mrb[0].mxu0
      %v1799 = vadd.f32 %v438, %v1798
      %v1800 = vpop.f32.mrb[0].mxu0
      %v1801 = vpop.f32.mrb[0].mxu0
      %v1802 = vadd.f32 %v438, %v1801
      %v1803 = vpop.f32.mrb[0].mxu0
      %1804 = vmatprep.mubr.bf16.mxu0 0
      %1805 = vmatmul.mubr.bf16.gmra.mrb[0].mxu0 %v1205
      %v1806 = vpop.f32.mrb[0].mxu0
      %v1807 = vadd.f32 %v438, %v1806
      %v1808 = vpop.f32.mrb[0].mxu0
      %v1809 = vpop.f32.mrb[0].mxu0
      %v1810 = vadd.f32 %v438, %v1809
      %v1811 = vpop.f32.mrb[0].mxu0
      %1812 = vmatprep.mubr.bf16.mxu0 0
      %1813 = vmatmul.mubr.bf16.gmra.mrb[0].mxu0 %v1208
      %v1814 = vpop.f32.mrb[0].mxu0
      %v1815 = vadd.f32 %v438, %v1814
      %v1816 = vpop.f32.mrb[0].mxu0
      %v1817 = vpop.f32.mrb[0].mxu0
      %v1818 = vadd.f32 %v438, %v1817
      %v1819 = vpop.f32.mrb[0].mxu0
      %1820 = vmatprep.mubr.bf16.mxu0 0
      %1821 = vmatmul.mubr.bf16.gmra.mrb[0].mxu0 %v1211
      %v1822 = vpop.f32.mrb[0].mxu0
      %v1823 = vadd.f32 %v438, %v1822
      %v1824 = vpop.f32.mrb[0].mxu0
      %v1825 = vpop.f32.mrb[0].mxu0
      %v1826 = vadd.f32 %v438, %v1825
      %v1827 = vpop.f32.mrb[0].mxu0
      %1828 = vmatprep.mubr.bf16.mxu0 0
      %1829 = vmatmul.mubr.bf16.gmra.mrb[0].mxu0 %v1214
      %v1830 = vpop.f32.mrb[0].mxu0
      %v1831 = vadd.f32 %v438, %v1830
      %v1832 = vpop.f32.mrb[0].mxu0
      %v1833 = vpop.f32.mrb[0].mxu0
      %v1834 = vadd.f32 %v438, %v1833
      %v1835 = vpop.f32.mrb[0].mxu0
      %1836 = vmatprep.mubr.bf16.mxu0 0
      %1837 = vmatmul.mubr.bf16.gmra.mrb[0].mxu0 %v1217
      %v1838 = vpop.f32.mrb[0].mxu0
      %v1839 = vadd.f32 %v438, %v1838
      %v1840 = vpop.f32.mrb[0].mxu0
      %v1841 = vpop.f32.mrb[0].mxu0
      %v1842 = vadd.f32 %v438, %v1841
      %v1843 = vpop.f32.mrb[0].mxu0
      %1844 = vmatprep.mubr.bf16.mxu0 0
      %1845 = vmatmul.mubr.bf16.gmra.mrb[0].mxu0 %v1220
      %v1846 = vpop.f32.mrb[0].mxu0
      %v1847 = vadd.f32 %v438, %v1846
      %v1848 = vpop.f32.mrb[0].mxu0
      %v1849 = vpop.f32.mrb[0].mxu0
      %v1850 = vadd.f32 %v438, %v1849
      %v1851 = vpop.f32.mrb[0].mxu0
      %1852 = vmatprep.mubr.bf16.mxu0 0
      %1853 = vmatmul.mubr.bf16.gmra.mrb[0].mxu0 %v1223
      %v1854 = vpop.f32.mrb[0].mxu0
      %v1855 = vadd.f32 %v438, %v1854
      %v1856 = vpop.f32.mrb[0].mxu0
      %v1857 = vpop.f32.mrb[0].mxu0
      %v1858 = vadd.f32 %v438, %v1857
      %v1859 = vpop.f32.mrb[0].mxu0
      %1860 = vmatprep.mubr.bf16.mxu0 0
      %1861 = vmatmul.mubr.bf16.gmra.mrb[0].mxu0 %v1226
      %v1862 = vpop.f32.mrb[0].mxu0
      %v1863 = vadd.f32 %v438, %v1862
      %v1864 = vpop.f32.mrb[0].mxu0
      %v1865 = vpop.f32.mrb[0].mxu0
      %v1866 = vadd.f32 %v438, %v1865
      %v1867 = vpop.f32.mrb[0].mxu0
      %1868 = vmatprep.mubr.bf16.mxu0 0
      %1869 = vmatmul.mubr.bf16.gmra.mrb[0].mxu0 %v1229
      %v1870 = vpop.f32.mrb[0].mxu0
      %v1871 = vadd.f32 %v438, %v1870
      %v1872 = vpop.f32.mrb[0].mxu0
      %v1873 = vpop.f32.mrb[0].mxu0
      %v1874 = vadd.f32 %v438, %v1873
      %v1875 = vpop.f32.mrb[0].mxu0
      %1876 = vmatprep.mubr.bf16.mxu0 0
      %1877 = vmatmul.mubr.bf16.gmra.mrb[0].mxu0 %v1232
      %v1878 = vpop.f32.mrb[0].mxu0
      %v1879 = vadd.f32 %v438, %v1878
      %v1880 = vpop.f32.mrb[0].mxu0
      %v1881 = vpop.f32.mrb[0].mxu0
      %v1882 = vadd.f32 %v438, %v1881
      %v1883 = vpop.f32.mrb[0].mxu0
      %1884 = vmatprep.mubr.bf16.mxu0 0
      %1885 = vmatmul.mubr.bf16.gmra.mrb[0].mxu0 %v1235
      %v1886 = vpop.f32.mrb[0].mxu0
      %v1887 = vadd.f32 %v438, %v1886
      %v1888 = vpop.f32.mrb[0].mxu0
      %v1889 = vpop.f32.mrb[0].mxu0
      %v1890 = vadd.f32 %v438, %v1889
      %v1891 = vpop.f32.mrb[0].mxu0
      %1892 = vmatprep.mubr.bf16.mxu0 0
      %1893 = vmatmul.mubr.bf16.gmra.mrb[0].mxu0 %v1238
      %v1894 = vpop.f32.mrb[0].mxu0
      %v1895 = vadd.f32 %v438, %v1894
      %v1896 = vpop.f32.mrb[0].mxu0
      %v1897 = vpop.f32.mrb[0].mxu0
      %v1898 = vadd.f32 %v438, %v1897
      %v1899 = vpop.f32.mrb[0].mxu0
      %1900 = vmatprep.mubr.bf16.mxu0 0
      %1901 = vmatmul.mubr.bf16.gmra.mrb[0].mxu0 %v1241
      %v1902 = vpop.f32.mrb[0].mxu0
      %v1903 = vadd.f32 %v438, %v1902
      %v1904 = vpop.f32.mrb[0].mxu0
      %v1905 = vpop.f32.mrb[0].mxu0
      %v1906 = vadd.f32 %v438, %v1905
      %v1907 = vpop.f32.mrb[0].mxu0
      %1908 = vmatprep.mubr.bf16.mxu0 0
      %1909 = vmatmul.mubr.bf16.gmra.mrb[0].mxu0 %v1244
      %v1910 = vpop.f32.mrb[0].mxu0
      %v1911 = vadd.f32 %v438, %v1910
      %v1912 = vpop.f32.mrb[0].mxu0
      %v1913 = vpop.f32.mrb[0].mxu0
      %v1914 = vadd.f32 %v438, %v1913
      %v1915 = vpop.f32.mrb[0].mxu0
      %1916 = vmatprep.mubr.bf16.mxu0 0
      %1917 = vmatmul.mubr.bf16.gmra.mrb[0].mxu0 %v1247
      %v1918 = vpop.f32.mrb[0].mxu0
      %v1919 = vadd.f32 %v438, %v1918
      %v1920 = vpop.f32.mrb[0].mxu0
      %v1921 = vpop.f32.mrb[0].mxu0
      %v1922 = vadd.f32 %v438, %v1921
      %v1923 = vpop.f32.mrb[0].mxu0
      %1924 = vmatprep.mubr.bf16.mxu0 0
      %1925 = vmatmul.mubr.bf16.gmra.mrb[0].mxu0 %v1250
      %v1926 = vpop.f32.mrb[0].mxu0
      %v1927 = vadd.f32 %v438, %v1926
      %v1928 = vpop.f32.mrb[0].mxu0
      %v1929 = vpop.f32.mrb[0].mxu0
      %v1930 = vadd.f32 %v438, %v1929
      %v1931 = vpop.f32.mrb[0].mxu0
      %1932 = vmatprep.mubr.bf16.mxu0 0
      %1933 = vmatmul.mubr.bf16.gmra.mrb[0].mxu0 %v1253
      %v1934 = vpop.f32.mrb[0].mxu0
      %v1935 = vadd.f32 %v438, %v1934
      %v1936 = vpop.f32.mrb[0].mxu0
      %v1937 = vpop.f32.mrb[0].mxu0
      %v1938 = vadd.f32 %v438, %v1937
      %v1939 = vpop.f32.mrb[0].mxu0
      %1940 = vmatprep.mubr.bf16.mxu0 0
      %1941 = vmatmul.mubr.bf16.gmra.mrb[0].mxu0 %v1256
      %v1942 = vpop.f32.mrb[0].mxu0
      %v1943 = vadd.f32 %v438, %v1942
      %v1944 = vpop.f32.mrb[0].mxu0
      %v1945 = vpop.f32.mrb[0].mxu0
      %v1946 = vadd.f32 %v438, %v1945
      %v1947 = vpop.f32.mrb[0].mxu0
      %1948 = vmatprep.mubr.bf16.mxu0 0
      %1949 = vmatmul.mubr.bf16.gmra.mrb[0].mxu0 %v1259
      %v1950 = vpop.f32.mrb[0].mxu0
      %v1951 = vadd.f32 %v438, %v1950
      %v1952 = vpop.f32.mrb[0].mxu0
      %v1953 = vpop.f32.mrb[0].mxu0
      %v1954 = vadd.f32 %v438, %v1953
      %v1955 = vpop.f32.mrb[0].mxu0
      %1956 = vmatprep.mubr.bf16.mxu0 0
      %1957 = vmatmul.mubr.bf16.gmra.mrb[0].mxu0 %v1262
      %v1958 = vpop.f32.mrb[0].mxu0
      %v1959 = vadd.f32 %v438, %v1958
      %v1960 = vpop.f32.mrb[0].mxu0
      %v1961 = vpop.f32.mrb[0].mxu0
      %v1962 = vadd.f32 %v438, %v1961
      %v1963 = vpop.f32.mrb[0].mxu0
      %1964 = vmatprep.mubr.bf16.mxu0 0
      %1965 = vmatmul.mubr.bf16.gmra.mrb[0].mxu0 %v1265
      %v1966 = vpop.f32.mrb[0].mxu0
      %v1967 = vadd.f32 %v438, %v1966
      %v1968 = vpop.f32.mrb[0].mxu0
      %v1969 = vpop.f32.mrb[0].mxu0
      %v1970 = vadd.f32 %v438, %v1969
      %v1971 = vpop.f32.mrb[0].mxu0
      %1972 = vmatprep.mubr.bf16.mxu0 0
      %1973 = vmatmul.mubr.bf16.gmra.mrb[0].mxu0 %v1268
      %v1974 = vpop.f32.mrb[0].mxu0
      %v1975 = vadd.f32 %v438, %v1974
      %v1976 = vpop.f32.mrb[0].mxu0
      %v1977 = vpop.f32.mrb[0].mxu0
      %v1978 = vadd.f32 %v438, %v1977
      %v1979 = vpop.f32.mrb[0].mxu0
      %1980 = vmatprep.mubr.bf16.mxu0 0
      %1981 = vmatmul.mubr.bf16.gmra.mrb[0].mxu0 %v1271
      %v1982 = vpop.f32.mrb[0].mxu0
      %v1983 = vadd.f32 %v438, %v1982
      %v1984 = vpop.f32.mrb[0].mxu0
      %v1985 = vpop.f32.mrb[0].mxu0
      %v1986 = vadd.f32 %v438, %v1985
      %v1987 = vpop.f32.mrb[0].mxu0
      %1988 = vmatprep.mubr.bf16.mxu0 0
      %1989 = vmatmul.mubr.bf16.gmra.mrb[0].mxu0 %v1274
      %v1990 = vpop.f32.mrb[0].mxu0
      %v1991 = vadd.f32 %v438, %v1990
      %v1992 = vpop.f32.mrb[0].mxu0
      %v1993 = vpop.f32.mrb[0].mxu0
      %v1994 = vadd.f32 %v438, %v1993
      %v1995 = vpop.f32.mrb[0].mxu0
      %1996 = vmatprep.mubr.bf16.mxu0 0
      %1997 = vmatmul.mubr.bf16.gmra.mrb[0].mxu0 %v1277
      %v1998 = vpop.f32.mrb[0].mxu0
      %v1999 = vadd.f32 %v438, %v1998
      %v2000 = vpop.f32.mrb[0].mxu0
      %v2001 = vpop.f32.mrb[0].mxu0
      %v2002 = vadd.f32 %v438, %v2001
      %v2003 = vpop.f32.mrb[0].mxu0
      %2004 = vmatprep.mubr.bf16.mxu0 0
      %2005 = vmatmul.mubr.bf16.gmra.mrb[0].mxu0 %v1280
      %v2006 = vpop.f32.mrb[0].mxu0
      %v2007 = vadd.f32 %v438, %v2006
      %v2008 = vpop.f32.mrb[0].mxu0
      %v2009 = vpop.f32.mrb[0].mxu0
      %v2010 = vadd.f32 %v438, %v2009
      %v2011 = vpop.f32.mrb[0].mxu0
      %2012 = vmatprep.mubr.bf16.mxu0 0
      %2013 = vmatmul.mubr.bf16.gmra.mrb[0].mxu0 %v1283
      %v2014 = vpop.f32.mrb[0].mxu0
      %v2015 = vadd.f32 %v438, %v2014
      %v2016 = vpop.f32.mrb[0].mxu0
      %v2017 = vpop.f32.mrb[0].mxu0
      %v2018 = vadd.f32 %v438, %v2017
      %v2019 = vpop.f32.mrb[0].mxu0
      %2020 = vmatprep.mubr.bf16.mxu0 0
      %2021 = vmatmul.mubr.bf16.gmra.mrb[0].mxu0 %v1286
      %v2022 = vpop.f32.mrb[0].mxu0
      %v2023 = vadd.f32 %v438, %v2022
      %v2024 = vpop.f32.mrb[0].mxu0
      %v2025 = vpop.f32.mrb[0].mxu0
      %v2026 = vadd.f32 %v438, %v2025
      %v2027 = vpop.f32.mrb[0].mxu0
      %2028 = vmatprep.mubr.bf16.mxu0 0
      %2029 = vmatmul.mubr.bf16.gmra.mrb[0].mxu0 %v1289
      %v2030 = vpop.f32.mrb[0].mxu0
      %v2031 = vadd.f32 %v438, %v2030
      %v2032 = vpop.f32.mrb[0].mxu0
      %v2033 = vpop.f32.mrb[0].mxu0
      %v2034 = vadd.f32 %v438, %v2033
      %v2035 = vpop.f32.mrb[0].mxu0
      %2036 = vmatprep.mubr.bf16.mxu0 0
      %2037 = vmatmul.mubr.bf16.gmra.mrb[0].mxu0 %v1292
      %v2038 = vpop.f32.mrb[0].mxu0
      %v2039 = vadd.f32 %v438, %v2038
      %v2040 = vpop.f32.mrb[0].mxu0
      %v2041 = vpop.f32.mrb[0].mxu0
      %v2042 = vadd.f32 %v438, %v2041
      %v2043 = vpop.f32.mrb[0].mxu0
      %2044 = vmatprep.mubr.bf16.mxu0 0
      %2045 = vmatmul.mubr.bf16.gmra.mrb[0].mxu0 %v1295
      %v2046 = vpop.f32.mrb[0].mxu0
      %v2047 = vadd.f32 %v438, %v2046
      %v2048 = vpop.f32.mrb[0].mxu0
      %v2049 = vpop.f32.mrb[0].mxu0
      %v2050 = vadd.f32 %v438, %v2049
      %v2051 = vpop.f32.mrb[0].mxu0
      %2052 = vmatprep.mubr.bf16.mxu0 0
      %2053 = vmatmul.mubr.bf16.gmra.mrb[0].mxu0 %v1298
      %v2054 = vpop.f32.mrb[0].mxu0
      %v2055 = vadd.f32 %v438, %v2054
      %v2056 = vpop.f32.mrb[0].mxu0
      %v2057 = vpop.f32.mrb[0].mxu0
      %v2058 = vadd.f32 %v438, %v2057
      %v2059 = vpop.f32.mrb[0].mxu0
      %2060 = vmatprep.mubr.bf16.mxu0 0
      %2061 = vmatmul.mubr.bf16.gmra.mrb[0].mxu0 %v1301
      %v2062 = vpop.f32.mrb[0].mxu0
      %v2063 = vadd.f32 %v438, %v2062
      %v2064 = vpop.f32.mrb[0].mxu0
      %v2065 = vpop.f32.mrb[0].mxu0
      %v2066 = vadd.f32 %v438, %v2065
      %v2067 = vpop.f32.mrb[0].mxu0
      %2068 = vmatprep.mubr.bf16.mxu0 0
      %2069 = vmatmul.mubr.bf16.gmra.mrb[0].mxu0 %v1304
      %v2070 = vpop.f32.mrb[0].mxu0
      %v2071 = vadd.f32 %v438, %v2070
      %v2072 = vpop.f32.mrb[0].mxu0
      %v2073 = vpop.f32.mrb[0].mxu0
      %v2074 = vadd.f32 %v438, %v2073
      %v2075 = vpop.f32.mrb[0].mxu0
      %2076 = vmatprep.mubr.bf16.mxu0 0
      %2077 = vmatmul.mubr.bf16.gmra.mrb[0].mxu0 %v1307
      %v2078 = vpop.f32.mrb[0].mxu0
      %v2079 = vadd.f32 %v438, %v2078
      %v2080 = vpop.f32.mrb[0].mxu0
      %v2081 = vpop.f32.mrb[0].mxu0
      %v2082 = vadd.f32 %v438, %v2081
      %v2083 = vpop.f32.mrb[0].mxu0
      %2084 = vmatprep.mubr.bf16.mxu0 0
      %2085 = vmatmul.mubr.bf16.gmra.mrb[0].mxu0 %v1310
      %v2086 = vpop.f32.mrb[0].mxu0
      %v2087 = vadd.f32 %v438, %v2086
      %v2088 = vpop.f32.mrb[0].mxu0
      %v2089 = vpop.f32.mrb[0].mxu0
      %v2090 = vadd.f32 %v438, %v2089
      %v2091 = vpop.f32.mrb[0].mxu0
      %2092 = vmatprep.mubr.bf16.mxu0 0
      %2093 = vmatmul.mubr.bf16.gmra.mrb[0].mxu0 %v1313
      %v2094 = vpop.f32.mrb[0].mxu0
      %v2095 = vadd.f32 %v438, %v2094
      %v2096 = vpop.f32.mrb[0].mxu0
      %v2097 = vpop.f32.mrb[0].mxu0
      %v2098 = vadd.f32 %v438, %v2097
      %v2099 = vpop.f32.mrb[0].mxu0
      %2100 = vmatprep.mubr.bf16.mxu0 0
      %2101 = vmatmul.mubr.bf16.gmra.mrb[0].mxu0 %v1316
      %v2102 = vpop.f32.mrb[0].mxu0
      %v2103 = vadd.f32 %v438, %v2102
      %v2104 = vpop.f32.mrb[0].mxu0
      %v2105 = vpop.f32.mrb[0].mxu0
      %v2106 = vadd.f32 %v438, %v2105
      %v2107 = vpop.f32.mrb[0].mxu0
      %2108 = vmatprep.mubr.bf16.mxu0 0
      %2109 = vmatmul.mubr.bf16.gmra.mrb[0].mxu0 %v1319
      %v2110 = vpop.f32.mrb[0].mxu0
      %v2111 = vadd.f32 %v438, %v2110
      %v2112 = vpop.f32.mrb[0].mxu0
      %v2113 = vpop.f32.mrb[0].mxu0
      %v2114 = vadd.f32 %v438, %v2113
      %v2115 = vpop.f32.mrb[0].mxu0
      %2116 = vmatprep.mubr.bf16.mxu0 0
      %2117 = vmatmul.mubr.bf16.gmra.mrb[0].mxu0 %v1322
      %v2118 = vpop.f32.mrb[0].mxu0
      %v2119 = vadd.f32 %v438, %v2118
      %v2120 = vpop.f32.mrb[0].mxu0
      %v2121 = vpop.f32.mrb[0].mxu0
      %v2122 = vadd.f32 %v438, %v2121
      %v2123 = vpop.f32.mrb[0].mxu0
      %2124 = vmatprep.mubr.bf16.mxu0 0
      %2125 = vmatmul.mubr.bf16.gmra.mrb[0].mxu0 %v1325
      %v2126 = vpop.f32.mrb[0].mxu0
      %v2127 = vadd.f32 %v438, %v2126
      %v2128 = vpop.f32.mrb[0].mxu0
      %v2129 = vpop.f32.mrb[0].mxu0
      %v2130 = vadd.f32 %v438, %v2129
      %v2131 = vpop.f32.mrb[0].mxu0
      %2132 = vmatprep.mubr.bf16.mxu0 0
      %2133 = vmatmul.mubr.bf16.gmra.mrb[0].mxu0 %v1328
      %v2134 = vpop.f32.mrb[0].mxu0
      %v2135 = vadd.f32 %v438, %v2134
      %v2136 = vpop.f32.mrb[0].mxu0
      %v2137 = vpop.f32.mrb[0].mxu0
      %v2138 = vadd.f32 %v438, %v2137
      %v2139 = vpop.f32.mrb[0].mxu0
      %2140 = vmatprep.mubr.bf16.mxu0 0
      %2141 = vmatmul.mubr.bf16.gmra.mrb[0].mxu0 %v1331
      %v2142 = vpop.f32.mrb[0].mxu0
      %v2143 = vadd.f32 %v438, %v2142
      %v2144 = vpop.f32.mrb[0].mxu0
      %v2145 = vpop.f32.mrb[0].mxu0
      %v2146 = vadd.f32 %v438, %v2145
      %v2147 = vpop.f32.mrb[0].mxu0
      %2148 = vmatprep.mubr.bf16.mxu0 0
      %2149 = vmatmul.mubr.bf16.gmra.mrb[0].mxu0 %v1334
      %v2150 = vpop.f32.mrb[0].mxu0
      %v2151 = vadd.f32 %v438, %v2150
      %v2152 = vpop.f32.mrb[0].mxu0
      %v2153 = vpop.f32.mrb[0].mxu0
      %v2154 = vadd.f32 %v438, %v2153
      %v2155 = vpop.f32.mrb[0].mxu0
      %2156 = vmatprep.mubr.bf16.mxu0 0
      %2157 = vmatmul.mubr.bf16.gmra.mrb[0].mxu0 %v1337
      %v2158 = vpop.f32.mrb[0].mxu0
      %v2159 = vadd.f32 %v438, %v2158
      %v2160 = vpop.f32.mrb[0].mxu0
      %v2161 = vpop.f32.mrb[0].mxu0
      %v2162 = vadd.f32 %v438, %v2161
      %v2163 = vpop.f32.mrb[0].mxu0
      %2164 = vmatprep.mubr.bf16.mxu0 0
      %2165 = vmatmul.mubr.bf16.gmra.mrb[0].mxu0 %v1340
      %v2166 = vpop.f32.mrb[0].mxu0
      %v2167 = vadd.f32 %v438, %v2166
      %v2168 = vpop.f32.mrb[0].mxu0
      %v2169 = vpop.f32.mrb[0].mxu0
      %v2170 = vadd.f32 %v438, %v2169
      %v2171 = vpop.f32.mrb[0].mxu0
      %2172 = vmatprep.mubr.bf16.mxu0 0
      %2173 = vmatmul.mubr.bf16.gmra.mrb[0].mxu0 %v1343
      %v2174 = vpop.f32.mrb[0].mxu0
      %v2175 = vadd.f32 %v438, %v2174
      %v2176 = vpop.f32.mrb[0].mxu0
      %v2177 = vpop.f32.mrb[0].mxu0
      %v2178 = vadd.f32 %v438, %v2177
      %v2179 = vpop.f32.mrb[0].mxu0
      %2180 = vmatprep.mubr.bf16.mxu0 0
      %2181 = vmatmul.mubr.bf16.gmra.mrb[0].mxu0 %v1346
      %v2182 = vpop.f32.mrb[0].mxu0
      %v2183 = vadd.f32 %v438, %v2182
      %v2184 = vpop.f32.mrb[0].mxu0
      %v2185 = vpop.f32.mrb[0].mxu0
      %v2186 = vadd.f32 %v438, %v2185
      %v2187 = vpop.f32.mrb[0].mxu0
      %2188 = vmatprep.mubr.bf16.mxu0 0
      %2189 = vmatmul.mubr.bf16.gmra.mrb[0].mxu0 %v1349
      %v2190 = vpop.f32.mrb[0].mxu0
      %v2191 = vadd.f32 %v438, %v2190
      %v2192 = vpop.f32.mrb[0].mxu0
      %v2193 = vpop.f32.mrb[0].mxu0
      %v2194 = vadd.f32 %v438, %v2193
      %v2195 = vpop.f32.mrb[0].mxu0
      %2196 = vmatprep.mubr.bf16.mxu0 0
      %2197 = vmatmul.mubr.bf16.gmra.mrb[0].mxu0 %v1352
      %v2198 = vpop.f32.mrb[0].mxu0
      %v2199 = vadd.f32 %v438, %v2198
      %v2200 = vpop.f32.mrb[0].mxu0
      %v2201 = vpop.f32.mrb[0].mxu0
      %v2202 = vadd.f32 %v438, %v2201
      %v2203 = vpop.f32.mrb[0].mxu0
      %2204 = vmatprep.mubr.bf16.mxu0 0
      %2205 = vmatmul.mubr.bf16.gmra.mrb[0].mxu0 %v1355
      %v2206 = vpop.f32.mrb[0].mxu0
      %v2207 = vadd.f32 %v438, %v2206
      %v2208 = vpop.f32.mrb[0].mxu0
      %v2209 = vpop.f32.mrb[0].mxu0
      %v2210 = vadd.f32 %v438, %v2209
      %v2211 = vpop.f32.mrb[0].mxu0
      %2212 = vmatprep.mubr.bf16.mxu0 0
      %2213 = vmatmul.mubr.bf16.gmra.mrb[0].mxu0 %v1358
      %v2214 = vpop.f32.mrb[0].mxu0
      %v2215 = vadd.f32 %v438, %v2214
      %v2216 = vpop.f32.mrb[0].mxu0
      %v2217 = vpop.f32.mrb[0].mxu0
      %v2218 = vadd.f32 %v438, %v2217
      %v2219 = vpop.f32.mrb[0].mxu0
      %2220 = vmatprep.mubr.bf16.mxu0 0
      %2221 = vmatmul.mubr.bf16.gmra.mrb[0].mxu0 %v1361
      %v2222 = vpop.f32.mrb[0].mxu0
      %v2223 = vadd.f32 %v438, %v2222
      %v2224 = vpop.f32.mrb[0].mxu0
      %v2225 = vpop.f32.mrb[0].mxu0
      %v2226 = vadd.f32 %v438, %v2225
      %v2227 = vpop.f32.mrb[0].mxu0
      %2228 = vmatprep.mubr.bf16.mxu0 0
      %2229 = vmatmul.mubr.bf16.gmra.mrb[0].mxu0 %v1364
      %v2230 = vpop.f32.mrb[0].mxu0
      %v2231 = vadd.f32 %v438, %v2230
      %v2232 = vpop.f32.mrb[0].mxu0
      %v2233 = vpop.f32.mrb[0].mxu0
      %v2234 = vadd.f32 %v438, %v2233
      %v2235 = vpop.f32.mrb[0].mxu0
      %2236 = vmatprep.mubr.bf16.mxu0 0
      %2237 = vmatmul.mubr.bf16.gmra.mrb[0].mxu0 %v1367
      %v2238 = vpop.f32.mrb[0].mxu0
      %v2239 = vadd.f32 %v438, %v2238
      %v2240 = vpop.f32.mrb[0].mxu0
      %v2241 = vpop.f32.mrb[0].mxu0
      %v2242 = vadd.f32 %v438, %v2241
      %v2243 = vpop.f32.mrb[0].mxu0
      %2244 = vmatprep.mubr.bf16.mxu0 0
      %2245 = vmatmul.mubr.bf16.gmra.mrb[0].mxu0 %v1370
      %v2246 = vpop.f32.mrb[0].mxu0
      %v2247 = vadd.f32 %v438, %v2246
      %v2248 = vpop.f32.mrb[0].mxu0
      %v2249 = vpop.f32.mrb[0].mxu0
      %v2250 = vadd.f32 %v438, %v2249
      %v2251 = vpop.f32.mrb[0].mxu0
      %2252 = vmatprep.mubr.bf16.mxu0 0
      %2253 = vmatmul.mubr.bf16.gmra.mrb[0].mxu0 %v1373
      %v2254 = vpop.f32.mrb[0].mxu0
      %v2255 = vadd.f32 %v438, %v2254
      %v2256 = vpop.f32.mrb[0].mxu0
      %v2257 = vpop.f32.mrb[0].mxu0
      %v2258 = vadd.f32 %v438, %v2257
      %v2259 = vpop.f32.mrb[0].mxu0
      %2260 = vmatprep.mubr.bf16.mxu0 0
      %2261 = vmatmul.mubr.bf16.gmra.mrb[0].mxu0 %v1376
      %v2262 = vpop.f32.mrb[0].mxu0
      %v2263 = vadd.f32 %v438, %v2262
      %v2264 = vpop.f32.mrb[0].mxu0
      %v2265 = vpop.f32.mrb[0].mxu0
      %v2266 = vadd.f32 %v438, %v2265
      %v2267 = vpop.f32.mrb[0].mxu0
      %2268 = vmatprep.mubr.bf16.mxu0 0
      %2269 = vmatmul.mubr.bf16.gmra.mrb[0].mxu0 %v1379
      %v2270 = vpop.f32.mrb[0].mxu0
      %v2271 = vadd.f32 %v438, %v2270
      %v2272 = vpop.f32.mrb[0].mxu0
      %v2273 = vpop.f32.mrb[0].mxu0
      %v2274 = vadd.f32 %v438, %v2273
      %v2275 = vpop.f32.mrb[0].mxu0
      %2276 = vmatprep.mubr.bf16.mxu0 0
      %2277 = vmatmul.mubr.bf16.gmra.mrb[0].mxu0 %v1382
      %v2278 = vpop.f32.mrb[0].mxu0
      %v2279 = vadd.f32 %v438, %v2278
      %v2280 = vpop.f32.mrb[0].mxu0
      %v2281 = vpop.f32.mrb[0].mxu0
      %v2282 = vadd.f32 %v438, %v2281
      %v2283 = vpop.f32.mrb[0].mxu0
      %2284 = vmatprep.mubr.bf16.mxu0 0
      %2285 = vmatmul.mubr.bf16.gmra.mrb[0].mxu0 %v1385
      %v2286 = vpop.f32.mrb[0].mxu0
      %v2287 = vadd.f32 %v438, %v2286
      %v2288 = vpop.f32.mrb[0].mxu0
      %v2289 = vpop.f32.mrb[0].mxu0
      %v2290 = vadd.f32 %v438, %v2289
      %v2291 = vpop.f32.mrb[0].mxu0
      %2292 = vmatprep.mubr.bf16.mxu0 0
      %2293 = vmatmul.mubr.bf16.gmra.mrb[0].mxu0 %v1388
      %v2294 = vpop.f32.mrb[0].mxu0
      %v2295 = vadd.f32 %v438, %v2294
      %v2296 = vpop.f32.mrb[0].mxu0
      %v2297 = vpop.f32.mrb[0].mxu0
      %v2298 = vadd.f32 %v438, %v2297
      %v2299 = vpop.f32.mrb[0].mxu0
      %2300 = vmatprep.mubr.bf16.mxu0 0
      %2301 = vmatmul.mubr.bf16.gmra.mrb[0].mxu0 %v1391
      %v2302 = vpop.f32.mrb[0].mxu0
      %v2303 = vadd.f32 %v438, %v2302
      %v2304 = vpop.f32.mrb[0].mxu0
      %v2305 = vpop.f32.mrb[0].mxu0
      %v2306 = vadd.f32 %v438, %v2305
      %v2307 = vpop.f32.mrb[0].mxu0
      %2308 = vmatprep.mubr.bf16.mxu0 0
      %2309 = vmatmul.mubr.bf16.gmra.mrb[0].mxu0 %v1394
      %v2310 = vpop.f32.mrb[0].mxu0
      %v2311 = vadd.f32 %v438, %v2310
      %v2312 = vpop.f32.mrb[0].mxu0
      %v2313 = vpop.f32.mrb[0].mxu0
      %v2314 = vadd.f32 %v438, %v2313
      %v2315 = vpop.f32.mrb[0].mxu0
      %2316 = vmatprep.mubr.bf16.mxu0 0
      %2317 = vmatmul.mubr.bf16.gmra.mrb[0].mxu0 %v1397
      %v2318 = vpop.f32.mrb[0].mxu0
      %v2319 = vadd.f32 %v438, %v2318
      %v2320 = vpop.f32.mrb[0].mxu0
      %v2321 = vpop.f32.mrb[0].mxu0
      %v2322 = vadd.f32 %v438, %v2321
      %v2323 = vpop.f32.mrb[0].mxu0
      %2324 = vmatprep.mubr.bf16.mxu0 0
      %2325 = vmatmul.mubr.bf16.gmra.mrb[0].mxu0 %v1400
      %v2326 = vpop.f32.mrb[0].mxu0
      %v2327 = vadd.f32 %v438, %v2326
      %v2328 = vpop.f32.mrb[0].mxu0
      %v2329 = vpop.f32.mrb[0].mxu0
      %v2330 = vadd.f32 %v438, %v2329
      %v2331 = vpop.f32.mrb[0].mxu0
      %2332 = vmatprep.mubr.bf16.mxu0 0
      %2333 = vmatmul.mubr.bf16.gmra.mrb[0].mxu0 %v1403
      %v2334 = vpop.f32.mrb[0].mxu0
      %v2335 = vadd.f32 %v438, %v2334
      %v2336 = vpop.f32.mrb[0].mxu0
      %v2337 = vpop.f32.mrb[0].mxu0
      %v2338 = vadd.f32 %v438, %v2337
      %v2339 = vpop.f32.mrb[0].mxu0
      %2340 = vmatprep.mubr.bf16.mxu0 0
      %2341 = vmatmul.mubr.bf16.gmra.mrb[0].mxu0 %v1406
      %v2342 = vpop.f32.mrb[0].mxu0
      %v2343 = vadd.f32 %v438, %v2342
      %v2344 = vpop.f32.mrb[0].mxu0
      %v2345 = vpop.f32.mrb[0].mxu0
      %v2346 = vadd.f32 %v438, %v2345
      %v2347 = vpop.f32.mrb[0].mxu0
      %2348 = vmatprep.mubr.bf16.mxu0 0
      %2349 = vmatmul.mubr.bf16.gmra.mrb[0].mxu0 %v1409
      %v2350 = vpop.f32.mrb[0].mxu0
      %v2351 = vadd.f32 %v438, %v2350
      %v2352 = vpop.f32.mrb[0].mxu0
      %v2353 = vpop.f32.mrb[0].mxu0
      %v2354 = vadd.f32 %v438, %v2353
      %v2355 = vpop.f32.mrb[0].mxu0
      %2356 = vmatprep.mubr.bf16.mxu0 0
      %2357 = vmatmul.mubr.bf16.gmra.mrb[0].mxu0 %v1412
      %v2358 = vpop.f32.mrb[0].mxu0
      %v2359 = vadd.f32 %v438, %v2358
      %v2360 = vpop.f32.mrb[0].mxu0
      %v2361 = vpop.f32.mrb[0].mxu0
      %v2362 = vadd.f32 %v438, %v2361
      %v2363 = vpop.f32.mrb[0].mxu0
      %2364 = vmatprep.mubr.bf16.mxu0 0
      %2365 = vmatmul.mubr.bf16.gmra.mrb[0].mxu0 %v1415
      %v2366 = vpop.f32.mrb[0].mxu0
      %v2367 = vadd.f32 %v438, %v2366
      %v2368 = vpop.f32.mrb[0].mxu0
      %v2369 = vpop.f32.mrb[0].mxu0
      %v2370 = vadd.f32 %v438, %v2369
      %v2371 = vpop.f32.mrb[0].mxu0
      %2372 = vmatprep.mubr.bf16.mxu0 0
      %2373 = vmatmul.mubr.bf16.gmra.mrb[0].mxu0 %v1418
      %v2374 = vpop.f32.mrb[0].mxu0
      %v2375 = vadd.f32 %v438, %v2374
      %v2376 = vpop.f32.mrb[0].mxu0
      %v2377 = vpop.f32.mrb[0].mxu0
      %v2378 = vadd.f32 %v438, %v2377
      %v2379 = vpop.f32.mrb[0].mxu0
      %2380 = vmatprep.mubr.bf16.mxu0 0
      %2381 = vmatmul.mubr.bf16.gmra.mrb[0].mxu0 %v1421
      %v2382 = vpop.f32.mrb[0].mxu0
      %v2383 = vadd.f32 %v438, %v2382
      %v2384 = vpop.f32.mrb[0].mxu0
      %v2385 = vpop.f32.mrb[0].mxu0
      %v2386 = vadd.f32 %v438, %v2385
      %v2387 = vpop.f32.mrb[0].mxu0
      %2388 = vmatprep.mubr.bf16.mxu0 0
      %2389 = vmatmul.mubr.bf16.gmra.mrb[0].mxu0 %v1424
      %v2390 = vpop.f32.mrb[0].mxu0
      %v2391 = vadd.f32 %v438, %v2390
      %v2392 = vpop.f32.mrb[0].mxu0
      %v2393 = vpop.f32.mrb[0].mxu0
      %v2394 = vadd.f32 %v438, %v2393
      %v2395 = vpop.f32.mrb[0].mxu0
      %2396 = vmatprep.mubr.bf16.mxu0 0
      %2397 = vmatmul.mubr.bf16.gmra.mrb[0].mxu0 %v1427
      %v2398 = vpop.f32.mrb[0].mxu0
      %v2399 = vadd.f32 %v438, %v2398
      %v2400 = vpop.f32.mrb[0].mxu0
      %v2401 = vpop.f32.mrb[0].mxu0
      %v2402 = vadd.f32 %v438, %v2401
      %v2403 = vpop.f32.mrb[0].mxu0
      %2404 = vmatprep.mubr.bf16.mxu0 0
      %2405 = vmatmul.mubr.bf16.gmra.mrb[0].mxu0 %v1430
      %v2406 = vpop.f32.mrb[0].mxu0
      %v2407 = vadd.f32 %v438, %v2406
      %v2408 = vpop.f32.mrb[0].mxu0
      %v2409 = vpop.f32.mrb[0].mxu0
      %v2410 = vadd.f32 %v438, %v2409
      %v2411 = vpop.f32.mrb[0].mxu0
      %2412 = vmatprep.mubr.bf16.mxu0 0
      %2413 = vmatmul.mubr.bf16.gmra.mrb[0].mxu0 %v1433
      %v2414 = vpop.f32.mrb[0].mxu0
      %v2415 = vadd.f32 %v438, %v2414
      %v2416 = vpop.f32.mrb[0].mxu0
      %v2417 = vpop.f32.mrb[0].mxu0
      %v2418 = vadd.f32 %v438, %v2417
      %v2419 = vpop.f32.mrb[0].mxu0
      %2420 = vmatprep.mubr.bf16.mxu0 0
      %2421 = vmatmul.mubr.bf16.gmra.mrb[0].mxu0 %v1436
      %v2422 = vpop.f32.mrb[0].mxu0
      %v2423 = vadd.f32 %v438, %v2422
      %v2424 = vpop.f32.mrb[0].mxu0
      %v2425 = vpop.f32.mrb[0].mxu0
      %v2426 = vadd.f32 %v438, %v2425
      %v2427 = vpop.f32.mrb[0].mxu0
      %2428 = vmatprep.mubr.bf16.mxu0 0
      %2429 = vmatmul.mubr.bf16.gmra.mrb[0].mxu0 %v1439
      %v2430 = vpop.f32.mrb[0].mxu0
      %v2431 = vadd.f32 %v438, %v2430
      %v2432 = vpop.f32.mrb[0].mxu0
      %v2433 = vpop.f32.mrb[0].mxu0
      %v2434 = vadd.f32 %v438, %v2433
      %v2435 = vpop.f32.mrb[0].mxu0
      %2436 = vmatprep.mubr.bf16.mxu0 0
      %2437 = vmatmul.mubr.bf16.gmra.mrb[0].mxu0 %v1442
      %v2438 = vpop.f32.mrb[0].mxu0
      %v2439 = vadd.f32 %v438, %v2438
      %v2440 = vpop.f32.mrb[0].mxu0
      %v2441 = vpop.f32.mrb[0].mxu0
      %v2442 = vadd.f32 %v438, %v2441
      %v2443 = vpop.f32.mrb[0].mxu0
      %2444 = vmatprep.mubr.bf16.mxu0 0
      %2445 = vmatmul.mubr.bf16.gmra.mrb[0].mxu0 %v1445
      %v2446 = vpop.f32.mrb[0].mxu0
      %v2447 = vadd.f32 %v438, %v2446
      %v2448 = vpop.f32.mrb[0].mxu0
      %v2449 = vpop.f32.mrb[0].mxu0
      %v2450 = vadd.f32 %v438, %v2449
      %v2451 = vpop.f32.mrb[0].mxu0
      %2452 = vmatprep.mubr.bf16.mxu0 0
      %2453 = vmatmul.mubr.bf16.gmra.mrb[0].mxu0 %v1448
      %v2454 = vpop.f32.mrb[0].mxu0
      %v2455 = vadd.f32 %v438, %v2454
      %v2456 = vpop.f32.mrb[0].mxu0
      %v2457 = vpop.f32.mrb[0].mxu0
      %v2458 = vadd.f32 %v438, %v2457
      %v2459 = vpop.f32.mrb[0].mxu0
      %2460 = vmatprep.mubr.bf16.mxu0 0
      %2461 = vmatmul.mubr.bf16.gmra.mrb[0].mxu0 %v1451
      %v2462 = vpop.f32.mrb[0].mxu0
      %v2463 = vadd.f32 %v438, %v2462
      %v2464 = vpop.f32.mrb[0].mxu0
      %v2465 = vpop.f32.mrb[0].mxu0
      %v2466 = vadd.f32 %v438, %v2465
      %v2467 = vpop.f32.mrb[0].mxu0
      %2468 = vmatprep.mubr.bf16.mxu0 0
      %2469 = vmatmul.mubr.bf16.gmra.mrb[0].mxu0 %v1454
      %v2470 = vpop.f32.mrb[0].mxu0
      %v2471 = vadd.f32 %v438, %v2470
      %v2472 = vpop.f32.mrb[0].mxu0
      %v2473 = vpop.f32.mrb[0].mxu0
      %v2474 = vadd.f32 %v438, %v2473
      %v2475 = vpop.f32.mrb[0].mxu0
      %2476 = vmatprep.mubr.bf16.mxu0 0
      %2477 = vmatmul.mubr.bf16.gmra.mrb[0].mxu0 %v1457
      %v2478 = vpop.f32.mrb[0].mxu0
      %v2479 = vadd.f32 %v438, %v2478
      %v2480 = vpop.f32.mrb[0].mxu0
      %v2481 = vpop.f32.mrb[0].mxu0
      %v2482 = vadd.f32 %v438, %v2481
      %v2483 = vpop.f32.mrb[0].mxu0
      %2484 = vmatprep.mubr.bf16.mxu0 0
      %2485 = vmatmul.mubr.bf16.gmra.mrb[0].mxu0 %v1460
      %v2486 = vpop.f32.mrb[0].mxu0
      %v2487 = vadd.f32 %v438, %v2486
      %v2488 = vpop.f32.mrb[0].mxu0
      %v2489 = vpop.f32.mrb[0].mxu0
      %v2490 = vadd.f32 %v438, %v2489
      %v2491 = vpop.f32.mrb[0].mxu0
      %2492 = vmatprep.mubr.bf16.mxu0 0
      %2493 = vmatmul.mubr.bf16.gmra.mrb[0].mxu0 %v1463
      %v2494 = vpop.f32.mrb[0].mxu0
      %v2495 = vadd.f32 %v438, %v2494
      %v2496 = vpop.f32.mrb[0].mxu0
      %v2497 = vpop.f32.mrb[0].mxu0
      %v2498 = vadd.f32 %v438, %v2497
      %v2499 = vpop.f32.mrb[0].mxu0
      %2500 = vmatprep.mubr.bf16.mxu0 0
      %2501 = vmatmul.mubr.bf16.gmra.mrb[0].mxu0 %v1466
      %v2502 = vpop.f32.mrb[0].mxu0
      %v2503 = vadd.f32 %v438, %v2502
      %v2504 = vpop.f32.mrb[0].mxu0
      %v2505 = vpop.f32.mrb[0].mxu0
      %v2506 = vadd.f32 %v438, %v2505
      %v2507 = vpop.f32.mrb[0].mxu0
      %2508 = vmatprep.mubr.bf16.mxu0 0
      %2509 = vmatmul.mubr.bf16.gmra.mrb[0].mxu0 %v1469
      %v2510 = vpop.f32.mrb[0].mxu0
      %v2511 = vadd.f32 %v438, %v2510
      %v2512 = vpop.f32.mrb[0].mxu0
      %v2513 = vpop.f32.mrb[0].mxu0
      %v2514 = vadd.f32 %v438, %v2513
      %v2515 = vpop.f32.mrb[0].mxu0
      %2516 = vmatprep.mubr.bf16.mxu0 0
      %2517 = vmatmul.mubr.bf16.gmra.mrb[0].mxu0 %v1472
      %v2518 = vpop.f32.mrb[0].mxu0
      %v2519 = vadd.f32 %v438, %v2518
      %v2520 = vpop.f32.mrb[0].mxu0
      %v2521 = vpop.f32.mrb[0].mxu0
      %v2522 = vadd.f32 %v438, %v2521
      %v2523 = vpop.f32.mrb[0].mxu0
      %2524 = vmatprep.mubr.bf16.mxu0 0
      %2525 = vmatmul.mubr.bf16.gmra.mrb[0].mxu0 %v1475
      %v2526 = vpop.f32.mrb[0].mxu0
      %v2527 = vadd.f32 %v438, %v2526
      %v2528 = vpop.f32.mrb[0].mxu0
      %v2529 = vpop.f32.mrb[0].mxu0
      %v2530 = vadd.f32 %v438, %v2529
      %v2531 = vpop.f32.mrb[0].mxu0
      %2532 = vmatprep.mubr.bf16.mxu0 0
      %2533 = vmatmul.mubr.bf16.gmra.mrb[0].mxu0 %v1478
      %v2534 = vpop.f32.mrb[0].mxu0
      %v2535 = vadd.f32 %v438, %v2534
      %v2536 = vpop.f32.mrb[0].mxu0
      %v2537 = vpop.f32.mrb[0].mxu0
      %v2538 = vadd.f32 %v438, %v2537
      %v2539 = vpop.f32.mrb[0].mxu0
      %2540 = vdwg.mxu0
      %v2541 = vmax.f32 %v1519, 0.0
      %v2542 = vmax.f32 %v1522, 0.0
      %v2543 = vmax.f32 %v1527, 0.0
      %v2544 = vmax.f32 %v1530, 0.0
      %v2545 = vmax.f32 %v1535, 0.0
      %v2546 = vmax.f32 %v1538, 0.0
      %v2547 = vmax.f32 %v1543, 0.0
      %v2548 = vmax.f32 %v1546, 0.0
      %v2549 = vmax.f32 %v1551, 0.0
      %v2550 = vmax.f32 %v1554, 0.0
      %v2551 = vmax.f32 %v1559, 0.0
      %v2552 = vmax.f32 %v1562, 0.0
      %v2553 = vmax.f32 %v1567, 0.0
      %v2554 = vmax.f32 %v1570, 0.0
      %v2555 = vmax.f32 %v1575, 0.0
      %v2556 = vmax.f32 %v1578, 0.0
      %v2557 = vmax.f32 %v1583, 0.0
      %v2558 = vmax.f32 %v1586, 0.0
      %v2559 = vmax.f32 %v1591, 0.0
      %v2560 = vmax.f32 %v1594, 0.0
      %v2561 = vmax.f32 %v1599, 0.0
      %v2562 = vmax.f32 %v1602, 0.0
      %v2563 = vmax.f32 %v1607, 0.0
      %v2564 = vmax.f32 %v1610, 0.0
      %v2565 = vmax.f32 %v1615, 0.0
      %v2566 = vmax.f32 %v1618, 0.0
      %v2567 = vmax.f32 %v1623, 0.0
      %v2568 = vmax.f32 %v1626, 0.0
      %v2569 = vmax.f32 %v1631, 0.0
      %v2570 = vmax.f32 %v1634, 0.0
      %v2571 = vmax.f32 %v1639, 0.0
      %v2572 = vmax.f32 %v1642, 0.0
      %v2573 = vmax.f32 %v1647, 0.0
      %v2574 = vmax.f32 %v1650, 0.0
      %v2575 = vmax.f32 %v1655, 0.0
      %v2576 = vmax.f32 %v1658, 0.0
      %v2577 = vmax.f32 %v1663, 0.0
      %v2578 = vmax.f32 %v1666, 0.0
      %v2579 = vmax.f32 %v1671, 0.0
      %v2580 = vmax.f32 %v1674, 0.0
      %v2581 = vmax.f32 %v1679, 0.0
      %v2582 = vmax.f32 %v1682, 0.0
      %v2583 = vmax.f32 %v1687, 0.0
      %v2584 = vmax.f32 %v1690, 0.0
      %v2585 = vmax.f32 %v1695, 0.0
      %v2586 = vmax.f32 %v1698, 0.0
      %v2587 = vmax.f32 %v1703, 0.0
      %v2588 = vmax.f32 %v1706, 0.0
      %v2589 = vmax.f32 %v1711, 0.0
      %v2590 = vmax.f32 %v1714, 0.0
      %v2591 = vmax.f32 %v1719, 0.0
      %v2592 = vmax.f32 %v1722, 0.0
      %v2593 = vmax.f32 %v1727, 0.0
      %v2594 = vmax.f32 %v1730, 0.0
      %v2595 = vmax.f32 %v1735, 0.0
      %v2596 = vmax.f32 %v1738, 0.0
      %v2597 = vmax.f32 %v1743, 0.0
      %v2598 = vmax.f32 %v1746, 0.0
      %v2599 = vmax.f32 %v1751, 0.0
      %v2600 = vmax.f32 %v1754, 0.0
      %v2601 = vmax.f32 %v1759, 0.0
      %v2602 = vmax.f32 %v1762, 0.0
      %v2603 = vmax.f32 %v1767, 0.0
      %v2604 = vmax.f32 %v1770, 0.0
      %v2605 = vmax.f32 %v1775, 0.0
      %v2606 = vmax.f32 %v1778, 0.0
      %v2607 = vmax.f32 %v1783, 0.0
      %v2608 = vmax.f32 %v1786, 0.0
      %v2609 = vmax.f32 %v1791, 0.0
      %v2610 = vmax.f32 %v1794, 0.0
      %v2611 = vmax.f32 %v1799, 0.0
      %v2612 = vmax.f32 %v1802, 0.0
      %v2613 = vmax.f32 %v1807, 0.0
      %v2614 = vmax.f32 %v1810, 0.0
      %v2615 = vmax.f32 %v1815, 0.0
      %v2616 = vmax.f32 %v1818, 0.0
      %v2617 = vmax.f32 %v1823, 0.0
      %v2618 = vmax.f32 %v1826, 0.0
      %v2619 = vmax.f32 %v1831, 0.0
      %v2620 = vmax.f32 %v1834, 0.0
      %v2621 = vmax.f32 %v1839, 0.0
      %v2622 = vmax.f32 %v1842, 0.0
      %v2623 = vmax.f32 %v1847, 0.0
      %v2624 = vmax.f32 %v1850, 0.0
      %v2625 = vmax.f32 %v1855, 0.0
      %v2626 = vmax.f32 %v1858, 0.0
      %v2627 = vmax.f32 %v1863, 0.0
      %v2628 = vmax.f32 %v1866, 0.0
      %v2629 = vmax.f32 %v1871, 0.0
      %v2630 = vmax.f32 %v1874, 0.0
      %v2631 = vmax.f32 %v1879, 0.0
      %v2632 = vmax.f32 %v1882, 0.0
      %v2633 = vmax.f32 %v1887, 0.0
      %v2634 = vmax.f32 %v1890, 0.0
      %v2635 = vmax.f32 %v1895, 0.0
      %v2636 = vmax.f32 %v1898, 0.0
      %v2637 = vmax.f32 %v1903, 0.0
      %v2638 = vmax.f32 %v1906, 0.0
      %v2639 = vmax.f32 %v1911, 0.0
      %v2640 = vmax.f32 %v1914, 0.0
      %v2641 = vmax.f32 %v1919, 0.0
      %v2642 = vmax.f32 %v1922, 0.0
      %v2643 = vmax.f32 %v1927, 0.0
      %v2644 = vmax.f32 %v1930, 0.0
      %v2645 = vmax.f32 %v1935, 0.0
      %v2646 = vmax.f32 %v1938, 0.0
      %v2647 = vmax.f32 %v1943, 0.0
      %v2648 = vmax.f32 %v1946, 0.0
      %v2649 = vmax.f32 %v1951, 0.0
      %v2650 = vmax.f32 %v1954, 0.0
      %v2651 = vmax.f32 %v1959, 0.0
      %v2652 = vmax.f32 %v1962, 0.0
      %v2653 = vmax.f32 %v1967, 0.0
      %v2654 = vmax.f32 %v1970, 0.0
      %v2655 = vmax.f32 %v1975, 0.0
      %v2656 = vmax.f32 %v1978, 0.0
      %v2657 = vmax.f32 %v1983, 0.0
      %v2658 = vmax.f32 %v1986, 0.0
      %v2659 = vmax.f32 %v1991, 0.0
      %v2660 = vmax.f32 %v1994, 0.0
      %v2661 = vmax.f32 %v1999, 0.0
      %v2662 = vmax.f32 %v2002, 0.0
      %v2663 = vmax.f32 %v2007, 0.0
      %v2664 = vmax.f32 %v2010, 0.0
      %v2665 = vmax.f32 %v2015, 0.0
      %v2666 = vmax.f32 %v2018, 0.0
      %v2667 = vmax.f32 %v2023, 0.0
      %v2668 = vmax.f32 %v2026, 0.0
      %v2669 = vmax.f32 %v2031, 0.0
      %v2670 = vmax.f32 %v2034, 0.0
      %v2671 = vmax.f32 %v2039, 0.0
      %v2672 = vmax.f32 %v2042, 0.0
      %v2673 = vmax.f32 %v2047, 0.0
      %v2674 = vmax.f32 %v2050, 0.0
      %v2675 = vmax.f32 %v2055, 0.0
      %v2676 = vmax.f32 %v2058, 0.0
      %v2677 = vmax.f32 %v2063, 0.0
      %v2678 = vmax.f32 %v2066, 0.0
      %v2679 = vmax.f32 %v2071, 0.0
      %v2680 = vmax.f32 %v2074, 0.0
      %v2681 = vmax.f32 %v2079, 0.0
      %v2682 = vmax.f32 %v2082, 0.0
      %v2683 = vmax.f32 %v2087, 0.0
      %v2684 = vmax.f32 %v2090, 0.0
      %v2685 = vmax.f32 %v2095, 0.0
      %v2686 = vmax.f32 %v2098, 0.0
      %v2687 = vmax.f32 %v2103, 0.0
      %v2688 = vmax.f32 %v2106, 0.0
      %v2689 = vmax.f32 %v2111, 0.0
      %v2690 = vmax.f32 %v2114, 0.0
      %v2691 = vmax.f32 %v2119, 0.0
      %v2692 = vmax.f32 %v2122, 0.0
      %v2693 = vmax.f32 %v2127, 0.0
      %v2694 = vmax.f32 %v2130, 0.0
      %v2695 = vmax.f32 %v2135, 0.0
      %v2696 = vmax.f32 %v2138, 0.0
      %v2697 = vmax.f32 %v2143, 0.0
      %v2698 = vmax.f32 %v2146, 0.0
      %v2699 = vmax.f32 %v2151, 0.0
      %v2700 = vmax.f32 %v2154, 0.0
      %v2701 = vmax.f32 %v2159, 0.0
      %v2702 = vmax.f32 %v2162, 0.0
      %v2703 = vmax.f32 %v2167, 0.0
      %v2704 = vmax.f32 %v2170, 0.0
      %v2705 = vmax.f32 %v2175, 0.0
      %v2706 = vmax.f32 %v2178, 0.0
      %v2707 = vmax.f32 %v2183, 0.0
      %v2708 = vmax.f32 %v2186, 0.0
      %v2709 = vmax.f32 %v2191, 0.0
      %v2710 = vmax.f32 %v2194, 0.0
      %v2711 = vmax.f32 %v2199, 0.0
      %v2712 = vmax.f32 %v2202, 0.0
      %v2713 = vmax.f32 %v2207, 0.0
      %v2714 = vmax.f32 %v2210, 0.0
      %v2715 = vmax.f32 %v2215, 0.0
      %v2716 = vmax.f32 %v2218, 0.0
      %v2717 = vmax.f32 %v2223, 0.0
      %v2718 = vmax.f32 %v2226, 0.0
      %v2719 = vmax.f32 %v2231, 0.0
      %v2720 = vmax.f32 %v2234, 0.0
      %v2721 = vmax.f32 %v2239, 0.0
      %v2722 = vmax.f32 %v2242, 0.0
      %v2723 = vmax.f32 %v2247, 0.0
      %v2724 = vmax.f32 %v2250, 0.0
      %v2725 = vmax.f32 %v2255, 0.0
      %v2726 = vmax.f32 %v2258, 0.0
      %v2727 = vmax.f32 %v2263, 0.0
      %v2728 = vmax.f32 %v2266, 0.0
      %v2729 = vmax.f32 %v2271, 0.0
      %v2730 = vmax.f32 %v2274, 0.0
      %v2731 = vmax.f32 %v2279, 0.0
      %v2732 = vmax.f32 %v2282, 0.0
      %v2733 = vmax.f32 %v2287, 0.0
      %v2734 = vmax.f32 %v2290, 0.0
      %v2735 = vmax.f32 %v2295, 0.0
      %v2736 = vmax.f32 %v2298, 0.0
      %v2737 = vmax.f32 %v2303, 0.0
      %v2738 = vmax.f32 %v2306, 0.0
      %v2739 = vmax.f32 %v2311, 0.0
      %v2740 = vmax.f32 %v2314, 0.0
      %v2741 = vmax.f32 %v2319, 0.0
      %v2742 = vmax.f32 %v2322, 0.0
      %v2743 = vmax.f32 %v2327, 0.0
      %v2744 = vmax.f32 %v2330, 0.0
      %v2745 = vmax.f32 %v2335, 0.0
      %v2746 = vmax.f32 %v2338, 0.0
      %v2747 = vmax.f32 %v2343, 0.0
      %v2748 = vmax.f32 %v2346, 0.0
      %v2749 = vmax.f32 %v2351, 0.0
      %v2750 = vmax.f32 %v2354, 0.0
      %v2751 = vmax.f32 %v2359, 0.0
      %v2752 = vmax.f32 %v2362, 0.0
      %v2753 = vmax.f32 %v2367, 0.0
      %v2754 = vmax.f32 %v2370, 0.0
      %v2755 = vmax.f32 %v2375, 0.0
      %v2756 = vmax.f32 %v2378, 0.0
      %v2757 = vmax.f32 %v2383, 0.0
      %v2758 = vmax.f32 %v2386, 0.0
      %v2759 = vmax.f32 %v2391, 0.0
      %v2760 = vmax.f32 %v2394, 0.0
      %v2761 = vmax.f32 %v2399, 0.0
      %v2762 = vmax.f32 %v2402, 0.0
      %v2763 = vmax.f32 %v2407, 0.0
      %v2764 = vmax.f32 %v2410, 0.0
      %v2765 = vmax.f32 %v2415, 0.0
      %v2766 = vmax.f32 %v2418, 0.0
      %v2767 = vmax.f32 %v2423, 0.0
      %v2768 = vmax.f32 %v2426, 0.0
      %v2769 = vmax.f32 %v2431, 0.0
      %v2770 = vmax.f32 %v2434, 0.0
      %v2771 = vmax.f32 %v2439, 0.0
      %v2772 = vmax.f32 %v2442, 0.0
      %v2773 = vmax.f32 %v2447, 0.0
      %v2774 = vmax.f32 %v2450, 0.0
      %v2775 = vmax.f32 %v2455, 0.0
      %v2776 = vmax.f32 %v2458, 0.0
      %v2777 = vmax.f32 %v2463, 0.0
      %v2778 = vmax.f32 %v2466, 0.0
      %v2779 = vmax.f32 %v2471, 0.0
      %v2780 = vmax.f32 %v2474, 0.0
      %v2781 = vmax.f32 %v2479, 0.0
      %v2782 = vmax.f32 %v2482, 0.0
      %v2783 = vmax.f32 %v2487, 0.0
      %v2784 = vmax.f32 %v2490, 0.0
      %v2785 = vmax.f32 %v2495, 0.0
      %v2786 = vmax.f32 %v2498, 0.0
      %v2787 = vmax.f32 %v2503, 0.0
      %v2788 = vmax.f32 %v2506, 0.0
      %v2789 = vmax.f32 %v2511, 0.0
      %v2790 = vmax.f32 %v2514, 0.0
      %v2791 = vmax.f32 %v2519, 0.0
      %v2792 = vmax.f32 %v2522, 0.0
      %v2793 = vmax.f32 %v2527, 0.0
      %v2794 = vmax.f32 %v2530, 0.0
      %v2795 = vmax.f32 %v2535, 0.0
      %v2796 = vmax.f32 %v2538, 0.0
      %vm2797 = vcmask 261120
      %v2798 = vsel %vm2797, %v2541, 0.0
      %v2799 = vsel %vm2797, %v2542, 0.0
      %v2800 = vadd.f32 %v2798, %v2799
      %v2801 = vsel %vm2797, %v2543, 0.0
      %v2802 = vadd.f32 %v2800, %v2801
      %v2803 = vsel %vm2797, %v2544, 0.0
      %v2804 = vadd.f32 %v2802, %v2803
      %v2805 = vsel %vm2797, %v2545, 0.0
      %v2806 = vadd.f32 %v2804, %v2805
      %v2807 = vsel %vm2797, %v2546, 0.0
      %v2808 = vadd.f32 %v2806, %v2807
      %v2809 = vsel %vm2797, %v2547, 0.0
      %v2810 = vadd.f32 %v2808, %v2809
      %v2811 = vsel %vm2797, %v2548, 0.0
      %v2812 = vadd.f32 %v2810, %v2811
      %v2813 = vsel %vm2797, %v2549, 0.0
      %v2814 = vadd.f32 %v2812, %v2813
      %v2815 = vsel %vm2797, %v2550, 0.0
      %v2816 = vadd.f32 %v2814, %v2815
      %v2817 = vsel %vm2797, %v2551, 0.0
      %v2818 = vadd.f32 %v2816, %v2817
      %v2819 = vsel %vm2797, %v2552, 0.0
      %v2820 = vadd.f32 %v2818, %v2819
      %v2821 = vsel %vm2797, %v2553, 0.0
      %v2822 = vadd.f32 %v2820, %v2821
      %v2823 = vsel %vm2797, %v2554, 0.0
      %v2824 = vadd.f32 %v2822, %v2823
      %v2825 = vsel %vm2797, %v2555, 0.0
      %v2826 = vadd.f32 %v2824, %v2825
      %v2827 = vsel %vm2797, %v2556, 0.0
      %v2828 = vadd.f32 %v2826, %v2827
      %v2829 = vsel %vm2797, %v2557, 0.0
      %v2830 = vadd.f32 %v2828, %v2829
      %v2831 = vsel %vm2797, %v2558, 0.0
      %v2832 = vadd.f32 %v2830, %v2831
      %v2833 = vsel %vm2797, %v2559, 0.0
      %v2834 = vadd.f32 %v2832, %v2833
      %v2835 = vsel %vm2797, %v2560, 0.0
      %v2836 = vadd.f32 %v2834, %v2835
      %v2837 = vsel %vm2797, %v2561, 0.0
      %v2838 = vadd.f32 %v2836, %v2837
      %v2839 = vsel %vm2797, %v2562, 0.0
      %v2840 = vadd.f32 %v2838, %v2839
      %v2841 = vsel %vm2797, %v2563, 0.0
      %v2842 = vadd.f32 %v2840, %v2841
      %v2843 = vsel %vm2797, %v2564, 0.0
      %v2844 = vadd.f32 %v2842, %v2843
      %v2845 = vsel %vm2797, %v2565, 0.0
      %v2846 = vadd.f32 %v2844, %v2845
      %v2847 = vsel %vm2797, %v2566, 0.0
      %v2848 = vadd.f32 %v2846, %v2847
      %v2849 = vsel %vm2797, %v2567, 0.0
      %v2850 = vadd.f32 %v2848, %v2849
      %v2851 = vsel %vm2797, %v2568, 0.0
      %v2852 = vadd.f32 %v2850, %v2851
      %v2853 = vsel %vm2797, %v2569, 0.0
      %v2854 = vadd.f32 %v2852, %v2853
      %v2855 = vsel %vm2797, %v2570, 0.0
      %v2856 = vadd.f32 %v2854, %v2855
      %v2857 = vsel %vm2797, %v2571, 0.0
      %v2858 = vadd.f32 %v2856, %v2857
      %v2859 = vsel %vm2797, %v2572, 0.0
      %v2860 = vadd.f32 %v2858, %v2859
      %v2861 = vrot.slane %v2860, 4
      %v2862 = vadd.f32 %v2860, %v2861
      %v2863 = vrot.slane %v2862, 2
      %v2864 = vadd.f32 %v2862, %v2863
      %v2865 = vrot.slane %v2864, 1
      %v2866 = vadd.f32 %v2864, %v2865
      %v2867 = vsel %vm2797, %v2573, 0.0
      %v2868 = vsel %vm2797, %v2574, 0.0
      %v2869 = vadd.f32 %v2867, %v2868
      %v2870 = vsel %vm2797, %v2575, 0.0
      %v2871 = vadd.f32 %v2869, %v2870
      %v2872 = vsel %vm2797, %v2576, 0.0
      %v2873 = vadd.f32 %v2871, %v2872
      %v2874 = vsel %vm2797, %v2577, 0.0
      %v2875 = vadd.f32 %v2873, %v2874
      %v2876 = vsel %vm2797, %v2578, 0.0
      %v2877 = vadd.f32 %v2875, %v2876
      %v2878 = vsel %vm2797, %v2579, 0.0
      %v2879 = vadd.f32 %v2877, %v2878
      %v2880 = vsel %vm2797, %v2580, 0.0
      %v2881 = vadd.f32 %v2879, %v2880
      %v2882 = vsel %vm2797, %v2581, 0.0
      %v2883 = vadd.f32 %v2881, %v2882
      %v2884 = vsel %vm2797, %v2582, 0.0
      %v2885 = vadd.f32 %v2883, %v2884
      %v2886 = vsel %vm2797, %v2583, 0.0
      %v2887 = vadd.f32 %v2885, %v2886
      %v2888 = vsel %vm2797, %v2584, 0.0
      %v2889 = vadd.f32 %v2887, %v2888
      %v2890 = vsel %vm2797, %v2585, 0.0
      %v2891 = vadd.f32 %v2889, %v2890
      %v2892 = vsel %vm2797, %v2586, 0.0
      %v2893 = vadd.f32 %v2891, %v2892
      %v2894 = vsel %vm2797, %v2587, 0.0
      %v2895 = vadd.f32 %v2893, %v2894
      %v2896 = vsel %vm2797, %v2588, 0.0
      %v2897 = vadd.f32 %v2895, %v2896
      %v2898 = vsel %vm2797, %v2589, 0.0
      %v2899 = vadd.f32 %v2897, %v2898
      %v2900 = vsel %vm2797, %v2590, 0.0
      %v2901 = vadd.f32 %v2899, %v2900
      %v2902 = vsel %vm2797, %v2591, 0.0
      %v2903 = vadd.f32 %v2901, %v2902
      %v2904 = vsel %vm2797, %v2592, 0.0
      %v2905 = vadd.f32 %v2903, %v2904
      %v2906 = vsel %vm2797, %v2593, 0.0
      %v2907 = vadd.f32 %v2905, %v2906
      %v2908 = vsel %vm2797, %v2594, 0.0
      %v2909 = vadd.f32 %v2907, %v2908
      %v2910 = vsel %vm2797, %v2595, 0.0
      %v2911 = vadd.f32 %v2909, %v2910
      %v2912 = vsel %vm2797, %v2596, 0.0
      %v2913 = vadd.f32 %v2911, %v2912
      %v2914 = vsel %vm2797, %v2597, 0.0
      %v2915 = vadd.f32 %v2913, %v2914
      %v2916 = vsel %vm2797, %v2598, 0.0
      %v2917 = vadd.f32 %v2915, %v2916
      %v2918 = vsel %vm2797, %v2599, 0.0
      %v2919 = vadd.f32 %v2917, %v2918
      %v2920 = vsel %vm2797, %v2600, 0.0
      %v2921 = vadd.f32 %v2919, %v2920
      %v2922 = vsel %vm2797, %v2601, 0.0
      %v2923 = vadd.f32 %v2921, %v2922
      %v2924 = vsel %vm2797, %v2602, 0.0
      %v2925 = vadd.f32 %v2923, %v2924
      %v2926 = vsel %vm2797, %v2603, 0.0
      %v2927 = vadd.f32 %v2925, %v2926
      %v2928 = vsel %vm2797, %v2604, 0.0
      %v2929 = vadd.f32 %v2927, %v2928
      %v2930 = vrot.slane %v2929, 4
      %v2931 = vadd.f32 %v2929, %v2930
      %v2932 = vrot.slane %v2931, 2
      %v2933 = vadd.f32 %v2931, %v2932
      %v2934 = vrot.slane %v2933, 1
      %v2935 = vadd.f32 %v2933, %v2934
      %v2936 = vsel %vm2797, %v2605, 0.0
      %v2937 = vsel %vm2797, %v2606, 0.0
      %v2938 = vadd.f32 %v2936, %v2937
      %v2939 = vsel %vm2797, %v2607, 0.0
      %v2940 = vadd.f32 %v2938, %v2939
      %v2941 = vsel %vm2797, %v2608, 0.0
      %v2942 = vadd.f32 %v2940, %v2941
      %v2943 = vsel %vm2797, %v2609, 0.0
      %v2944 = vadd.f32 %v2942, %v2943
      %v2945 = vsel %vm2797, %v2610, 0.0
      %v2946 = vadd.f32 %v2944, %v2945
      %v2947 = vsel %vm2797, %v2611, 0.0
      %v2948 = vadd.f32 %v2946, %v2947
      %v2949 = vsel %vm2797, %v2612, 0.0
      %v2950 = vadd.f32 %v2948, %v2949
      %v2951 = vsel %vm2797, %v2613, 0.0
      %v2952 = vadd.f32 %v2950, %v2951
      %v2953 = vsel %vm2797, %v2614, 0.0
      %v2954 = vadd.f32 %v2952, %v2953
      %v2955 = vsel %vm2797, %v2615, 0.0
      %v2956 = vadd.f32 %v2954, %v2955
      %v2957 = vsel %vm2797, %v2616, 0.0
      %v2958 = vadd.f32 %v2956, %v2957
      %v2959 = vsel %vm2797, %v2617, 0.0
      %v2960 = vadd.f32 %v2958, %v2959
      %v2961 = vsel %vm2797, %v2618, 0.0
      %v2962 = vadd.f32 %v2960, %v2961
      %v2963 = vsel %vm2797, %v2619, 0.0
      %v2964 = vadd.f32 %v2962, %v2963
      %v2965 = vsel %vm2797, %v2620, 0.0
      %v2966 = vadd.f32 %v2964, %v2965
      %v2967 = vsel %vm2797, %v2621, 0.0
      %v2968 = vadd.f32 %v2966, %v2967
      %v2969 = vsel %vm2797, %v2622, 0.0
      %v2970 = vadd.f32 %v2968, %v2969
      %v2971 = vsel %vm2797, %v2623, 0.0
      %v2972 = vadd.f32 %v2970, %v2971
      %v2973 = vsel %vm2797, %v2624, 0.0
      %v2974 = vadd.f32 %v2972, %v2973
      %v2975 = vsel %vm2797, %v2625, 0.0
      %v2976 = vadd.f32 %v2974, %v2975
      %v2977 = vsel %vm2797, %v2626, 0.0
      %v2978 = vadd.f32 %v2976, %v2977
      %v2979 = vsel %vm2797, %v2627, 0.0
      %v2980 = vadd.f32 %v2978, %v2979
      %v2981 = vsel %vm2797, %v2628, 0.0
      %v2982 = vadd.f32 %v2980, %v2981
      %v2983 = vsel %vm2797, %v2629, 0.0
      %v2984 = vadd.f32 %v2982, %v2983
      %v2985 = vsel %vm2797, %v2630, 0.0
      %v2986 = vadd.f32 %v2984, %v2985
      %v2987 = vsel %vm2797, %v2631, 0.0
      %v2988 = vadd.f32 %v2986, %v2987
      %v2989 = vsel %vm2797, %v2632, 0.0
      %v2990 = vadd.f32 %v2988, %v2989
      %v2991 = vsel %vm2797, %v2633, 0.0
      %v2992 = vadd.f32 %v2990, %v2991
      %v2993 = vsel %vm2797, %v2634, 0.0
      %v2994 = vadd.f32 %v2992, %v2993
      %v2995 = vsel %vm2797, %v2635, 0.0
      %v2996 = vadd.f32 %v2994, %v2995
      %v2997 = vsel %vm2797, %v2636, 0.0
      %v2998 = vadd.f32 %v2996, %v2997
      %v2999 = vrot.slane %v2998, 4
      %v3000 = vadd.f32 %v2998, %v2999
      %v3001 = vrot.slane %v3000, 2
      %v3002 = vadd.f32 %v3000, %v3001
      %v3003 = vrot.slane %v3002, 1
      %v3004 = vadd.f32 %v3002, %v3003
      %v3005 = vsel %vm2797, %v2637, 0.0
      %v3006 = vsel %vm2797, %v2638, 0.0
      %v3007 = vadd.f32 %v3005, %v3006
      %v3008 = vsel %vm2797, %v2639, 0.0
      %v3009 = vadd.f32 %v3007, %v3008
      %v3010 = vsel %vm2797, %v2640, 0.0
      %v3011 = vadd.f32 %v3009, %v3010
      %v3012 = vsel %vm2797, %v2641, 0.0
      %v3013 = vadd.f32 %v3011, %v3012
      %v3014 = vsel %vm2797, %v2642, 0.0
      %v3015 = vadd.f32 %v3013, %v3014
      %v3016 = vsel %vm2797, %v2643, 0.0
      %v3017 = vadd.f32 %v3015, %v3016
      %v3018 = vsel %vm2797, %v2644, 0.0
      %v3019 = vadd.f32 %v3017, %v3018
      %v3020 = vsel %vm2797, %v2645, 0.0
      %v3021 = vadd.f32 %v3019, %v3020
      %v3022 = vsel %vm2797, %v2646, 0.0
      %v3023 = vadd.f32 %v3021, %v3022
      %v3024 = vsel %vm2797, %v2647, 0.0
      %v3025 = vadd.f32 %v3023, %v3024
      %v3026 = vsel %vm2797, %v2648, 0.0
      %v3027 = vadd.f32 %v3025, %v3026
      %v3028 = vsel %vm2797, %v2649, 0.0
      %v3029 = vadd.f32 %v3027, %v3028
      %v3030 = vsel %vm2797, %v2650, 0.0
      %v3031 = vadd.f32 %v3029, %v3030
      %v3032 = vsel %vm2797, %v2651, 0.0
      %v3033 = vadd.f32 %v3031, %v3032
      %v3034 = vsel %vm2797, %v2652, 0.0
      %v3035 = vadd.f32 %v3033, %v3034
      %v3036 = vsel %vm2797, %v2653, 0.0
      %v3037 = vadd.f32 %v3035, %v3036
      %v3038 = vsel %vm2797, %v2654, 0.0
      %v3039 = vadd.f32 %v3037, %v3038
      %v3040 = vsel %vm2797, %v2655, 0.0
      %v3041 = vadd.f32 %v3039, %v3040
      %v3042 = vsel %vm2797, %v2656, 0.0
      %v3043 = vadd.f32 %v3041, %v3042
      %v3044 = vsel %vm2797, %v2657, 0.0
      %v3045 = vadd.f32 %v3043, %v3044
      %v3046 = vsel %vm2797, %v2658, 0.0
      %v3047 = vadd.f32 %v3045, %v3046
      %v3048 = vsel %vm2797, %v2659, 0.0
      %v3049 = vadd.f32 %v3047, %v3048
      %v3050 = vsel %vm2797, %v2660, 0.0
      %v3051 = vadd.f32 %v3049, %v3050
      %v3052 = vsel %vm2797, %v2661, 0.0
      %v3053 = vadd.f32 %v3051, %v3052
      %v3054 = vsel %vm2797, %v2662, 0.0
      %v3055 = vadd.f32 %v3053, %v3054
      %v3056 = vsel %vm2797, %v2663, 0.0
      %v3057 = vadd.f32 %v3055, %v3056
      %v3058 = vsel %vm2797, %v2664, 0.0
      %v3059 = vadd.f32 %v3057, %v3058
      %v3060 = vsel %vm2797, %v2665, 0.0
      %v3061 = vadd.f32 %v3059, %v3060
      %v3062 = vsel %vm2797, %v2666, 0.0
      %v3063 = vadd.f32 %v3061, %v3062
      %v3064 = vsel %vm2797, %v2667, 0.0
      %v3065 = vadd.f32 %v3063, %v3064
      %v3066 = vsel %vm2797, %v2668, 0.0
      %v3067 = vadd.f32 %v3065, %v3066
      %v3068 = vrot.slane %v3067, 4
      %v3069 = vadd.f32 %v3067, %v3068
      %v3070 = vrot.slane %v3069, 2
      %v3071 = vadd.f32 %v3069, %v3070
      %v3072 = vrot.slane %v3071, 1
      %v3073 = vadd.f32 %v3071, %v3072
      %v3074 = vsel %vm2797, %v2669, 0.0
      %v3075 = vsel %vm2797, %v2670, 0.0
      %v3076 = vadd.f32 %v3074, %v3075
      %v3077 = vsel %vm2797, %v2671, 0.0
      %v3078 = vadd.f32 %v3076, %v3077
      %v3079 = vsel %vm2797, %v2672, 0.0
      %v3080 = vadd.f32 %v3078, %v3079
      %v3081 = vsel %vm2797, %v2673, 0.0
      %v3082 = vadd.f32 %v3080, %v3081
      %v3083 = vsel %vm2797, %v2674, 0.0
      %v3084 = vadd.f32 %v3082, %v3083
      %v3085 = vsel %vm2797, %v2675, 0.0
      %v3086 = vadd.f32 %v3084, %v3085
      %v3087 = vsel %vm2797, %v2676, 0.0
      %v3088 = vadd.f32 %v3086, %v3087
      %v3089 = vsel %vm2797, %v2677, 0.0
      %v3090 = vadd.f32 %v3088, %v3089
      %v3091 = vsel %vm2797, %v2678, 0.0
      %v3092 = vadd.f32 %v3090, %v3091
      %v3093 = vsel %vm2797, %v2679, 0.0
      %v3094 = vadd.f32 %v3092, %v3093
      %v3095 = vsel %vm2797, %v2680, 0.0
      %v3096 = vadd.f32 %v3094, %v3095
      %v3097 = vsel %vm2797, %v2681, 0.0
      %v3098 = vadd.f32 %v3096, %v3097
      %v3099 = vsel %vm2797, %v2682, 0.0
      %v3100 = vadd.f32 %v3098, %v3099
      %v3101 = vsel %vm2797, %v2683, 0.0
      %v3102 = vadd.f32 %v3100, %v3101
      %v3103 = vsel %vm2797, %v2684, 0.0
      %v3104 = vadd.f32 %v3102, %v3103
      %v3105 = vsel %vm2797, %v2685, 0.0
      %v3106 = vadd.f32 %v3104, %v3105
      %v3107 = vsel %vm2797, %v2686, 0.0
      %v3108 = vadd.f32 %v3106, %v3107
      %v3109 = vsel %vm2797, %v2687, 0.0
      %v3110 = vadd.f32 %v3108, %v3109
      %v3111 = vsel %vm2797, %v2688, 0.0
      %v3112 = vadd.f32 %v3110, %v3111
      %v3113 = vsel %vm2797, %v2689, 0.0
      %v3114 = vadd.f32 %v3112, %v3113
      %v3115 = vsel %vm2797, %v2690, 0.0
      %v3116 = vadd.f32 %v3114, %v3115
      %v3117 = vsel %vm2797, %v2691, 0.0
      %v3118 = vadd.f32 %v3116, %v3117
      %v3119 = vsel %vm2797, %v2692, 0.0
      %v3120 = vadd.f32 %v3118, %v3119
      %v3121 = vsel %vm2797, %v2693, 0.0
      %v3122 = vadd.f32 %v3120, %v3121
      %v3123 = vsel %vm2797, %v2694, 0.0
      %v3124 = vadd.f32 %v3122, %v3123
      %v3125 = vsel %vm2797, %v2695, 0.0
      %v3126 = vadd.f32 %v3124, %v3125
      %v3127 = vsel %vm2797, %v2696, 0.0
      %v3128 = vadd.f32 %v3126, %v3127
      %v3129 = vsel %vm2797, %v2697, 0.0
      %v3130 = vadd.f32 %v3128, %v3129
      %v3131 = vsel %vm2797, %v2698, 0.0
      %v3132 = vadd.f32 %v3130, %v3131
      %v3133 = vsel %vm2797, %v2699, 0.0
      %v3134 = vadd.f32 %v3132, %v3133
      %v3135 = vsel %vm2797, %v2700, 0.0
      %v3136 = vadd.f32 %v3134, %v3135
      %v3137 = vrot.slane %v3136, 4
      %v3138 = vadd.f32 %v3136, %v3137
      %v3139 = vrot.slane %v3138, 2
      %v3140 = vadd.f32 %v3138, %v3139
      %v3141 = vrot.slane %v3140, 1
      %v3142 = vadd.f32 %v3140, %v3141
      %v3143 = vsel %vm2797, %v2701, 0.0
      %v3144 = vsel %vm2797, %v2702, 0.0
      %v3145 = vadd.f32 %v3143, %v3144
      %v3146 = vsel %vm2797, %v2703, 0.0
      %v3147 = vadd.f32 %v3145, %v3146
      %v3148 = vsel %vm2797, %v2704, 0.0
      %v3149 = vadd.f32 %v3147, %v3148
      %v3150 = vsel %vm2797, %v2705, 0.0
      %v3151 = vadd.f32 %v3149, %v3150
      %v3152 = vsel %vm2797, %v2706, 0.0
      %v3153 = vadd.f32 %v3151, %v3152
      %v3154 = vsel %vm2797, %v2707, 0.0
      %v3155 = vadd.f32 %v3153, %v3154
      %v3156 = vsel %vm2797, %v2708, 0.0
      %v3157 = vadd.f32 %v3155, %v3156
      %v3158 = vsel %vm2797, %v2709, 0.0
      %v3159 = vadd.f32 %v3157, %v3158
      %v3160 = vsel %vm2797, %v2710, 0.0
      %v3161 = vadd.f32 %v3159, %v3160
      %v3162 = vsel %vm2797, %v2711, 0.0
      %v3163 = vadd.f32 %v3161, %v3162
      %v3164 = vsel %vm2797, %v2712, 0.0
      %v3165 = vadd.f32 %v3163, %v3164
      %v3166 = vsel %vm2797, %v2713, 0.0
      %v3167 = vadd.f32 %v3165, %v3166
      %v3168 = vsel %vm2797, %v2714, 0.0
      %v3169 = vadd.f32 %v3167, %v3168
      %v3170 = vsel %vm2797, %v2715, 0.0
      %v3171 = vadd.f32 %v3169, %v3170
      %v3172 = vsel %vm2797, %v2716, 0.0
      %v3173 = vadd.f32 %v3171, %v3172
      %v3174 = vsel %vm2797, %v2717, 0.0
      %v3175 = vadd.f32 %v3173, %v3174
      %v3176 = vsel %vm2797, %v2718, 0.0
      %v3177 = vadd.f32 %v3175, %v3176
      %v3178 = vsel %vm2797, %v2719, 0.0
      %v3179 = vadd.f32 %v3177, %v3178
      %v3180 = vsel %vm2797, %v2720, 0.0
      %v3181 = vadd.f32 %v3179, %v3180
      %v3182 = vsel %vm2797, %v2721, 0.0
      %v3183 = vadd.f32 %v3181, %v3182
      %v3184 = vsel %vm2797, %v2722, 0.0
      %v3185 = vadd.f32 %v3183, %v3184
      %v3186 = vsel %vm2797, %v2723, 0.0
      %v3187 = vadd.f32 %v3185, %v3186
      %v3188 = vsel %vm2797, %v2724, 0.0
      %v3189 = vadd.f32 %v3187, %v3188
      %v3190 = vsel %vm2797, %v2725, 0.0
      %v3191 = vadd.f32 %v3189, %v3190
      %v3192 = vsel %vm2797, %v2726, 0.0
      %v3193 = vadd.f32 %v3191, %v3192
      %v3194 = vsel %vm2797, %v2727, 0.0
      %v3195 = vadd.f32 %v3193, %v3194
      %v3196 = vsel %vm2797, %v2728, 0.0
      %v3197 = vadd.f32 %v3195, %v3196
      %v3198 = vsel %vm2797, %v2729, 0.0
      %v3199 = vadd.f32 %v3197, %v3198
      %v3200 = vsel %vm2797, %v2730, 0.0
      %v3201 = vadd.f32 %v3199, %v3200
      %v3202 = vsel %vm2797, %v2731, 0.0
      %v3203 = vadd.f32 %v3201, %v3202
      %v3204 = vsel %vm2797, %v2732, 0.0
      %v3205 = vadd.f32 %v3203, %v3204
      %v3206 = vrot.slane %v3205, 4
      %v3207 = vadd.f32 %v3205, %v3206
      %v3208 = vrot.slane %v3207, 2
      %v3209 = vadd.f32 %v3207, %v3208
      %v3210 = vrot.slane %v3209, 1
      %v3211 = vadd.f32 %v3209, %v3210
      %v3212 = vsel %vm2797, %v2733, 0.0
      %v3213 = vsel %vm2797, %v2734, 0.0
      %v3214 = vadd.f32 %v3212, %v3213
      %v3215 = vsel %vm2797, %v2735, 0.0
      %v3216 = vadd.f32 %v3214, %v3215
      %v3217 = vsel %vm2797, %v2736, 0.0
      %v3218 = vadd.f32 %v3216, %v3217
      %v3219 = vsel %vm2797, %v2737, 0.0
      %v3220 = vadd.f32 %v3218, %v3219
      %v3221 = vsel %vm2797, %v2738, 0.0
      %v3222 = vadd.f32 %v3220, %v3221
      %v3223 = vsel %vm2797, %v2739, 0.0
      %v3224 = vadd.f32 %v3222, %v3223
      %v3225 = vsel %vm2797, %v2740, 0.0
      %v3226 = vadd.f32 %v3224, %v3225
      %v3227 = vsel %vm2797, %v2741, 0.0
      %v3228 = vadd.f32 %v3226, %v3227
      %v3229 = vsel %vm2797, %v2742, 0.0
      %v3230 = vadd.f32 %v3228, %v3229
      %v3231 = vsel %vm2797, %v2743, 0.0
      %v3232 = vadd.f32 %v3230, %v3231
      %v3233 = vsel %vm2797, %v2744, 0.0
      %v3234 = vadd.f32 %v3232, %v3233
      %v3235 = vsel %vm2797, %v2745, 0.0
      %v3236 = vadd.f32 %v3234, %v3235
      %v3237 = vsel %vm2797, %v2746, 0.0
      %v3238 = vadd.f32 %v3236, %v3237
      %v3239 = vsel %vm2797, %v2747, 0.0
      %v3240 = vadd.f32 %v3238, %v3239
      %v3241 = vsel %vm2797, %v2748, 0.0
      %v3242 = vadd.f32 %v3240, %v3241
      %v3243 = vsel %vm2797, %v2749, 0.0
      %v3244 = vadd.f32 %v3242, %v3243
      %v3245 = vsel %vm2797, %v2750, 0.0
      %v3246 = vadd.f32 %v3244, %v3245
      %v3247 = vsel %vm2797, %v2751, 0.0
      %v3248 = vadd.f32 %v3246, %v3247
      %v3249 = vsel %vm2797, %v2752, 0.0
      %v3250 = vadd.f32 %v3248, %v3249
      %v3251 = vsel %vm2797, %v2753, 0.0
      %v3252 = vadd.f32 %v3250, %v3251
      %v3253 = vsel %vm2797, %v2754, 0.0
      %v3254 = vadd.f32 %v3252, %v3253
      %v3255 = vsel %vm2797, %v2755, 0.0
      %v3256 = vadd.f32 %v3254, %v3255
      %v3257 = vsel %vm2797, %v2756, 0.0
      %v3258 = vadd.f32 %v3256, %v3257
      %v3259 = vsel %vm2797, %v2757, 0.0
      %v3260 = vadd.f32 %v3258, %v3259
      %v3261 = vsel %vm2797, %v2758, 0.0
      %v3262 = vadd.f32 %v3260, %v3261
      %v3263 = vsel %vm2797, %v2759, 0.0
      %v3264 = vadd.f32 %v3262, %v3263
      %v3265 = vsel %vm2797, %v2760, 0.0
      %v3266 = vadd.f32 %v3264, %v3265
      %v3267 = vsel %vm2797, %v2761, 0.0
      %v3268 = vadd.f32 %v3266, %v3267
      %v3269 = vsel %vm2797, %v2762, 0.0
      %v3270 = vadd.f32 %v3268, %v3269
      %v3271 = vsel %vm2797, %v2763, 0.0
      %v3272 = vadd.f32 %v3270, %v3271
      %v3273 = vsel %vm2797, %v2764, 0.0
      %v3274 = vadd.f32 %v3272, %v3273
      %v3275 = vrot.slane %v3274, 4
      %v3276 = vadd.f32 %v3274, %v3275
      %v3277 = vrot.slane %v3276, 2
      %v3278 = vadd.f32 %v3276, %v3277
      %v3279 = vrot.slane %v3278, 1
      %v3280 = vadd.f32 %v3278, %v3279
      %v3281 = vsel %vm2797, %v2765, 0.0
      %v3282 = vsel %vm2797, %v2766, 0.0
      %v3283 = vadd.f32 %v3281, %v3282
      %v3284 = vsel %vm2797, %v2767, 0.0
      %v3285 = vadd.f32 %v3283, %v3284
      %v3286 = vsel %vm2797, %v2768, 0.0
      %v3287 = vadd.f32 %v3285, %v3286
      %v3288 = vsel %vm2797, %v2769, 0.0
      %v3289 = vadd.f32 %v3287, %v3288
      %v3290 = vsel %vm2797, %v2770, 0.0
      %v3291 = vadd.f32 %v3289, %v3290
      %v3292 = vsel %vm2797, %v2771, 0.0
      %v3293 = vadd.f32 %v3291, %v3292
      %v3294 = vsel %vm2797, %v2772, 0.0
      %v3295 = vadd.f32 %v3293, %v3294
      %v3296 = vsel %vm2797, %v2773, 0.0
      %v3297 = vadd.f32 %v3295, %v3296
      %v3298 = vsel %vm2797, %v2774, 0.0
      %v3299 = vadd.f32 %v3297, %v3298
      %v3300 = vsel %vm2797, %v2775, 0.0
      %v3301 = vadd.f32 %v3299, %v3300
      %v3302 = vsel %vm2797, %v2776, 0.0
      %v3303 = vadd.f32 %v3301, %v3302
      %v3304 = vsel %vm2797, %v2777, 0.0
      %v3305 = vadd.f32 %v3303, %v3304
      %v3306 = vsel %vm2797, %v2778, 0.0
      %v3307 = vadd.f32 %v3305, %v3306
      %v3308 = vsel %vm2797, %v2779, 0.0
      %v3309 = vadd.f32 %v3307, %v3308
      %v3310 = vsel %vm2797, %v2780, 0.0
      %v3311 = vadd.f32 %v3309, %v3310
      %v3312 = vsel %vm2797, %v2781, 0.0
      %v3313 = vadd.f32 %v3311, %v3312
      %v3314 = vsel %vm2797, %v2782, 0.0
      %v3315 = vadd.f32 %v3313, %v3314
      %v3316 = vsel %vm2797, %v2783, 0.0
      %v3317 = vadd.f32 %v3315, %v3316
      %v3318 = vsel %vm2797, %v2784, 0.0
      %v3319 = vadd.f32 %v3317, %v3318
      %v3320 = vsel %vm2797, %v2785, 0.0
      %v3321 = vadd.f32 %v3319, %v3320
      %v3322 = vsel %vm2797, %v2786, 0.0
      %v3323 = vadd.f32 %v3321, %v3322
      %v3324 = vsel %vm2797, %v2787, 0.0
      %v3325 = vadd.f32 %v3323, %v3324
      %v3326 = vsel %vm2797, %v2788, 0.0
      %v3327 = vadd.f32 %v3325, %v3326
      %v3328 = vsel %vm2797, %v2789, 0.0
      %v3329 = vadd.f32 %v3327, %v3328
      %v3330 = vsel %vm2797, %v2790, 0.0
      %v3331 = vadd.f32 %v3329, %v3330
      %v3332 = vsel %vm2797, %v2791, 0.0
      %v3333 = vadd.f32 %v3331, %v3332
      %v3334 = vsel %vm2797, %v2792, 0.0
      %v3335 = vadd.f32 %v3333, %v3334
      %v3336 = vsel %vm2797, %v2793, 0.0
      %v3337 = vadd.f32 %v3335, %v3336
      %v3338 = vsel %vm2797, %v2794, 0.0
      %v3339 = vadd.f32 %v3337, %v3338
      %v3340 = vsel %vm2797, %v2795, 0.0
      %v3341 = vadd.f32 %v3339, %v3340
      %v3342 = vsel %vm2797, %v2796, 0.0
      %v3343 = vadd.f32 %v3341, %v3342
      %v3344 = vrot.slane %v3343, 4
      %v3345 = vadd.f32 %v3343, %v3344
      %v3346 = vrot.slane %v3345, 2
      %v3347 = vadd.f32 %v3345, %v3346
      %v3348 = vrot.slane %v3347, 1
      %v3349 = vadd.f32 %v3347, %v3348
      %v3350 = vmul.f32 %v2866, 0.00390625
      %v3351 = vmul.f32 %v2935, 0.00390625
      %v3352 = vmul.f32 %v3004, 0.00390625
      %v3353 = vmul.f32 %v3073, 0.00390625
      %v3354 = vmul.f32 %v3142, 0.00390625
      %v3355 = vmul.f32 %v3211, 0.00390625
      %v3356 = vmul.f32 %v3280, 0.00390625
      %v3357 = vmul.f32 %v3349, 0.00390625
      %vm3366 = vcmask 1041409
      %v3367 = vsel %vm3366, %v3351, %v3350
      %vm3368 = vcmask 1042434
      %v3369 = vsel %vm3368, %v3352, %v3367
      %vm3370 = vcmask 1043459
      %v3371 = vsel %vm3370, %v3353, %v3369
      %vm3372 = vcmask 1044484
      %v3373 = vsel %vm3372, %v3354, %v3371
      %vm3374 = vcmask 1045509
      %v3375 = vsel %vm3374, %v3355, %v3373
      %vm3376 = vcmask 1046534
      %v3377 = vsel %vm3376, %v3356, %v3375
      %vm3378 = vcmask 1047559
      %v3379 = vsel %vm3378, %v3357, %v3377
      %3381 = vst.msk [vmem:[%s170] sm:$0xff] %vm2797, %v3379
      %p3382 = scmp.lt.s32.totalorder %s14, 1
      %s3383 = scalar_select %p3382, %s14, 1
      %s3384 = smul.addr %s3383, 8
      %s3385 = scalar_lea.vmem %s3, %s3384
      // Predicated region
      $region33: #{conv_rnn_forward.2} parent=31 // pred_check
        %p3386 = pneg %p100
      $region34: #{conv_rnn_forward.2} parent=31 // pred_check_branch
        %3388 = sbr.rel (%p3386) target = $region36
      $region35: #{conv_rnn_forward.2} parent=31 // pred_region
        _
      $region36: #{conv_rnn_forward.2} parent=31 // pred_fallthru
        _
    $region32: #{conv_rnn_forward.2} parent=5 // pred_fallthru
      _
    %p3389 = scmp.le.s32.totalorder 2, %s9
    // Predicated region
    $region37: #{conv_rnn_forward.2} parent=5 // pred_check
      %p3390 = pneg %p3389
    $region38: #{conv_rnn_forward.2} parent=5 // pred_check_branch
      %3392 = sbr.rel (%p3390) target = $region40
    $region39: #{conv_rnn_forward.2} parent=5 // pred_region
      %s3393 = ssub.s32 %s9, 2
      // Predicated region
      $region41: #{conv_rnn_forward.2} parent=39 // pred_check
        %p3394 = pneg %p106
      $region42: #{conv_rnn_forward.2} parent=39 // pred_check_branch
        %3396 = sbr.rel (%p3394) target = $region44
      $region43: #{conv_rnn_forward.2} parent=39 // pred_region
        %p3397 = scmp.lt.s32.totalorder %s15, 1
        %s3398 = scalar_select %p3397, %s15, 1
        %s3399 = smul.addr %s3398, 8
        %s3400 = scalar_lea.vmem %s3, %s3399
      $region44: #{conv_rnn_forward.2} parent=39 // pred_fallthru
        _
    $region40: #{conv_rnn_forward.2} parent=5 // pred_fallthru
      _
  $region6: #{conv_rnn_forward.2} parent=0 // loop_footer
    %s13 = sadd.s32 1, %s9
  $region7: #{conv_rnn_forward.2} parent=0 // loop_footer_branch
    %8 = sbr.rel target = $region3
  $region8: #{conv_rnn_forward.2} parent=0 // loop_exit
    _

// kernel: conv_rnn_forward.3
$region0: #{conv_rnn_forward.3}
  #allocation0 [shape = 'u32[]', space=smem, size = 0x4, offset = 0x4, fixed_abs, tag = 'smem constant byte address 0x4 - core index']
  #allocation1 [shape = 'u32[144,128]{1,0:T(1,128)}', space=vmem, size = 0x12000, scoped, tag = 'internal scratch']
  #allocation2 [shape = 'f32[8,2,32]{2,1,0:T(2,128)}', space=vmem, size = 0x2000, scoped, tag = 'scratch operand']
  #allocation3 [shape = 'f32[1,1]{1,0:T(1,128)S(1)}', space=vmem, size = 0x200, scoped, tag = 'scoped memory for conv_rnn_forward.3']
  %s0 = inlined_call_operand.vmem [shape: f32[8,2,32], index: 0, kind: input, shape index: {}]
  %s1 = inlined_call_operand.vmem [shape: f32[32,32], index: 1, kind: input, shape index: {}]
  %s2 = inlined_call_operand.vmem [shape: f32[32,32], index: 2, kind: input, shape index: {}]
  %s3 = inlined_call_operand.vmem [shape: f32[1,32], index: 3, kind: input, shape index: {}]
  %s4 = inlined_call_operand.vmem [shape: f32[32,32], index: 4, kind: input, shape index: {}]
  %s5 = inlined_call_operand.vmem [shape: f32[32,32], index: 5, kind: input, shape index: {}]
  %s6 = inlined_call_operand.vmem [shape: f32[32,1], index: 6, kind: input, shape index: {}]
  %s7 = inlined_call_operand.<no memory space> [shape: f32[1,1], index: 7, kind: input, shape index: {}]
  %s8 = inlined_call_operand.vmem [shape: f32[2,1], index: 8, kind: output, shape index: {}]
  %s9 = sld [smem:[#allocation0]]
  $region42: #{conv_rnn_forward.3} parent=0
    _
  %s11 = ssub.s32 1, %s9
  %s12 = scalar_select 0, %s11, %s9
  %v13 = vstv %s7
  %14 = vst [vmem:[#allocation3] sm:$0x1] %v13
  // Predicated region
  $region2: #{conv_rnn_forward.3} parent=0 // pred_check
    _
  $region3: #{conv_rnn_forward.3} parent=0 // pred_check_branch
    %16 = sbr.rel (0) target = $region5
  $region4: #{conv_rnn_forward.3} parent=0 // pred_region
    _
  $region5: #{conv_rnn_forward.3} parent=0 // pred_fallthru
    _
  // Predicated region
  $region6: #{conv_rnn_forward.3} parent=0 // pred_check
    _
  $region7: #{conv_rnn_forward.3} parent=0 // pred_check_branch
    %18 = sbr.rel (0) target = $region9
  $region8: #{conv_rnn_forward.3} parent=0 // pred_region
    _
  $region9: #{conv_rnn_forward.3} parent=0 // pred_fallthru
    _
  // Predicated region
  $region10: #{conv_rnn_forward.3} parent=0 // pred_check
    _
  $region11: #{conv_rnn_forward.3} parent=0 // pred_check_branch
    %20 = sbr.rel (0) target = $region13
  $region12: #{conv_rnn_forward.3} parent=0 // pred_region
    _
  $region13: #{conv_rnn_forward.3} parent=0 // pred_fallthru
    _
  // Predicated region
  $region14: #{conv_rnn_forward.3} parent=0 // pred_check
    _
  $region15: #{conv_rnn_forward.3} parent=0 // pred_check_branch
    %22 = sbr.rel (0) target = $region17
  $region16: #{conv_rnn_forward.3} parent=0 // pred_region
    _
  $region17: #{conv_rnn_forward.3} parent=0 // pred_fallthru
    _
  // Predicated region
  $region18: #{conv_rnn_forward.3} parent=0 // pred_check
    _
  $region19: #{conv_rnn_forward.3} parent=0 // pred_check_branch
    %24 = sbr.rel (0) target = $region21
  $region20: #{conv_rnn_forward.3} parent=0 // pred_region
    _
  $region21: #{conv_rnn_forward.3} parent=0 // pred_fallthru
    _
  // Predicated region
  $region22: #{conv_rnn_forward.3} parent=0 // pred_check
    _
  $region23: #{conv_rnn_forward.3} parent=0 // pred_check_branch
    %26 = sbr.rel (0) target = $region25
  $region24: #{conv_rnn_forward.3} parent=0 // pred_region
    _
  $region25: #{conv_rnn_forward.3} parent=0 // pred_fallthru
    _
  // Predicated region
  $region26: #{conv_rnn_forward.3} parent=0 // pred_check
    _
  $region27: #{conv_rnn_forward.3} parent=0 // pred_check_branch
    %28 = sbr.rel (0) target = $region29
  $region28: #{conv_rnn_forward.3} parent=0 // pred_region
    _
  $region29: #{conv_rnn_forward.3} parent=0 // pred_fallthru
    _
  // Predicated region
  $region30: #{conv_rnn_forward.3} parent=0 // pred_check
    _
  $region31: #{conv_rnn_forward.3} parent=0 // pred_check_branch
    %30 = sbr.rel (0) target = $region33
  $region32: #{conv_rnn_forward.3} parent=0 // pred_region
    _
  $region33: #{conv_rnn_forward.3} parent=0 // pred_fallthru
    _
  %v31 = vld [vmem:[%s0] sm:$0x3]
  %v32 = vld [vmem:[%s0 + $0x2] sm:$0x3]
  %v33 = vld [vmem:[%s0 + $0x4] sm:$0x3]
  %v34 = vld [vmem:[%s0 + $0x6] sm:$0x3]
  %v35 = vld [vmem:[%s0 + $0x8] sm:$0x3]
  %v36 = vld [vmem:[%s0 + $0xa] sm:$0x3]
  %v37 = vld [vmem:[%s0 + $0xc] sm:$0x3]
  %v38 = vld [vmem:[%s0 + $0xe] sm:$0x3]
  %v39 = vld [vmem:[%s1] sm:$0xff]
  %v40 = vld [vmem:[%s1 + $0x8] sm:$0xff]
  %v41 = vld [vmem:[%s1 + $0x10] sm:$0xff]
  %v42 = vld [vmem:[%s1 + $0x18] sm:$0xff]
  %v43 = vld [vmem:[%s3] sm:$0x1]
  %v45 = vlaneseq
  %v46 = vshrl.u32 %v45, 7
  %v47 = vsub.s32 0, %v46
  %v48 = vrot.slane %v43, %v47
  %v58 = vcombine.low %v31, %v32
  %v59 = vcombine.low %v33, %v34
  %v61 = vunpack.c.l.s4 1983009808
  %v62 = vunpack.c.0.s8 %v61
  %v63 = vlaneseq
  %v64 = vshrl.u32 %v63, 7
  %v65 = vsub.s32 %v62, %v64
  %v66 = vrot.slane %v58, %v65
  %v68 = vunpack.c.l.s4 1983009808
  %v69 = vunpack.c.0.s8 %v68
  %v70 = vlaneseq
  %v71 = vshrl.u32 %v70, 7
  %v72 = vsub.s32 %v69, %v71
  %v73 = vrot.slane %v59, %v72
  %v74 = vcombine.low %v66, %v73
  %v75 = vcombine.low %v35, %v36
  %v76 = vcombine.low %v37, %v38
  %v78 = vunpack.c.l.s4 1983009808
  %v79 = vunpack.c.0.s8 %v78
  %v80 = vlaneseq
  %v81 = vshrl.u32 %v80, 7
  %v82 = vsub.s32 %v79, %v81
  %v83 = vrot.slane %v75, %v82
  %v85 = vunpack.c.l.s4 1983009808
  %v86 = vunpack.c.0.s8 %v85
  %v87 = vlaneseq
  %v88 = vshrl.u32 %v87, 7
  %v89 = vsub.s32 %v86, %v88
  %v90 = vrot.slane %v76, %v89
  %v91 = vcombine.low %v83, %v90
  %vm92 = vcmask 261120
  %v93 = vsel %vm92, %v74, 0
  %v95 = vsel %vm92, %v91, 0
  %97 = vmatprep.subr.mxu0 0.0
  %98 = vmatpush1.msra.mxu0 %v39
  %99 = vmatprep.subr.mxu0 0.0
  %100 = vmatpush1.msra.mxu0 %v40
  %101 = vmatprep.subr.mxu0 0.0
  %102 = vmatpush1.msra.mxu0 %v41
  %103 = vmatprep.subr.mxu0 0.0
  %104 = vmatpush1.msra.mxu0 %v42
  %105 = vmatprep.subr.mxu0 0.0
  %106 = vmatpush1.msra.mxu0 0.0
  %107 = vmatprep.subr.mxu0 0.0
  %108 = vmatpush1.msra.mxu0 0.0
  %109 = vmatprep.subr.mxu0 0.0
  %110 = vmatpush1.msra.mxu0 0.0
  %111 = vmatprep.subr.mxu0 0.0
  %112 = vmatpush1.msra.mxu0 0.0
  %113 = vmatprep.subr.mxu0 0.0
  %114 = vmatpush1.msra.mxu0 0.0
  %115 = vmatprep.subr.mxu0 0.0
  %116 = vmatpush1.msra.mxu0 0.0
  %117 = vmatprep.subr.mxu0 0.0
  %118 = vmatpush1.msra.mxu0 0.0
  %119 = vmatprep.subr.mxu0 0.0
  %120 = vmatpush1.msra.mxu0 0.0
  %121 = vmatprep.subr.mxu0 0.0
  %122 = vmatpush1.msra.mxu0 0.0
  %123 = vmatprep.subr.mxu0 0.0
  %124 = vmatpush1.msra.mxu0 0.0
  %125 = vmatprep.subr.mxu0 0.0
  %126 = vmatpush1.msra.mxu0 0.0
  %127 = vmatprep.subr.mxu0 0.0
  %128 = vmatpush1.msra.mxu0 0.0
  %129 = vmatprep.subr.mxu0 0.0
  %130 = vmatpush1.msra.mxu0 0.0
  %131 = vmatprep.subr.mxu0 0.0
  %132 = vmatpush1.msra.mxu0 0.0
  %133 = vmatprep.subr.mxu0 0.0
  %134 = vmatpush1.msra.mxu0 0.0
  %135 = vmatprep.subr.mxu0 0.0
  %136 = vmatpush1.msra.mxu0 0.0
  %137 = vmatprep.subr.mxu0 0.0
  %138 = vmatpush1.msra.mxu0 0.0
  %139 = vmatprep.subr.mxu0 0.0
  %140 = vmatpush1.msra.mxu0 0.0
  %141 = vmatprep.subr.mxu0 0.0
  %142 = vmatpush1.msra.mxu0 0.0
  %143 = vmatprep.subr.mxu0 0.0
  %144 = vmatpush1.msra.mxu0 0.0
  %145 = vmatprep.subr.mxu0 0.0
  %146 = vmatpush1.msra.mxu0 0.0
  %147 = vmatprep.subr.mxu0 0.0
  %148 = vmatpush1.msra.mxu0 0.0
  %149 = vmatprep.subr.mxu0 0.0
  %150 = vmatpush1.msra.mxu0 0.0
  %151 = vmatprep.subr.mxu0 0.0
  %152 = vmatpush1.msra.mxu0 0.0
  %153 = vmatprep.subr.mxu0 0.0
  %154 = vmatpush1.msra.mxu0 0.0
  %155 = vmatprep.subr.mxu0 0.0
  %156 = vmatpush1.msra.mxu0 0.0
  %157 = vmatprep.subr.mxu0 0.0
  %158 = vmatpush1.msra.mxu0 0.0
  %159 = vmatprep.subr.mxu0 0.0
  %160 = vmatpush1.msra.mxu0 0.0
  %161 = vmatprep.mubr.f32.mxu0 0.0
  %162 = vmatmul.mubr.f32.gmra.mrb[0].mxu0 %v93
  %v163 = vpop.f32.mrb[0].mxu0
  %v164 = vadd.f32 %v48, %v163
  %v165 = vpop.f32.mrb[0].mxu0
  %166 = vmatprep.mubr.f32.mxu0 0.0
  %167 = vmatmul.mubr.f32.gmra.mrb[0].mxu0 %v95
  %v168 = vpop.f32.mrb[0].mxu0
  %v169 = vadd.f32 %v48, %v168
  %v170 = vpop.f32.mrb[0].mxu0
  %171 = vdwg.mxu0
  %v174 = vcombine.high %v164, %v164
  %v176 = vunpack.c.l.s4 1983009808
  %v177 = vunpack.c.0.s8 %v176
  %v178 = vlaneseq
  %v179 = vshrl.u32 %v178, 7
  %v180 = vsub.s32 %v177, %v179
  %v181 = vrot.slane %v164, %v180
  %v183 = vunpack.c.l.s4 1983009808
  %v184 = vunpack.c.0.s8 %v183
  %v185 = vlaneseq
  %v186 = vshrl.u32 %v185, 7
  %v187 = vsub.s32 %v184, %v186
  %v188 = vrot.slane %v174, %v187
  %v189 = vcombine.high %v181, %v181
  %v190 = vcombine.high %v188, %v188
  %v191 = vcombine.high %v169, %v169
  %v193 = vunpack.c.l.s4 1983009808
  %v194 = vunpack.c.0.s8 %v193
  %v195 = vlaneseq
  %v196 = vshrl.u32 %v195, 7
  %v197 = vsub.s32 %v194, %v196
  %v198 = vrot.slane %v169, %v197
  %v200 = vunpack.c.l.s4 1983009808
  %v201 = vunpack.c.0.s8 %v200
  %v202 = vlaneseq
  %v203 = vshrl.u32 %v202, 7
  %v204 = vsub.s32 %v201, %v203
  %v205 = vrot.slane %v191, %v204
  %v206 = vcombine.high %v198, %v198
  %v207 = vcombine.high %v205, %v205
  %vm216 = vcmask 254976
  %217 = vst.msk [vmem:[#allocation2] sm:$0x3] %vm216, %v181
  %218 = vst.msk [vmem:[#allocation2 + $0x2] sm:$0x3] %vm216, %v189
  %219 = vst.msk [vmem:[#allocation2 + $0x4] sm:$0x3] %vm216, %v188
  %220 = vst.msk [vmem:[#allocation2 + $0x6] sm:$0x3] %vm216, %v190
  %221 = vst.msk [vmem:[#allocation2 + $0x8] sm:$0x3] %vm216, %v198
  %222 = vst.msk [vmem:[#allocation2 + $0xa] sm:$0x3] %vm216, %v206
  %223 = vst.msk [vmem:[#allocation2 + $0xc] sm:$0x3] %vm216, %v205
  %224 = vst.msk [vmem:[#allocation2 + $0xe] sm:$0x3] %vm216, %v207
  %v225 = vld [vmem:[#allocation2] sm:$0x3]
  %v226 = vld [vmem:[%s2] sm:$0xff]
  %v227 = vld [vmem:[%s2 + $0x8] sm:$0xff]
  %v228 = vld [vmem:[%s2 + $0x10] sm:$0xff]
  %v229 = vld [vmem:[%s2 + $0x18] sm:$0xff]
  %v231 = vsel %vm92, 0.0, 0
  %233 = vmatprep.subr.mxu0 0.0
  %234 = vmatpush1.msra.mxu0 %v226
  %235 = vmatprep.subr.mxu0 0.0
  %236 = vmatpush1.msra.mxu0 %v227
  %237 = vmatprep.subr.mxu0 0.0
  %238 = vmatpush1.msra.mxu0 %v228
  %239 = vmatprep.subr.mxu0 0.0
  %240 = vmatpush1.msra.mxu0 %v229
  %241 = vmatprep.subr.mxu0 0.0
  %242 = vmatpush1.msra.mxu0 0.0
  %243 = vmatprep.subr.mxu0 0.0
  %244 = vmatpush1.msra.mxu0 0.0
  %245 = vmatprep.subr.mxu0 0.0
  %246 = vmatpush1.msra.mxu0 0.0
  %247 = vmatprep.subr.mxu0 0.0
  %248 = vmatpush1.msra.mxu0 0.0
  %249 = vmatprep.subr.mxu0 0.0
  %250 = vmatpush1.msra.mxu0 0.0
  %251 = vmatprep.subr.mxu0 0.0
  %252 = vmatpush1.msra.mxu0 0.0
  %253 = vmatprep.subr.mxu0 0.0
  %254 = vmatpush1.msra.mxu0 0.0
  %255 = vmatprep.subr.mxu0 0.0
  %256 = vmatpush1.msra.mxu0 0.0
  %257 = vmatprep.subr.mxu0 0.0
  %258 = vmatpush1.msra.mxu0 0.0
  %259 = vmatprep.subr.mxu0 0.0
  %260 = vmatpush1.msra.mxu0 0.0
  %261 = vmatprep.subr.mxu0 0.0
  %262 = vmatpush1.msra.mxu0 0.0
  %263 = vmatprep.subr.mxu0 0.0
  %264 = vmatpush1.msra.mxu0 0.0
  %265 = vmatprep.subr.mxu0 0.0
  %266 = vmatpush1.msra.mxu0 0.0
  %267 = vmatprep.subr.mxu0 0.0
  %268 = vmatpush1.msra.mxu0 0.0
  %269 = vmatprep.subr.mxu0 0.0
  %270 = vmatpush1.msra.mxu0 0.0
  %271 = vmatprep.subr.mxu0 0.0
  %272 = vmatpush1.msra.mxu0 0.0
  %273 = vmatprep.subr.mxu0 0.0
  %274 = vmatpush1.msra.mxu0 0.0
  %275 = vmatprep.subr.mxu0 0.0
  %276 = vmatpush1.msra.mxu0 0.0
  %277 = vmatprep.subr.mxu0 0.0
  %278 = vmatpush1.msra.mxu0 0.0
  %279 = vmatprep.subr.mxu0 0.0
  %280 = vmatpush1.msra.mxu0 0.0
  %281 = vmatprep.subr.mxu0 0.0
  %282 = vmatpush1.msra.mxu0 0.0
  %283 = vmatprep.subr.mxu0 0.0
  %284 = vmatpush1.msra.mxu0 0.0
  %285 = vmatprep.subr.mxu0 0.0
  %286 = vmatpush1.msra.mxu0 0.0
  %287 = vmatprep.subr.mxu0 0.0
  %288 = vmatpush1.msra.mxu0 0.0
  %289 = vmatprep.subr.mxu0 0.0
  %290 = vmatpush1.msra.mxu0 0.0
  %291 = vmatprep.subr.mxu0 0.0
  %292 = vmatpush1.msra.mxu0 0.0
  %293 = vmatprep.subr.mxu0 0.0
  %294 = vmatpush1.msra.mxu0 0.0
  %295 = vmatprep.subr.mxu0 0.0
  %296 = vmatpush1.msra.mxu0 0.0
  %297 = vmatprep.mubr.f32.mxu0 0.0
  %298 = vmatmul.mubr.f32.gmra.mrb[0].mxu0 %v231
  %v299 = vpop.f32.mrb[0].mxu0
  %v300 = vadd.f32 0.0, %v299
  %v301 = vpop.f32.mrb[0].mxu0
  %302 = vdwg.mxu0
  %v303 = vadd.f32 %v225, %v300
  %v304 = vtanh.pop %v303
  %s305 = scalar_lea.vmem [#allocation2], 2
  %v306 = vld [vmem:[%s305] sm:$0x3]
  %v308 = vsel %vm92, %v304, 0
  %310 = vmatprep.subr.mxu0 0.0
  %311 = vmatpush1.msra.mxu0 %v226
  %312 = vmatprep.subr.mxu0 0.0
  %313 = vmatpush1.msra.mxu0 %v227
  %314 = vmatprep.subr.mxu0 0.0
  %315 = vmatpush1.msra.mxu0 %v228
  %316 = vmatprep.subr.mxu0 0.0
  %317 = vmatpush1.msra.mxu0 %v229
  %318 = vmatprep.subr.mxu0 0.0
  %319 = vmatpush1.msra.mxu0 0.0
  %320 = vmatprep.subr.mxu0 0.0
  %321 = vmatpush1.msra.mxu0 0.0
  %322 = vmatprep.subr.mxu0 0.0
  %323 = vmatpush1.msra.mxu0 0.0
  %324 = vmatprep.subr.mxu0 0.0
  %325 = vmatpush1.msra.mxu0 0.0
  %326 = vmatprep.subr.mxu0 0.0
  %327 = vmatpush1.msra.mxu0 0.0
  %328 = vmatprep.subr.mxu0 0.0
  %329 = vmatpush1.msra.mxu0 0.0
  %330 = vmatprep.subr.mxu0 0.0
  %331 = vmatpush1.msra.mxu0 0.0
  %332 = vmatprep.subr.mxu0 0.0
  %333 = vmatpush1.msra.mxu0 0.0
  %334 = vmatprep.subr.mxu0 0.0
  %335 = vmatpush1.msra.mxu0 0.0
  %336 = vmatprep.subr.mxu0 0.0
  %337 = vmatpush1.msra.mxu0 0.0
  %338 = vmatprep.subr.mxu0 0.0
  %339 = vmatpush1.msra.mxu0 0.0
  %340 = vmatprep.subr.mxu0 0.0
  %341 = vmatpush1.msra.mxu0 0.0
  %342 = vmatprep.subr.mxu0 0.0
  %343 = vmatpush1.msra.mxu0 0.0
  %344 = vmatprep.subr.mxu0 0.0
  %345 = vmatpush1.msra.mxu0 0.0
  %346 = vmatprep.subr.mxu0 0.0
  %347 = vmatpush1.msra.mxu0 0.0
  %348 = vmatprep.subr.mxu0 0.0
  %349 = vmatpush1.msra.mxu0 0.0
  %350 = vmatprep.subr.mxu0 0.0
  %351 = vmatpush1.msra.mxu0 0.0
  %352 = vmatprep.subr.mxu0 0.0
  %353 = vmatpush1.msra.mxu0 0.0
  %354 = vmatprep.subr.mxu0 0.0
  %355 = vmatpush1.msra.mxu0 0.0
  %356 = vmatprep.subr.mxu0 0.0
  %357 = vmatpush1.msra.mxu0 0.0
  %358 = vmatprep.subr.mxu0 0.0
  %359 = vmatpush1.msra.mxu0 0.0
  %360 = vmatprep.subr.mxu0 0.0
  %361 = vmatpush1.msra.mxu0 0.0
  %362 = vmatprep.subr.mxu0 0.0
  %363 = vmatpush1.msra.mxu0 0.0
  %364 = vmatprep.subr.mxu0 0.0
  %365 = vmatpush1.msra.mxu0 0.0
  %366 = vmatprep.subr.mxu0 0.0
  %367 = vmatpush1.msra.mxu0 0.0
  %368 = vmatprep.subr.mxu0 0.0
  %369 = vmatpush1.msra.mxu0 0.0
  %370 = vmatprep.subr.mxu0 0.0
  %371 = vmatpush1.msra.mxu0 0.0
  %372 = vmatprep.subr.mxu0 0.0
  %373 = vmatpush1.msra.mxu0 0.0
  %374 = vmatprep.mubr.f32.mxu0 0.0
  %375 = vmatmul.mubr.f32.gmra.mrb[0].mxu0 %v308
  %v376 = vpop.f32.mrb[0].mxu0
  %v377 = vadd.f32 0.0, %v376
  %v378 = vpop.f32.mrb[0].mxu0
  %379 = vdwg.mxu0
  %v380 = vadd.f32 %v306, %v377
  %v381 = vtanh.pop %v380
  %s382 = scalar_lea.vmem [#allocation2], 4
  %v383 = vld [vmem:[%s382] sm:$0x3]
  %v385 = vsel %vm92, %v381, 0
  %387 = vmatprep.subr.mxu0 0.0
  %388 = vmatpush1.msra.mxu0 %v226
  %389 = vmatprep.subr.mxu0 0.0
  %390 = vmatpush1.msra.mxu0 %v227
  %391 = vmatprep.subr.mxu0 0.0
  %392 = vmatpush1.msra.mxu0 %v228
  %393 = vmatprep.subr.mxu0 0.0
  %394 = vmatpush1.msra.mxu0 %v229
  %395 = vmatprep.subr.mxu0 0.0
  %396 = vmatpush1.msra.mxu0 0.0
  %397 = vmatprep.subr.mxu0 0.0
  %398 = vmatpush1.msra.mxu0 0.0
  %399 = vmatprep.subr.mxu0 0.0
  %400 = vmatpush1.msra.mxu0 0.0
  %401 = vmatprep.subr.mxu0 0.0
  %402 = vmatpush1.msra.mxu0 0.0
  %403 = vmatprep.subr.mxu0 0.0
  %404 = vmatpush1.msra.mxu0 0.0
  %405 = vmatprep.subr.mxu0 0.0
  %406 = vmatpush1.msra.mxu0 0.0
  %407 = vmatprep.subr.mxu0 0.0
  %408 = vmatpush1.msra.mxu0 0.0
  %409 = vmatprep.subr.mxu0 0.0
  %410 = vmatpush1.msra.mxu0 0.0
  %411 = vmatprep.subr.mxu0 0.0
  %412 = vmatpush1.msra.mxu0 0.0
  %413 = vmatprep.subr.mxu0 0.0
  %414 = vmatpush1.msra.mxu0 0.0
  %415 = vmatprep.subr.mxu0 0.0
  %416 = vmatpush1.msra.mxu0 0.0
  %417 = vmatprep.subr.mxu0 0.0
  %418 = vmatpush1.msra.mxu0 0.0
  %419 = vmatprep.subr.mxu0 0.0
  %420 = vmatpush1.msra.mxu0 0.0
  %421 = vmatprep.subr.mxu0 0.0
  %422 = vmatpush1.msra.mxu0 0.0
  %423 = vmatprep.subr.mxu0 0.0
  %424 = vmatpush1.msra.mxu0 0.0
  %425 = vmatprep.subr.mxu0 0.0
  %426 = vmatpush1.msra.mxu0 0.0
  %427 = vmatprep.subr.mxu0 0.0
  %428 = vmatpush1.msra.mxu0 0.0
  %429 = vmatprep.subr.mxu0 0.0
  %430 = vmatpush1.msra.mxu0 0.0
  %431 = vmatprep.subr.mxu0 0.0
  %432 = vmatpush1.msra.mxu0 0.0
  %433 = vmatprep.subr.mxu0 0.0
  %434 = vmatpush1.msra.mxu0 0.0
  %435 = vmatprep.subr.mxu0 0.0
  %436 = vmatpush1.msra.mxu0 0.0
  %437 = vmatprep.subr.mxu0 0.0
  %438 = vmatpush1.msra.mxu0 0.0
  %439 = vmatprep.subr.mxu0 0.0
  %440 = vmatpush1.msra.mxu0 0.0
  %441 = vmatprep.subr.mxu0 0.0
  %442 = vmatpush1.msra.mxu0 0.0
  %443 = vmatprep.subr.mxu0 0.0
  %444 = vmatpush1.msra.mxu0 0.0
  %445 = vmatprep.subr.mxu0 0.0
  %446 = vmatpush1.msra.mxu0 0.0
  %447 = vmatprep.subr.mxu0 0.0
  %448 = vmatpush1.msra.mxu0 0.0
  %449 = vmatprep.subr.mxu0 0.0
  %450 = vmatpush1.msra.mxu0 0.0
  %451 = vmatprep.mubr.f32.mxu0 0.0
  %452 = vmatmul.mubr.f32.gmra.mrb[0].mxu0 %v385
  %v453 = vpop.f32.mrb[0].mxu0
  %v454 = vadd.f32 0.0, %v453
  %v455 = vpop.f32.mrb[0].mxu0
  %456 = vdwg.mxu0
  %v457 = vadd.f32 %v383, %v454
  %v458 = vtanh.pop %v457
  %s459 = scalar_lea.vmem [#allocation2], 6
  %v460 = vld [vmem:[%s459] sm:$0x3]
  %v462 = vsel %vm92, %v458, 0
  %464 = vmatprep.subr.mxu0 0.0
  %465 = vmatpush1.msra.mxu0 %v226
  %466 = vmatprep.subr.mxu0 0.0
  %467 = vmatpush1.msra.mxu0 %v227
  %468 = vmatprep.subr.mxu0 0.0
  %469 = vmatpush1.msra.mxu0 %v228
  %470 = vmatprep.subr.mxu0 0.0
  %471 = vmatpush1.msra.mxu0 %v229
  %472 = vmatprep.subr.mxu0 0.0
  %473 = vmatpush1.msra.mxu0 0.0
  %474 = vmatprep.subr.mxu0 0.0
  %475 = vmatpush1.msra.mxu0 0.0
  %476 = vmatprep.subr.mxu0 0.0
  %477 = vmatpush1.msra.mxu0 0.0
  %478 = vmatprep.subr.mxu0 0.0
  %479 = vmatpush1.msra.mxu0 0.0
  %480 = vmatprep.subr.mxu0 0.0
  %481 = vmatpush1.msra.mxu0 0.0
  %482 = vmatprep.subr.mxu0 0.0
  %483 = vmatpush1.msra.mxu0 0.0
  %484 = vmatprep.subr.mxu0 0.0
  %485 = vmatpush1.msra.mxu0 0.0
  %486 = vmatprep.subr.mxu0 0.0
  %487 = vmatpush1.msra.mxu0 0.0
  %488 = vmatprep.subr.mxu0 0.0
  %489 = vmatpush1.msra.mxu0 0.0
  %490 = vmatprep.subr.mxu0 0.0
  %491 = vmatpush1.msra.mxu0 0.0
  %492 = vmatprep.subr.mxu0 0.0
  %493 = vmatpush1.msra.mxu0 0.0
  %494 = vmatprep.subr.mxu0 0.0
  %495 = vmatpush1.msra.mxu0 0.0
  %496 = vmatprep.subr.mxu0 0.0
  %497 = vmatpush1.msra.mxu0 0.0
  %498 = vmatprep.subr.mxu0 0.0
  %499 = vmatpush1.msra.mxu0 0.0
  %500 = vmatprep.subr.mxu0 0.0
  %501 = vmatpush1.msra.mxu0 0.0
  %502 = vmatprep.subr.mxu0 0.0
  %503 = vmatpush1.msra.mxu0 0.0
  %504 = vmatprep.subr.mxu0 0.0
  %505 = vmatpush1.msra.mxu0 0.0
  %506 = vmatprep.subr.mxu0 0.0
  %507 = vmatpush1.msra.mxu0 0.0
  %508 = vmatprep.subr.mxu0 0.0
  %509 = vmatpush1.msra.mxu0 0.0
  %510 = vmatprep.subr.mxu0 0.0
  %511 = vmatpush1.msra.mxu0 0.0
  %512 = vmatprep.subr.mxu0 0.0
  %513 = vmatpush1.msra.mxu0 0.0
  %514 = vmatprep.subr.mxu0 0.0
  %515 = vmatpush1.msra.mxu0 0.0
  %516 = vmatprep.subr.mxu0 0.0
  %517 = vmatpush1.msra.mxu0 0.0
  %518 = vmatprep.subr.mxu0 0.0
  %519 = vmatpush1.msra.mxu0 0.0
  %520 = vmatprep.subr.mxu0 0.0
  %521 = vmatpush1.msra.mxu0 0.0
  %522 = vmatprep.subr.mxu0 0.0
  %523 = vmatpush1.msra.mxu0 0.0
  %524 = vmatprep.subr.mxu0 0.0
  %525 = vmatpush1.msra.mxu0 0.0
  %526 = vmatprep.subr.mxu0 0.0
  %527 = vmatpush1.msra.mxu0 0.0
  %528 = vmatprep.mubr.f32.mxu0 0.0
  %529 = vmatmul.mubr.f32.gmra.mrb[0].mxu0 %v462
  %v530 = vpop.f32.mrb[0].mxu0
  %v531 = vadd.f32 0.0, %v530
  %v532 = vpop.f32.mrb[0].mxu0
  %533 = vdwg.mxu0
  %v534 = vadd.f32 %v460, %v531
  %v535 = vtanh.pop %v534
  %s536 = scalar_lea.vmem [#allocation2], 8
  %v537 = vld [vmem:[%s536] sm:$0x3]
  %v539 = vsel %vm92, %v535, 0
  %541 = vmatprep.subr.mxu0 0.0
  %542 = vmatpush1.msra.mxu0 %v226
  %543 = vmatprep.subr.mxu0 0.0
  %544 = vmatpush1.msra.mxu0 %v227
  %545 = vmatprep.subr.mxu0 0.0
  %546 = vmatpush1.msra.mxu0 %v228
  %547 = vmatprep.subr.mxu0 0.0
  %548 = vmatpush1.msra.mxu0 %v229
  %549 = vmatprep.subr.mxu0 0.0
  %550 = vmatpush1.msra.mxu0 0.0
  %551 = vmatprep.subr.mxu0 0.0
  %552 = vmatpush1.msra.mxu0 0.0
  %553 = vmatprep.subr.mxu0 0.0
  %554 = vmatpush1.msra.mxu0 0.0
  %555 = vmatprep.subr.mxu0 0.0
  %556 = vmatpush1.msra.mxu0 0.0
  %557 = vmatprep.subr.mxu0 0.0
  %558 = vmatpush1.msra.mxu0 0.0
  %559 = vmatprep.subr.mxu0 0.0
  %560 = vmatpush1.msra.mxu0 0.0
  %561 = vmatprep.subr.mxu0 0.0
  %562 = vmatpush1.msra.mxu0 0.0
  %563 = vmatprep.subr.mxu0 0.0
  %564 = vmatpush1.msra.mxu0 0.0
  %565 = vmatprep.subr.mxu0 0.0
  %566 = vmatpush1.msra.mxu0 0.0
  %567 = vmatprep.subr.mxu0 0.0
  %568 = vmatpush1.msra.mxu0 0.0
  %569 = vmatprep.subr.mxu0 0.0
  %570 = vmatpush1.msra.mxu0 0.0
  %571 = vmatprep.subr.mxu0 0.0
  %572 = vmatpush1.msra.mxu0 0.0
  %573 = vmatprep.subr.mxu0 0.0
  %574 = vmatpush1.msra.mxu0 0.0
  %575 = vmatprep.subr.mxu0 0.0
  %576 = vmatpush1.msra.mxu0 0.0
  %577 = vmatprep.subr.mxu0 0.0
  %578 = vmatpush1.msra.mxu0 0.0
  %579 = vmatprep.subr.mxu0 0.0
  %580 = vmatpush1.msra.mxu0 0.0
  %581 = vmatprep.subr.mxu0 0.0
  %582 = vmatpush1.msra.mxu0 0.0
  %583 = vmatprep.subr.mxu0 0.0
  %584 = vmatpush1.msra.mxu0 0.0
  %585 = vmatprep.subr.mxu0 0.0
  %586 = vmatpush1.msra.mxu0 0.0
  %587 = vmatprep.subr.mxu0 0.0
  %588 = vmatpush1.msra.mxu0 0.0
  %589 = vmatprep.subr.mxu0 0.0
  %590 = vmatpush1.msra.mxu0 0.0
  %591 = vmatprep.subr.mxu0 0.0
  %592 = vmatpush1.msra.mxu0 0.0
  %593 = vmatprep.subr.mxu0 0.0
  %594 = vmatpush1.msra.mxu0 0.0
  %595 = vmatprep.subr.mxu0 0.0
  %596 = vmatpush1.msra.mxu0 0.0
  %597 = vmatprep.subr.mxu0 0.0
  %598 = vmatpush1.msra.mxu0 0.0
  %599 = vmatprep.subr.mxu0 0.0
  %600 = vmatpush1.msra.mxu0 0.0
  %601 = vmatprep.subr.mxu0 0.0
  %602 = vmatpush1.msra.mxu0 0.0
  %603 = vmatprep.subr.mxu0 0.0
  %604 = vmatpush1.msra.mxu0 0.0
  %605 = vmatprep.mubr.f32.mxu0 0.0
  %606 = vmatmul.mubr.f32.gmra.mrb[0].mxu0 %v539
  %v607 = vpop.f32.mrb[0].mxu0
  %v608 = vadd.f32 0.0, %v607
  %v609 = vpop.f32.mrb[0].mxu0
  %610 = vdwg.mxu0
  %v611 = vadd.f32 %v537, %v608
  %v612 = vtanh.pop %v611
  %s613 = scalar_lea.vmem [#allocation2], 10
  %v614 = vld [vmem:[%s613] sm:$0x3]
  %v616 = vsel %vm92, %v612, 0
  %618 = vmatprep.subr.mxu0 0.0
  %619 = vmatpush1.msra.mxu0 %v226
  %620 = vmatprep.subr.mxu0 0.0
  %621 = vmatpush1.msra.mxu0 %v227
  %622 = vmatprep.subr.mxu0 0.0
  %623 = vmatpush1.msra.mxu0 %v228
  %624 = vmatprep.subr.mxu0 0.0
  %625 = vmatpush1.msra.mxu0 %v229
  %626 = vmatprep.subr.mxu0 0.0
  %627 = vmatpush1.msra.mxu0 0.0
  %628 = vmatprep.subr.mxu0 0.0
  %629 = vmatpush1.msra.mxu0 0.0
  %630 = vmatprep.subr.mxu0 0.0
  %631 = vmatpush1.msra.mxu0 0.0
  %632 = vmatprep.subr.mxu0 0.0
  %633 = vmatpush1.msra.mxu0 0.0
  %634 = vmatprep.subr.mxu0 0.0
  %635 = vmatpush1.msra.mxu0 0.0
  %636 = vmatprep.subr.mxu0 0.0
  %637 = vmatpush1.msra.mxu0 0.0
  %638 = vmatprep.subr.mxu0 0.0
  %639 = vmatpush1.msra.mxu0 0.0
  %640 = vmatprep.subr.mxu0 0.0
  %641 = vmatpush1.msra.mxu0 0.0
  %642 = vmatprep.subr.mxu0 0.0
  %643 = vmatpush1.msra.mxu0 0.0
  %644 = vmatprep.subr.mxu0 0.0
  %645 = vmatpush1.msra.mxu0 0.0
  %646 = vmatprep.subr.mxu0 0.0
  %647 = vmatpush1.msra.mxu0 0.0
  %648 = vmatprep.subr.mxu0 0.0
  %649 = vmatpush1.msra.mxu0 0.0
  %650 = vmatprep.subr.mxu0 0.0
  %651 = vmatpush1.msra.mxu0 0.0
  %652 = vmatprep.subr.mxu0 0.0
  %653 = vmatpush1.msra.mxu0 0.0
  %654 = vmatprep.subr.mxu0 0.0
  %655 = vmatpush1.msra.mxu0 0.0
  %656 = vmatprep.subr.mxu0 0.0
  %657 = vmatpush1.msra.mxu0 0.0
  %658 = vmatprep.subr.mxu0 0.0
  %659 = vmatpush1.msra.mxu0 0.0
  %660 = vmatprep.subr.mxu0 0.0
  %661 = vmatpush1.msra.mxu0 0.0
  %662 = vmatprep.subr.mxu0 0.0
  %663 = vmatpush1.msra.mxu0 0.0
  %664 = vmatprep.subr.mxu0 0.0
  %665 = vmatpush1.msra.mxu0 0.0
  %666 = vmatprep.subr.mxu0 0.0
  %667 = vmatpush1.msra.mxu0 0.0
  %668 = vmatprep.subr.mxu0 0.0
  %669 = vmatpush1.msra.mxu0 0.0
  %670 = vmatprep.subr.mxu0 0.0
  %671 = vmatpush1.msra.mxu0 0.0
  %672 = vmatprep.subr.mxu0 0.0
  %673 = vmatpush1.msra.mxu0 0.0
  %674 = vmatprep.subr.mxu0 0.0
  %675 = vmatpush1.msra.mxu0 0.0
  %676 = vmatprep.subr.mxu0 0.0
  %677 = vmatpush1.msra.mxu0 0.0
  %678 = vmatprep.subr.mxu0 0.0
  %679 = vmatpush1.msra.mxu0 0.0
  %680 = vmatprep.subr.mxu0 0.0
  %681 = vmatpush1.msra.mxu0 0.0
  %682 = vmatprep.mubr.f32.mxu0 0.0
  %683 = vmatmul.mubr.f32.gmra.mrb[0].mxu0 %v616
  %v684 = vpop.f32.mrb[0].mxu0
  %v685 = vadd.f32 0.0, %v684
  %v686 = vpop.f32.mrb[0].mxu0
  %687 = vdwg.mxu0
  %v688 = vadd.f32 %v614, %v685
  %v689 = vtanh.pop %v688
  %s690 = scalar_lea.vmem [#allocation2], 12
  %v691 = vld [vmem:[%s690] sm:$0x3]
  %v693 = vsel %vm92, %v689, 0
  %695 = vmatprep.subr.mxu0 0.0
  %696 = vmatpush1.msra.mxu0 %v226
  %697 = vmatprep.subr.mxu0 0.0
  %698 = vmatpush1.msra.mxu0 %v227
  %699 = vmatprep.subr.mxu0 0.0
  %700 = vmatpush1.msra.mxu0 %v228
  %701 = vmatprep.subr.mxu0 0.0
  %702 = vmatpush1.msra.mxu0 %v229
  %703 = vmatprep.subr.mxu0 0.0
  %704 = vmatpush1.msra.mxu0 0.0
  %705 = vmatprep.subr.mxu0 0.0
  %706 = vmatpush1.msra.mxu0 0.0
  %707 = vmatprep.subr.mxu0 0.0
  %708 = vmatpush1.msra.mxu0 0.0
  %709 = vmatprep.subr.mxu0 0.0
  %710 = vmatpush1.msra.mxu0 0.0
  %711 = vmatprep.subr.mxu0 0.0
  %712 = vmatpush1.msra.mxu0 0.0
  %713 = vmatprep.subr.mxu0 0.0
  %714 = vmatpush1.msra.mxu0 0.0
  %715 = vmatprep.subr.mxu0 0.0
  %716 = vmatpush1.msra.mxu0 0.0
  %717 = vmatprep.subr.mxu0 0.0
  %718 = vmatpush1.msra.mxu0 0.0
  %719 = vmatprep.subr.mxu0 0.0
  %720 = vmatpush1.msra.mxu0 0.0
  %721 = vmatprep.subr.mxu0 0.0
  %722 = vmatpush1.msra.mxu0 0.0
  %723 = vmatprep.subr.mxu0 0.0
  %724 = vmatpush1.msra.mxu0 0.0
  %725 = vmatprep.subr.mxu0 0.0
  %726 = vmatpush1.msra.mxu0 0.0
  %727 = vmatprep.subr.mxu0 0.0
  %728 = vmatpush1.msra.mxu0 0.0
  %729 = vmatprep.subr.mxu0 0.0
  %730 = vmatpush1.msra.mxu0 0.0
  %731 = vmatprep.subr.mxu0 0.0
  %732 = vmatpush1.msra.mxu0 0.0
  %733 = vmatprep.subr.mxu0 0.0
  %734 = vmatpush1.msra.mxu0 0.0
  %735 = vmatprep.subr.mxu0 0.0
  %736 = vmatpush1.msra.mxu0 0.0
  %737 = vmatprep.subr.mxu0 0.0
  %738 = vmatpush1.msra.mxu0 0.0
  %739 = vmatprep.subr.mxu0 0.0
  %740 = vmatpush1.msra.mxu0 0.0
  %741 = vmatprep.subr.mxu0 0.0
  %742 = vmatpush1.msra.mxu0 0.0
  %743 = vmatprep.subr.mxu0 0.0
  %744 = vmatpush1.msra.mxu0 0.0
  %745 = vmatprep.subr.mxu0 0.0
  %746 = vmatpush1.msra.mxu0 0.0
  %747 = vmatprep.subr.mxu0 0.0
  %748 = vmatpush1.msra.mxu0 0.0
  %749 = vmatprep.subr.mxu0 0.0
  %750 = vmatpush1.msra.mxu0 0.0
  %751 = vmatprep.subr.mxu0 0.0
  %752 = vmatpush1.msra.mxu0 0.0
  %753 = vmatprep.subr.mxu0 0.0
  %754 = vmatpush1.msra.mxu0 0.0
  %755 = vmatprep.subr.mxu0 0.0
  %756 = vmatpush1.msra.mxu0 0.0
  %757 = vmatprep.subr.mxu0 0.0
  %758 = vmatpush1.msra.mxu0 0.0
  %759 = vmatprep.mubr.f32.mxu0 0.0
  %760 = vmatmul.mubr.f32.gmra.mrb[0].mxu0 %v693
  %v761 = vpop.f32.mrb[0].mxu0
  %v762 = vadd.f32 0.0, %v761
  %v763 = vpop.f32.mrb[0].mxu0
  %764 = vdwg.mxu0
  %v765 = vadd.f32 %v691, %v762
  %v766 = vtanh.pop %v765
  %s767 = scalar_lea.vmem [#allocation2], 14
  %v768 = vld [vmem:[%s767] sm:$0x3]
  %v770 = vsel %vm92, %v766, 0
  %772 = vmatprep.subr.mxu0 0.0
  %773 = vmatpush1.msra.mxu0 %v226
  %774 = vmatprep.subr.mxu0 0.0
  %775 = vmatpush1.msra.mxu0 %v227
  %776 = vmatprep.subr.mxu0 0.0
  %777 = vmatpush1.msra.mxu0 %v228
  %778 = vmatprep.subr.mxu0 0.0
  %779 = vmatpush1.msra.mxu0 %v229
  %780 = vmatprep.subr.mxu0 0.0
  %781 = vmatpush1.msra.mxu0 0.0
  %782 = vmatprep.subr.mxu0 0.0
  %783 = vmatpush1.msra.mxu0 0.0
  %784 = vmatprep.subr.mxu0 0.0
  %785 = vmatpush1.msra.mxu0 0.0
  %786 = vmatprep.subr.mxu0 0.0
  %787 = vmatpush1.msra.mxu0 0.0
  %788 = vmatprep.subr.mxu0 0.0
  %789 = vmatpush1.msra.mxu0 0.0
  %790 = vmatprep.subr.mxu0 0.0
  %791 = vmatpush1.msra.mxu0 0.0
  %792 = vmatprep.subr.mxu0 0.0
  %793 = vmatpush1.msra.mxu0 0.0
  %794 = vmatprep.subr.mxu0 0.0
  %795 = vmatpush1.msra.mxu0 0.0
  %796 = vmatprep.subr.mxu0 0.0
  %797 = vmatpush1.msra.mxu0 0.0
  %798 = vmatprep.subr.mxu0 0.0
  %799 = vmatpush1.msra.mxu0 0.0
  %800 = vmatprep.subr.mxu0 0.0
  %801 = vmatpush1.msra.mxu0 0.0
  %802 = vmatprep.subr.mxu0 0.0
  %803 = vmatpush1.msra.mxu0 0.0
  %804 = vmatprep.subr.mxu0 0.0
  %805 = vmatpush1.msra.mxu0 0.0
  %806 = vmatprep.subr.mxu0 0.0
  %807 = vmatpush1.msra.mxu0 0.0
  %808 = vmatprep.subr.mxu0 0.0
  %809 = vmatpush1.msra.mxu0 0.0
  %810 = vmatprep.subr.mxu0 0.0
  %811 = vmatpush1.msra.mxu0 0.0
  %812 = vmatprep.subr.mxu0 0.0
  %813 = vmatpush1.msra.mxu0 0.0
  %814 = vmatprep.subr.mxu0 0.0
  %815 = vmatpush1.msra.mxu0 0.0
  %816 = vmatprep.subr.mxu0 0.0
  %817 = vmatpush1.msra.mxu0 0.0
  %818 = vmatprep.subr.mxu0 0.0
  %819 = vmatpush1.msra.mxu0 0.0
  %820 = vmatprep.subr.mxu0 0.0
  %821 = vmatpush1.msra.mxu0 0.0
  %822 = vmatprep.subr.mxu0 0.0
  %823 = vmatpush1.msra.mxu0 0.0
  %824 = vmatprep.subr.mxu0 0.0
  %825 = vmatpush1.msra.mxu0 0.0
  %826 = vmatprep.subr.mxu0 0.0
  %827 = vmatpush1.msra.mxu0 0.0
  %828 = vmatprep.subr.mxu0 0.0
  %829 = vmatpush1.msra.mxu0 0.0
  %830 = vmatprep.subr.mxu0 0.0
  %831 = vmatpush1.msra.mxu0 0.0
  %832 = vmatprep.subr.mxu0 0.0
  %833 = vmatpush1.msra.mxu0 0.0
  %834 = vmatprep.subr.mxu0 0.0
  %835 = vmatpush1.msra.mxu0 0.0
  %836 = vmatprep.mubr.f32.mxu0 0.0
  %837 = vmatmul.mubr.f32.gmra.mrb[0].mxu0 %v770
  %v838 = vpop.f32.mrb[0].mxu0
  %v839 = vadd.f32 0.0, %v838
  %v840 = vpop.f32.mrb[0].mxu0
  %841 = vdwg.mxu0
  %v842 = vadd.f32 %v768, %v839
  %v843 = vtanh.pop %v842
  %v844 = vld [vmem:[%s4] sm:$0xff]
  %v845 = vld [vmem:[%s4 + $0x8] sm:$0xff]
  %v846 = vld [vmem:[%s4 + $0x10] sm:$0xff]
  %v847 = vld [vmem:[%s4 + $0x18] sm:$0xff]
  %v849 = vsel %vm92, %v843, 0
  %851 = vmatprep.subr.mxu0 0.0
  %852 = vmatpush1.msra.mxu0 %v844
  %853 = vmatprep.subr.mxu0 0.0
  %854 = vmatpush1.msra.mxu0 %v845
  %855 = vmatprep.subr.mxu0 0.0
  %856 = vmatpush1.msra.mxu0 %v846
  %857 = vmatprep.subr.mxu0 0.0
  %858 = vmatpush1.msra.mxu0 %v847
  %859 = vmatprep.subr.mxu0 0.0
  %860 = vmatpush1.msra.mxu0 0.0
  %861 = vmatprep.subr.mxu0 0.0
  %862 = vmatpush1.msra.mxu0 0.0
  %863 = vmatprep.subr.mxu0 0.0
  %864 = vmatpush1.msra.mxu0 0.0
  %865 = vmatprep.subr.mxu0 0.0
  %866 = vmatpush1.msra.mxu0 0.0
  %867 = vmatprep.subr.mxu0 0.0
  %868 = vmatpush1.msra.mxu0 0.0
  %869 = vmatprep.subr.mxu0 0.0
  %870 = vmatpush1.msra.mxu0 0.0
  %871 = vmatprep.subr.mxu0 0.0
  %872 = vmatpush1.msra.mxu0 0.0
  %873 = vmatprep.subr.mxu0 0.0
  %874 = vmatpush1.msra.mxu0 0.0
  %875 = vmatprep.subr.mxu0 0.0
  %876 = vmatpush1.msra.mxu0 0.0
  %877 = vmatprep.subr.mxu0 0.0
  %878 = vmatpush1.msra.mxu0 0.0
  %879 = vmatprep.subr.mxu0 0.0
  %880 = vmatpush1.msra.mxu0 0.0
  %881 = vmatprep.subr.mxu0 0.0
  %882 = vmatpush1.msra.mxu0 0.0
  %883 = vmatprep.subr.mxu0 0.0
  %884 = vmatpush1.msra.mxu0 0.0
  %885 = vmatprep.subr.mxu0 0.0
  %886 = vmatpush1.msra.mxu0 0.0
  %887 = vmatprep.subr.mxu0 0.0
  %888 = vmatpush1.msra.mxu0 0.0
  %889 = vmatprep.subr.mxu0 0.0
  %890 = vmatpush1.msra.mxu0 0.0
  %891 = vmatprep.subr.mxu0 0.0
  %892 = vmatpush1.msra.mxu0 0.0
  %893 = vmatprep.subr.mxu0 0.0
  %894 = vmatpush1.msra.mxu0 0.0
  %895 = vmatprep.subr.mxu0 0.0
  %896 = vmatpush1.msra.mxu0 0.0
  %897 = vmatprep.subr.mxu0 0.0
  %898 = vmatpush1.msra.mxu0 0.0
  %899 = vmatprep.subr.mxu0 0.0
  %900 = vmatpush1.msra.mxu0 0.0
  %901 = vmatprep.subr.mxu0 0.0
  %902 = vmatpush1.msra.mxu0 0.0
  %903 = vmatprep.subr.mxu0 0.0
  %904 = vmatpush1.msra.mxu0 0.0
  %905 = vmatprep.subr.mxu0 0.0
  %906 = vmatpush1.msra.mxu0 0.0
  %907 = vmatprep.subr.mxu0 0.0
  %908 = vmatpush1.msra.mxu0 0.0
  %909 = vmatprep.subr.mxu0 0.0
  %910 = vmatpush1.msra.mxu0 0.0
  %911 = vmatprep.subr.mxu0 0.0
  %912 = vmatpush1.msra.mxu0 0.0
  %913 = vmatprep.subr.mxu0 0.0
  %914 = vmatpush1.msra.mxu0 0.0
  %915 = vmatprep.mubr.f32.mxu0 0.0
  %916 = vmatmul.mubr.f32.gmra.mrb[0].mxu0 %v849
  %v917 = vpop.f32.mrb[0].mxu0
  %v918 = vadd.f32 0.0, %v917
  %v919 = vpop.f32.mrb[0].mxu0
  %920 = vdwg.mxu0
  %vm921 = vcmp.ge.f32.partialorder %v918, 0.0
  %v922 = vmul.f32 %v918, 0.01
  %v923 = vsel %vm921, %v918, %v922
  %v924 = vld [vmem:[%s5] sm:$0xff]
  %v925 = vld [vmem:[%s5 + $0x8] sm:$0xff]
  %v926 = vld [vmem:[%s5 + $0x10] sm:$0xff]
  %v927 = vld [vmem:[%s5 + $0x18] sm:$0xff]
  %v929 = vsel %vm92, %v923, 0
  %931 = vmatprep.subr.mxu0 0.0
  %932 = vmatpush1.msra.mxu0 %v924
  %933 = vmatprep.subr.mxu0 0.0
  %934 = vmatpush1.msra.mxu0 %v925
  %935 = vmatprep.subr.mxu0 0.0
  %936 = vmatpush1.msra.mxu0 %v926
  %937 = vmatprep.subr.mxu0 0.0
  %938 = vmatpush1.msra.mxu0 %v927
  %939 = vmatprep.subr.mxu0 0.0
  %940 = vmatpush1.msra.mxu0 0.0
  %941 = vmatprep.subr.mxu0 0.0
  %942 = vmatpush1.msra.mxu0 0.0
  %943 = vmatprep.subr.mxu0 0.0
  %944 = vmatpush1.msra.mxu0 0.0
  %945 = vmatprep.subr.mxu0 0.0
  %946 = vmatpush1.msra.mxu0 0.0
  %947 = vmatprep.subr.mxu0 0.0
  %948 = vmatpush1.msra.mxu0 0.0
  %949 = vmatprep.subr.mxu0 0.0
  %950 = vmatpush1.msra.mxu0 0.0
  %951 = vmatprep.subr.mxu0 0.0
  %952 = vmatpush1.msra.mxu0 0.0
  %953 = vmatprep.subr.mxu0 0.0
  %954 = vmatpush1.msra.mxu0 0.0
  %955 = vmatprep.subr.mxu0 0.0
  %956 = vmatpush1.msra.mxu0 0.0
  %957 = vmatprep.subr.mxu0 0.0
  %958 = vmatpush1.msra.mxu0 0.0
  %959 = vmatprep.subr.mxu0 0.0
  %960 = vmatpush1.msra.mxu0 0.0
  %961 = vmatprep.subr.mxu0 0.0
  %962 = vmatpush1.msra.mxu0 0.0
  %963 = vmatprep.subr.mxu0 0.0
  %964 = vmatpush1.msra.mxu0 0.0
  %965 = vmatprep.subr.mxu0 0.0
  %966 = vmatpush1.msra.mxu0 0.0
  %967 = vmatprep.subr.mxu0 0.0
  %968 = vmatpush1.msra.mxu0 0.0
  %969 = vmatprep.subr.mxu0 0.0
  %970 = vmatpush1.msra.mxu0 0.0
  %971 = vmatprep.subr.mxu0 0.0
  %972 = vmatpush1.msra.mxu0 0.0
  %973 = vmatprep.subr.mxu0 0.0
  %974 = vmatpush1.msra.mxu0 0.0
  %975 = vmatprep.subr.mxu0 0.0
  %976 = vmatpush1.msra.mxu0 0.0
  %977 = vmatprep.subr.mxu0 0.0
  %978 = vmatpush1.msra.mxu0 0.0
  %979 = vmatprep.subr.mxu0 0.0
  %980 = vmatpush1.msra.mxu0 0.0
  %981 = vmatprep.subr.mxu0 0.0
  %982 = vmatpush1.msra.mxu0 0.0
  %983 = vmatprep.subr.mxu0 0.0
  %984 = vmatpush1.msra.mxu0 0.0
  %985 = vmatprep.subr.mxu0 0.0
  %986 = vmatpush1.msra.mxu0 0.0
  %987 = vmatprep.subr.mxu0 0.0
  %988 = vmatpush1.msra.mxu0 0.0
  %989 = vmatprep.subr.mxu0 0.0
  %990 = vmatpush1.msra.mxu0 0.0
  %991 = vmatprep.subr.mxu0 0.0
  %992 = vmatpush1.msra.mxu0 0.0
  %993 = vmatprep.subr.mxu0 0.0
  %994 = vmatpush1.msra.mxu0 0.0
  %995 = vmatprep.mubr.f32.mxu0 0.0
  %996 = vmatmul.mubr.f32.gmra.mrb[0].mxu0 %v929
  %v997 = vpop.f32.mrb[0].mxu0
  %v998 = vadd.f32 0.0, %v997
  %v999 = vpop.f32.mrb[0].mxu0
  %1000 = vdwg.mxu0
  %vm1001 = vcmp.ge.f32.partialorder %v998, 0.0
  %v1002 = vmul.f32 %v998, 0.01
  %v1003 = vsel %vm1001, %v998, %v1002
  %v1004 = vld [vmem:[%s6] sm:$0xff]
  %v1005 = vld [vmem:[%s6 + $0x8] sm:$0xff]
  %v1006 = vld [vmem:[%s6 + $0x10] sm:$0xff]
  %v1007 = vld [vmem:[%s6 + $0x18] sm:$0xff]
  %v1008 = vld [vmem:[#allocation3] sm:$0x1]
  %v1010 = vlaneseq
  %v1011 = vshrl.u32 %v1010, 7
  %v1012 = vsub.s32 0, %v1011
  %v1013 = vrot.slane %v1008, %v1012
  %v1016 = vsel %vm92, %v1003, 0
  %1018 = vmatprep.subr.mxu0 0.0
  %1019 = vmatpush1.msra.mxu0 %v1004
  %1020 = vmatprep.subr.mxu0 0.0
  %1021 = vmatpush1.msra.mxu0 %v1005
  %1022 = vmatprep.subr.mxu0 0.0
  %1023 = vmatpush1.msra.mxu0 %v1006
  %1024 = vmatprep.subr.mxu0 0.0
  %1025 = vmatpush1.msra.mxu0 %v1007
  %1026 = vmatprep.subr.mxu0 0.0
  %1027 = vmatpush1.msra.mxu0 0.0
  %1028 = vmatprep.subr.mxu0 0.0
  %1029 = vmatpush1.msra.mxu0 0.0
  %1030 = vmatprep.subr.mxu0 0.0
  %1031 = vmatpush1.msra.mxu0 0.0
  %1032 = vmatprep.subr.mxu0 0.0
  %1033 = vmatpush1.msra.mxu0 0.0
  %1034 = vmatprep.subr.mxu0 0.0
  %1035 = vmatpush1.msra.mxu0 0.0
  %1036 = vmatprep.subr.mxu0 0.0
  %1037 = vmatpush1.msra.mxu0 0.0
  %1038 = vmatprep.subr.mxu0 0.0
  %1039 = vmatpush1.msra.mxu0 0.0
  %1040 = vmatprep.subr.mxu0 0.0
  %1041 = vmatpush1.msra.mxu0 0.0
  %1042 = vmatprep.subr.mxu0 0.0
  %1043 = vmatpush1.msra.mxu0 0.0
  %1044 = vmatprep.subr.mxu0 0.0
  %1045 = vmatpush1.msra.mxu0 0.0
  %1046 = vmatprep.subr.mxu0 0.0
  %1047 = vmatpush1.msra.mxu0 0.0
  %1048 = vmatprep.subr.mxu0 0.0
  %1049 = vmatpush1.msra.mxu0 0.0
  %1050 = vmatprep.subr.mxu0 0.0
  %1051 = vmatpush1.msra.mxu0 0.0
  %1052 = vmatprep.subr.mxu0 0.0
  %1053 = vmatpush1.msra.mxu0 0.0
  %1054 = vmatprep.subr.mxu0 0.0
  %1055 = vmatpush1.msra.mxu0 0.0
  %1056 = vmatprep.subr.mxu0 0.0
  %1057 = vmatpush1.msra.mxu0 0.0
  %1058 = vmatprep.subr.mxu0 0.0
  %1059 = vmatpush1.msra.mxu0 0.0
  %1060 = vmatprep.subr.mxu0 0.0
  %1061 = vmatpush1.msra.mxu0 0.0
  %1062 = vmatprep.subr.mxu0 0.0
  %1063 = vmatpush1.msra.mxu0 0.0
  %1064 = vmatprep.subr.mxu0 0.0
  %1065 = vmatpush1.msra.mxu0 0.0
  %1066 = vmatprep.subr.mxu0 0.0
  %1067 = vmatpush1.msra.mxu0 0.0
  %1068 = vmatprep.subr.mxu0 0.0
  %1069 = vmatpush1.msra.mxu0 0.0
  %1070 = vmatprep.subr.mxu0 0.0
  %1071 = vmatpush1.msra.mxu0 0.0
  %1072 = vmatprep.subr.mxu0 0.0
  %1073 = vmatpush1.msra.mxu0 0.0
  %1074 = vmatprep.subr.mxu0 0.0
  %1075 = vmatpush1.msra.mxu0 0.0
  %1076 = vmatprep.subr.mxu0 0.0
  %1077 = vmatpush1.msra.mxu0 0.0
  %1078 = vmatprep.subr.mxu0 0.0
  %1079 = vmatpush1.msra.mxu0 0.0
  %1080 = vmatprep.subr.mxu0 0.0
  %1081 = vmatpush1.msra.mxu0 0.0
  %1082 = vmatprep.mubr.f32.mxu0 0.0
  %1083 = vmatmul.mubr.f32.gmra.mrb[0].mxu0 %v1016
  %v1084 = vpop.f32.mrb[0].mxu0
  %v1085 = vadd.f32 %v1013, %v1084
  %v1086 = vpop.f32.mrb[0].mxu0
  %1087 = vdwg.mxu0
  %vm1088 = vcmp.ge.f32.partialorder %v1085, 0.0
  %v1089 = vmul.f32 %v1085, 0.01
  %v1090 = vsel %vm1088, %v1085, %v1089
  %vm1091 = vcmask 1024
  %1092 = vst.msk [vmem:[%s8] sm:$0x3] %vm1091, %v1090
  // Predicated region
  $region34: #{conv_rnn_forward.3} parent=0 // pred_check
    _
  $region35: #{conv_rnn_forward.3} parent=0 // pred_check_branch
    %1094 = sbr.rel (0) target = $region37
  $region36: #{conv_rnn_forward.3} parent=0 // pred_region
    _
  $region37: #{conv_rnn_forward.3} parent=0 // pred_fallthru
    _
  // Predicated region
  $region38: #{conv_rnn_forward.3} parent=0 // pred_check
    _
  $region39: #{conv_rnn_forward.3} parent=0 // pred_check_branch
    %1096 = sbr.rel (0) target = $region41
  $region40: #{conv_rnn_forward.3} parent=0 // pred_region
    _
  $region41: #{conv_rnn_forward.3} parent=0 // pred_fallthru
    _

</llo_original>
